<compile_context>
chip_gen: v7x
topology: tpu7x:2x2x1
jax: 0.10.0
libtpu: 0.0.40
codegen_flags: <defaults>
</compile_context>

<pallas_src>
import jax
import jax.numpy as jnp
from jax.experimental import pallas as pl
from jax.experimental.pallas import tpu as pltpu

FMNIST_INPUT_SIZE = 784
HIDDEN_LAYER_SIZE_1 = 512
HIDDEN_LAYER_SIZE_2 = 256

# Large batch tile: per-grid-step overhead (~0.35us) dominates this tiny MLP,
# so bigger tiles amortize it.  Footprint at 512 rows (f32 x in, bf16 img out,
# bf16 weights, all double-buffered) is ~9 MiB -- far below the 32 MiB limit.
MAX_BATCH_TILE = 512


def _round_up(v, m):
    return (v + m - 1) // m * m


def _cdiv(a, b):
    return -(-a // b)


def _choose_batch_tile(batch):
    """Batch tile: <= MAX_BATCH_TILE, multiple of 16 (bf16 packs 2 rows per
    sublane), never larger than the batch (so no wrapper-side padding -- the
    ragged last block is masked by Pallas), and split into >= 2 grid steps
    when possible so both TensorCores get work on megacore parts (v7x)."""
    if batch <= 16:
        return batch                               # single block == full batch
    tile = min(MAX_BATCH_TILE, (batch // 16) * 16)
    if _cdiv(batch, tile) < 2:                     # would be a single grid step
        tile = min(tile, _round_up(_cdiv(batch, 2), 16))
    return tile


def _vae_fwd_kernel(x_ref, eps_ref,
                    ew1_ref, eb1_ref, ew2_ref, eb2_ref,
                    ew3m_ref, eb3m_ref, ew3s_ref, eb3s_ref,
                    dw1_ref, db1_ref, dw2_ref, db2_ref,
                    dw3i_ref, db3i_ref, dw3c_ref, db3c_ref,
                    img_ref, probs_ref):
    """One batch tile of the VAE-classifier forward, fully resident in VMEM."""
    # Cast to bf16 in-kernel (input arrives as f32 straight from HBM).
    x = x_ref[...].astype(jnp.bfloat16)                               # (TB, 784)

    # ---------------- Encoder ----------------
    h = jnp.dot(x, ew1_ref[...], preferred_element_type=jnp.float32) + eb1_ref[...]
    h = jnp.maximum(h, 0.0).astype(jnp.bfloat16)                      # relu(fc1)
    h = jnp.dot(h, ew2_ref[...], preferred_element_type=jnp.float32) + eb2_ref[...]
    h = jnp.maximum(h, 0.0).astype(jnp.bfloat16)                      # relu(fc2)
    # fc3 split into lane-aligned mu / log_sigma heads (column order [mu | log_sigma]).
    mu = jnp.dot(h, ew3m_ref[...], preferred_element_type=jnp.float32) + eb3m_ref[...]
    log_sigma = jnp.dot(h, ew3s_ref[...], preferred_element_type=jnp.float32) + eb3s_ref[...]

    # ------------- Reparameterize: z = mu + sigma * eps (sigma = exp(head2)) -------------
    z = (mu + jnp.exp(log_sigma) * eps_ref[...]).astype(jnp.bfloat16)

    # ---------------- Decoder ----------------
    g = jnp.dot(z, dw1_ref[...], preferred_element_type=jnp.float32) + db1_ref[...]
    g = jnp.maximum(g, 0.0).astype(jnp.bfloat16)                      # relu(fc1)
    g = jnp.dot(g, dw2_ref[...], preferred_element_type=jnp.float32) + db2_ref[...]
    g = jnp.maximum(g, 0.0).astype(jnp.bfloat16)                      # relu(fc2)
    # fc3 split into image / class heads -> both outputs written lane-dense.
    img = jnp.dot(g, dw3i_ref[...], preferred_element_type=jnp.float32) + db3i_ref[...]
    img_ref[...] = jax.nn.sigmoid(img).astype(img_ref.dtype)          # (TB, 784) bf16
    cls = jnp.dot(g, dw3c_ref[...], preferred_element_type=jnp.float32) + db3c_ref[...]
    probs_ref[...] = jax.nn.sigmoid(cls).astype(probs_ref.dtype)      # (TB, 10) f32


def init_params(key, dim_encoding, dtype=jnp.float32):
    """Deterministic parameter init (uniform +-1/sqrt(fan_in), like nn.Linear).

    Layout matches the PyTorch module's six Linear layers:
    (ew1, eb1, ew2, eb2, ew3, eb3, dw1, db1, dw2, db2, dw3, db3),
    weights stored (in_features, out_features), biases (1, out_features).
    """
    shapes = [
        # encoder
        (FMNIST_INPUT_SIZE, HIDDEN_LAYER_SIZE_1),
        (HIDDEN_LAYER_SIZE_1, HIDDEN_LAYER_SIZE_2),
        (HIDDEN_LAYER_SIZE_2, 2 * dim_encoding),
        # decoder
        (dim_encoding, HIDDEN_LAYER_SIZE_2),
        (HIDDEN_LAYER_SIZE_2, HIDDEN_LAYER_SIZE_1),
        (HIDDEN_LAYER_SIZE_1, FMNIST_INPUT_SIZE + 10),
    ]
    params = []
    for shape in shapes:
        key, kw, kb = jax.random.split(key, 3)
        bound = 1.0 / float(shape[0]) ** 0.5
        w = jax.random.uniform(kw, shape, dtype, -bound, bound)
        b = jax.random.uniform(kb, (1, shape[1]), dtype, -bound, bound)
        params.extend([w, b])
    return tuple(params)


def prepare_params(params, dim_encoding):
    """One-time conversion: split fused heads and cast weights to bf16.

    Encoder fc3 columns are [mu | log_sigma] (matches the PyTorch slicing),
    decoder fc3 columns are [image | class].  Biases stay f32 (added to the
    f32 MXU accumulator).
    """
    (ew1, eb1, ew2, eb2, ew3, eb3, dw1, db1, dw2, db2, dw3, db3) = params
    d = dim_encoding
    wt, bt = jnp.bfloat16, jnp.float32
    ew3m, ew3s = ew3[:, :d], ew3[:, d:]
    eb3m, eb3s = eb3[:, :d], eb3[:, d:]
    dw3i, dw3c = dw3[:, :FMNIST_INPUT_SIZE], dw3[:, FMNIST_INPUT_SIZE:]
    db3i, db3c = db3[:, :FMNIST_INPUT_SIZE], db3[:, FMNIST_INPUT_SIZE:]
    return (ew1.astype(wt), eb1.astype(bt), ew2.astype(wt), eb2.astype(bt),
            ew3m.astype(wt), eb3m.astype(bt), ew3s.astype(wt), eb3s.astype(bt),
            dw1.astype(wt), db1.astype(bt), dw2.astype(wt), db2.astype(bt),
            dw3i.astype(wt), db3i.astype(bt), dw3c.astype(wt), db3c.astype(bt))


@jax.jit
def vae_autoencoder_classifier_forward(x_nchw, eps, prepared_params):
    """x_nchw: (B, 1, 28, 28) float32; eps: (B, dim_encoding) float32.

    Returns (img (B, 1, 28, 28) bf16, label_probs (B, 10) f32), matching the
    PyTorch VaeAutoencoderClassifier.forward (sigmoid over all 794 decoder
    outputs).  Image is kept bf16 to halve the writeback; cast to f32 in the
    consumer only if strictly required.
    """
    B = x_nchw.shape[0]
    d = eps.shape[1]
    x_flat = x_nchw.reshape(B, FMNIST_INPUT_SIZE)   # flatten only (no copy, no cast)

    tile_b = _choose_batch_tile(B)
    grid = (_cdiv(B, tile_b),)                      # ragged last block masked by Pallas

    # Weights/biases: full-array blocks with a constant index_map -> loaded
    # once, resident in VMEM across all batch tiles.
    weight_specs = [pl.BlockSpec(p.shape, lambda i: (0, 0)) for p in prepared_params]
    in_specs = ([pl.BlockSpec((tile_b, FMNIST_INPUT_SIZE), lambda i: (i, 0)),
                 pl.BlockSpec((tile_b, d), lambda i: (i, 0))]
                + weight_specs)
    out_specs = (pl.BlockSpec((tile_b, FMNIST_INPUT_SIZE), lambda i: (i, 0)),
                 pl.BlockSpec((tile_b, 10), lambda i: (i, 0)))

    img_flat, probs = pl.pallas_call(
        _vae_fwd_kernel,
        out_shape=(
            jax.ShapeDtypeStruct((B, FMNIST_INPUT_SIZE), jnp.bfloat16),
            jax.ShapeDtypeStruct((B, 10), jnp.float32),
        ),
        grid=grid,
        in_specs=in_specs,
        out_specs=out_specs,
        compiler_params=pltpu.CompilerParams(
            dimension_semantics=("parallel",),   # megacore sharding on v7x; no-op on v5e/v6e
            vmem_limit_bytes=32 << 20,
        ),
    )(x_flat, eps, *prepared_params)

    img = img_flat.reshape(-1, 1, 28, 28)            # metadata-only reshape
    return img, probs


if __name__ == "__main__":
    dim_encoding = 8
    batch = 8

    key = jax.random.PRNGKey(0)
    k_params, k_x, k_eps = jax.random.split(key, 3)

    raw_params = init_params(k_params, dim_encoding)              # nn.Linear-style layout, f32
    params = jax.device_put(prepare_params(raw_params, dim_encoding))

    x = jax.random.uniform(k_x, (batch, 1, 28, 28), jnp.float32)  # FMNIST-like input
    eps = jax.random.normal(k_eps, (batch, dim_encoding), jnp.float32)

    img, probs = vae_autoencoder_classifier_forward(x, eps, params)
    jax.block_until_ready((img, probs))

    assert img.shape == (batch, 1, 28, 28), img.shape
    assert probs.shape == (batch, 10), probs.shape
    assert bool(jnp.all(jnp.isfinite(img.astype(jnp.float32))))
    assert bool(jnp.all(jnp.isfinite(probs)))
    print("KERNEL_OK")
</pallas_src>

<mosaic_0001>
module attributes {stable_mosaic.version = 11 : i64} {
  func.func @_vae_fwd_kernel(%arg0: i32, %arg1: memref<8x784xf32, #tpu.memory_space<vmem>>, %arg2: memref<8x8xf32, #tpu.memory_space<vmem>>, %arg3: memref<784x512xbf16, #tpu.memory_space<vmem>>, %arg4: memref<1x512xf32, #tpu.memory_space<vmem>>, %arg5: memref<512x256xbf16, #tpu.memory_space<vmem>>, %arg6: memref<1x256xf32, #tpu.memory_space<vmem>>, %arg7: memref<256x8xbf16, #tpu.memory_space<vmem>>, %arg8: memref<1x8xf32, #tpu.memory_space<vmem>>, %arg9: memref<256x8xbf16, #tpu.memory_space<vmem>>, %arg10: memref<1x8xf32, #tpu.memory_space<vmem>>, %arg11: memref<8x256xbf16, #tpu.memory_space<vmem>>, %arg12: memref<1x256xf32, #tpu.memory_space<vmem>>, %arg13: memref<256x512xbf16, #tpu.memory_space<vmem>>, %arg14: memref<1x512xf32, #tpu.memory_space<vmem>>, %arg15: memref<512x784xbf16, #tpu.memory_space<vmem>>, %arg16: memref<1x784xf32, #tpu.memory_space<vmem>>, %arg17: memref<512x10xbf16, #tpu.memory_space<vmem>>, %arg18: memref<1x10xf32, #tpu.memory_space<vmem>>, %arg19: memref<8x784xbf16, #tpu.memory_space<vmem>>, %arg20: memref<8x10xf32, #tpu.memory_space<vmem>>) attributes {dimension_semantics = [#tpu.dimension_semantics<parallel>], iteration_bounds = array<i64: 1>, scalar_prefetch = 0 : i64, scratch_operands = 0 : i64, tpu.core_type = #tpu.core_type<tc>, window_params = [{transform_indices = @transform_0, window_bounds = array<i64: 8, 784>}, {transform_indices = @transform_1, window_bounds = array<i64: 8, 8>}, {pipeline_mode = #tpu.pipeline_mode<synchronous>, transform_indices = @transform_2, window_bounds = array<i64: 784, 512>}, {pipeline_mode = #tpu.pipeline_mode<synchronous>, transform_indices = @transform_3, window_bounds = array<i64: 1, 512>}, {pipeline_mode = #tpu.pipeline_mode<synchronous>, transform_indices = @transform_4, window_bounds = array<i64: 512, 256>}, {pipeline_mode = #tpu.pipeline_mode<synchronous>, transform_indices = @transform_5, window_bounds = array<i64: 1, 256>}, {pipeline_mode = #tpu.pipeline_mode<synchronous>, transform_indices = @transform_6, window_bounds = array<i64: 256, 8>}, {pipeline_mode = #tpu.pipeline_mode<synchronous>, transform_indices = @transform_7, window_bounds = array<i64: 1, 8>}, {pipeline_mode = #tpu.pipeline_mode<synchronous>, transform_indices = @transform_8, window_bounds = array<i64: 256, 8>}, {pipeline_mode = #tpu.pipeline_mode<synchronous>, transform_indices = @transform_9, window_bounds = array<i64: 1, 8>}, {pipeline_mode = #tpu.pipeline_mode<synchronous>, transform_indices = @transform_10, window_bounds = array<i64: 8, 256>}, {pipeline_mode = #tpu.pipeline_mode<synchronous>, transform_indices = @transform_11, window_bounds = array<i64: 1, 256>}, {pipeline_mode = #tpu.pipeline_mode<synchronous>, transform_indices = @transform_12, window_bounds = array<i64: 256, 512>}, {pipeline_mode = #tpu.pipeline_mode<synchronous>, transform_indices = @transform_13, window_bounds = array<i64: 1, 512>}, {pipeline_mode = #tpu.pipeline_mode<synchronous>, transform_indices = @transform_14, window_bounds = array<i64: 512, 784>}, {pipeline_mode = #tpu.pipeline_mode<synchronous>, transform_indices = @transform_15, window_bounds = array<i64: 1, 784>}, {pipeline_mode = #tpu.pipeline_mode<synchronous>, transform_indices = @transform_16, window_bounds = array<i64: 512, 10>}, {pipeline_mode = #tpu.pipeline_mode<synchronous>, transform_indices = @transform_17, window_bounds = array<i64: 1, 10>}, {transform_indices = @transform_18, window_bounds = array<i64: 8, 784>}, {transform_indices = @transform_19, window_bounds = array<i64: 8, 10>}]} {
    %c0 = arith.constant 0 : index
    %c0_0 = arith.constant 0 : index
    %0 = vector.load %arg1[%c0, %c0_0] : memref<8x784xf32, #tpu.memory_space<vmem>>, vector<8x784xf32>
    %1 = arith.truncf %0 : vector<8x784xf32> to vector<8x784xbf16>
    %c0_1 = arith.constant 0 : index
    %c0_2 = arith.constant 0 : index
    %2 = vector.load %arg3[%c0_1, %c0_2] : memref<784x512xbf16, #tpu.memory_space<vmem>>, vector<784x512xbf16>
    %cst = arith.constant dense<0.000000e+00> : vector<8x512xf32>
    %3 = tpu.matmul %1, %2, %cst {dimension_numbers = #tpu.dot_dimension_numbers<[1], [0], [0], [1], [0, 0, 1, 1], [], []>} : vector<8x784xbf16>, vector<784x512xbf16>, vector<8x512xf32> -> vector<8x512xf32>
    %c0_3 = arith.constant 0 : index
    %c0_4 = arith.constant 0 : index
    %4 = vector.load %arg4[%c0_3, %c0_4] : memref<1x512xf32, #tpu.memory_space<vmem>>, vector<1x512xf32>
    %5 = vector.broadcast %4 : vector<1x512xf32> to vector<8x512xf32>
    %6 = arith.addf %3, %5 : vector<8x512xf32>
    %cst_5 = arith.constant 0.000000e+00 : f32
    %7 = vector.broadcast %cst_5 : f32 to vector<8x512xf32>
    %8 = arith.maximumf %6, %7 : vector<8x512xf32>
    %9 = arith.truncf %8 : vector<8x512xf32> to vector<8x512xbf16>
    %c0_6 = arith.constant 0 : index
    %c0_7 = arith.constant 0 : index
    %10 = vector.load %arg5[%c0_6, %c0_7] : memref<512x256xbf16, #tpu.memory_space<vmem>>, vector<512x256xbf16>
    %cst_8 = arith.constant dense<0.000000e+00> : vector<8x256xf32>
    %11 = tpu.matmul %9, %10, %cst_8 {dimension_numbers = #tpu.dot_dimension_numbers<[1], [0], [0], [1], [0, 0, 1, 1], [], []>} : vector<8x512xbf16>, vector<512x256xbf16>, vector<8x256xf32> -> vector<8x256xf32>
    %c0_9 = arith.constant 0 : index
    %c0_10 = arith.constant 0 : index
    %12 = vector.load %arg6[%c0_9, %c0_10] : memref<1x256xf32, #tpu.memory_space<vmem>>, vector<1x256xf32>
    %13 = vector.broadcast %12 : vector<1x256xf32> to vector<8x256xf32>
    %14 = arith.addf %11, %13 : vector<8x256xf32>
    %cst_11 = arith.constant 0.000000e+00 : f32
    %15 = vector.broadcast %cst_11 : f32 to vector<8x256xf32>
    %16 = arith.maximumf %14, %15 : vector<8x256xf32>
    %17 = arith.truncf %16 : vector<8x256xf32> to vector<8x256xbf16>
    %c0_12 = arith.constant 0 : index
    %c0_13 = arith.constant 0 : index
    %18 = vector.load %arg7[%c0_12, %c0_13] : memref<256x8xbf16, #tpu.memory_space<vmem>>, vector<256x8xbf16>
    %cst_14 = arith.constant dense<0.000000e+00> : vector<8x8xf32>
    %19 = tpu.matmul %17, %18, %cst_14 {dimension_numbers = #tpu.dot_dimension_numbers<[1], [0], [0], [1], [0, 0, 1, 1], [], []>} : vector<8x256xbf16>, vector<256x8xbf16>, vector<8x8xf32> -> vector<8x8xf32>
    %c0_15 = arith.constant 0 : index
    %c0_16 = arith.constant 0 : index
    %20 = vector.load %arg8[%c0_15, %c0_16] : memref<1x8xf32, #tpu.memory_space<vmem>>, vector<1x8xf32>
    %21 = vector.broadcast %20 : vector<1x8xf32> to vector<8x8xf32>
    %22 = arith.addf %19, %21 : vector<8x8xf32>
    %c0_17 = arith.constant 0 : index
    %c0_18 = arith.constant 0 : index
    %23 = vector.load %arg9[%c0_17, %c0_18] : memref<256x8xbf16, #tpu.memory_space<vmem>>, vector<256x8xbf16>
    %cst_19 = arith.constant dense<0.000000e+00> : vector<8x8xf32>
    %24 = tpu.matmul %17, %23, %cst_19 {dimension_numbers = #tpu.dot_dimension_numbers<[1], [0], [0], [1], [0, 0, 1, 1], [], []>} : vector<8x256xbf16>, vector<256x8xbf16>, vector<8x8xf32> -> vector<8x8xf32>
    %c0_20 = arith.constant 0 : index
    %c0_21 = arith.constant 0 : index
    %25 = vector.load %arg10[%c0_20, %c0_21] : memref<1x8xf32, #tpu.memory_space<vmem>>, vector<1x8xf32>
    %26 = vector.broadcast %25 : vector<1x8xf32> to vector<8x8xf32>
    %27 = arith.addf %24, %26 : vector<8x8xf32>
    %28 = math.exp %27 : vector<8x8xf32>
    %c0_22 = arith.constant 0 : index
    %c0_23 = arith.constant 0 : index
    %29 = vector.load %arg2[%c0_22, %c0_23] : memref<8x8xf32, #tpu.memory_space<vmem>>, vector<8x8xf32>
    %30 = arith.mulf %28, %29 : vector<8x8xf32>
    %31 = arith.addf %22, %30 : vector<8x8xf32>
    %32 = arith.truncf %31 : vector<8x8xf32> to vector<8x8xbf16>
    %c0_24 = arith.constant 0 : index
    %c0_25 = arith.constant 0 : index
    %33 = vector.load %arg11[%c0_24, %c0_25] : memref<8x256xbf16, #tpu.memory_space<vmem>>, vector<8x256xbf16>
    %cst_26 = arith.constant dense<0.000000e+00> : vector<8x256xf32>
    %34 = tpu.matmul %32, %33, %cst_26 {dimension_numbers = #tpu.dot_dimension_numbers<[1], [0], [0], [1], [0, 0, 1, 1], [], []>} : vector<8x8xbf16>, vector<8x256xbf16>, vector<8x256xf32> -> vector<8x256xf32>
    %c0_27 = arith.constant 0 : index
    %c0_28 = arith.constant 0 : index
    %35 = vector.load %arg12[%c0_27, %c0_28] : memref<1x256xf32, #tpu.memory_space<vmem>>, vector<1x256xf32>
    %36 = vector.broadcast %35 : vector<1x256xf32> to vector<8x256xf32>
    %37 = arith.addf %34, %36 : vector<8x256xf32>
    %cst_29 = arith.constant 0.000000e+00 : f32
    %38 = vector.broadcast %cst_29 : f32 to vector<8x256xf32>
    %39 = arith.maximumf %37, %38 : vector<8x256xf32>
    %40 = arith.truncf %39 : vector<8x256xf32> to vector<8x256xbf16>
    %c0_30 = arith.constant 0 : index
    %c0_31 = arith.constant 0 : index
    %41 = vector.load %arg13[%c0_30, %c0_31] : memref<256x512xbf16, #tpu.memory_space<vmem>>, vector<256x512xbf16>
    %cst_32 = arith.constant dense<0.000000e+00> : vector<8x512xf32>
    %42 = tpu.matmul %40, %41, %cst_32 {dimension_numbers = #tpu.dot_dimension_numbers<[1], [0], [0], [1], [0, 0, 1, 1], [], []>} : vector<8x256xbf16>, vector<256x512xbf16>, vector<8x512xf32> -> vector<8x512xf32>
    %c0_33 = arith.constant 0 : index
    %c0_34 = arith.constant 0 : index
    %43 = vector.load %arg14[%c0_33, %c0_34] : memref<1x512xf32, #tpu.memory_space<vmem>>, vector<1x512xf32>
    %44 = vector.broadcast %43 : vector<1x512xf32> to vector<8x512xf32>
    %45 = arith.addf %42, %44 : vector<8x512xf32>
    %cst_35 = arith.constant 0.000000e+00 : f32
    %46 = vector.broadcast %cst_35 : f32 to vector<8x512xf32>
    %47 = arith.maximumf %45, %46 : vector<8x512xf32>
    %48 = arith.truncf %47 : vector<8x512xf32> to vector<8x512xbf16>
    %c0_36 = arith.constant 0 : index
    %c0_37 = arith.constant 0 : index
    %49 = vector.load %arg15[%c0_36, %c0_37] : memref<512x784xbf16, #tpu.memory_space<vmem>>, vector<512x784xbf16>
    %cst_38 = arith.constant dense<0.000000e+00> : vector<8x784xf32>
    %50 = tpu.matmul %48, %49, %cst_38 {dimension_numbers = #tpu.dot_dimension_numbers<[1], [0], [0], [1], [0, 0, 1, 1], [], []>} : vector<8x512xbf16>, vector<512x784xbf16>, vector<8x784xf32> -> vector<8x784xf32>
    %c0_39 = arith.constant 0 : index
    %c0_40 = arith.constant 0 : index
    %51 = vector.load %arg16[%c0_39, %c0_40] : memref<1x784xf32, #tpu.memory_space<vmem>>, vector<1x784xf32>
    %52 = vector.broadcast %51 : vector<1x784xf32> to vector<8x784xf32>
    %53 = arith.addf %50, %52 : vector<8x784xf32>
    %54 = arith.negf %53 : vector<8x784xf32>
    %55 = math.exp %54 : vector<8x784xf32>
    %cst_41 = arith.constant 1.000000e+00 : f32
    %56 = vector.broadcast %cst_41 : f32 to vector<8x784xf32>
    %57 = arith.addf %56, %55 : vector<8x784xf32>
    %58 = arith.divf %56, %57 : vector<8x784xf32>
    %59 = arith.truncf %58 : vector<8x784xf32> to vector<8x784xbf16>
    %c0_42 = arith.constant 0 : index
    %c0_43 = arith.constant 0 : index
    %60 = vector.load %arg19[%c0_42, %c0_43] : memref<8x784xbf16, #tpu.memory_space<vmem>>, vector<8x784xbf16>
    tpu.vector_store %arg19[%c0_42, %c0_43], %59 {strides = array<i32>} : memref<8x784xbf16, #tpu.memory_space<vmem>>, vector<8x784xbf16>,
    %c0_44 = arith.constant 0 : index
    %c0_45 = arith.constant 0 : index
    %61 = vector.load %arg17[%c0_44, %c0_45] : memref<512x10xbf16, #tpu.memory_space<vmem>>, vector<512x10xbf16>
    %cst_46 = arith.constant dense<0.000000e+00> : vector<8x10xf32>
    %62 = tpu.matmul %48, %61, %cst_46 {dimension_numbers = #tpu.dot_dimension_numbers<[1], [0], [0], [1], [0, 0, 1, 1], [], []>} : vector<8x512xbf16>, vector<512x10xbf16>, vector<8x10xf32> -> vector<8x10xf32>
    %c0_47 = arith.constant 0 : index
    %c0_48 = arith.constant 0 : index
    %63 = vector.load %arg18[%c0_47, %c0_48] : memref<1x10xf32, #tpu.memory_space<vmem>>, vector<1x10xf32>
    %64 = vector.broadcast %63 : vector<1x10xf32> to vector<8x10xf32>
    %65 = arith.addf %62, %64 : vector<8x10xf32>
    %66 = arith.negf %65 : vector<8x10xf32>
    %67 = math.exp %66 : vector<8x10xf32>
    %cst_49 = arith.constant 1.000000e+00 : f32
    %68 = vector.broadcast %cst_49 : f32 to vector<8x10xf32>
    %69 = arith.addf %68, %67 : vector<8x10xf32>
    %70 = arith.divf %68, %69 : vector<8x10xf32>
    %c0_50 = arith.constant 0 : index
    %c0_51 = arith.constant 0 : index
    %71 = vector.load %arg20[%c0_50, %c0_51] : memref<8x10xf32, #tpu.memory_space<vmem>>, vector<8x10xf32>
    tpu.vector_store %arg20[%c0_50, %c0_51], %70 {strides = array<i32>} : memref<8x10xf32, #tpu.memory_space<vmem>>, vector<8x10xf32>,
    return
  }
  func.func @transform_0(%arg0: i32) -> (i32, i32) {
    %c0_i32 = arith.constant 0 : i32
    %c0_i32_0 = arith.constant 0 : i32
    return %arg0, %c0_i32 : i32, i32
  }
  func.func @transform_1(%arg0: i32) -> (i32, i32) {
    %c0_i32 = arith.constant 0 : i32
    %c0_i32_0 = arith.constant 0 : i32
    return %arg0, %c0_i32 : i32, i32
  }
  func.func @transform_2(%arg0: i32) -> (i32, i32) {
    %c0_i32 = arith.constant 0 : i32
    %c0_i32_0 = arith.constant 0 : i32
    %c0_i32_1 = arith.constant 0 : i32
    return %c0_i32, %c0_i32_0 : i32, i32
  }
  func.func @transform_3(%arg0: i32) -> (i32, i32) {
    %c0_i32 = arith.constant 0 : i32
    %c0_i32_0 = arith.constant 0 : i32
    %c0_i32_1 = arith.constant 0 : i32
    return %c0_i32, %c0_i32_0 : i32, i32
  }
  func.func @transform_4(%arg0: i32) -> (i32, i32) {
    %c0_i32 = arith.constant 0 : i32
    %c0_i32_0 = arith.constant 0 : i32
    %c0_i32_1 = arith.constant 0 : i32
    return %c0_i32, %c0_i32_0 : i32, i32
  }
  func.func @transform_5(%arg0: i32) -> (i32, i32) {
    %c0_i32 = arith.constant 0 : i32
    %c0_i32_0 = arith.constant 0 : i32
    %c0_i32_1 = arith.constant 0 : i32
    return %c0_i32, %c0_i32_0 : i32, i32
  }
  func.func @transform_6(%arg0: i32) -> (i32, i32) {
    %c0_i32 = arith.constant 0 : i32
    %c0_i32_0 = arith.constant 0 : i32
    %c0_i32_1 = arith.constant 0 : i32
    return %c0_i32, %c0_i32_0 : i32, i32
  }
  func.func @transform_7(%arg0: i32) -> (i32, i32) {
    %c0_i32 = arith.constant 0 : i32
    %c0_i32_0 = arith.constant 0 : i32
    %c0_i32_1 = arith.constant 0 : i32
    return %c0_i32, %c0_i32_0 : i32, i32
  }
  func.func @transform_8(%arg0: i32) -> (i32, i32) {
    %c0_i32 = arith.constant 0 : i32
    %c0_i32_0 = arith.constant 0 : i32
    %c0_i32_1 = arith.constant 0 : i32
    return %c0_i32, %c0_i32_0 : i32, i32
  }
  func.func @transform_9(%arg0: i32) -> (i32, i32) {
    %c0_i32 = arith.constant 0 : i32
    %c0_i32_0 = arith.constant 0 : i32
    %c0_i32_1 = arith.constant 0 : i32
    return %c0_i32, %c0_i32_0 : i32, i32
  }
  func.func @transform_10(%arg0: i32) -> (i32, i32) {
    %c0_i32 = arith.constant 0 : i32
    %c0_i32_0 = arith.constant 0 : i32
    %c0_i32_1 = arith.constant 0 : i32
    return %c0_i32, %c0_i32_0 : i32, i32
  }
  func.func @transform_11(%arg0: i32) -> (i32, i32) {
    %c0_i32 = arith.constant 0 : i32
    %c0_i32_0 = arith.constant 0 : i32
    %c0_i32_1 = arith.constant 0 : i32
    return %c0_i32, %c0_i32_0 : i32, i32
  }
  func.func @transform_12(%arg0: i32) -> (i32, i32) {
    %c0_i32 = arith.constant 0 : i32
    %c0_i32_0 = arith.constant 0 : i32
    %c0_i32_1 = arith.constant 0 : i32
    return %c0_i32, %c0_i32_0 : i32, i32
  }
  func.func @transform_13(%arg0: i32) -> (i32, i32) {
    %c0_i32 = arith.constant 0 : i32
    %c0_i32_0 = arith.constant 0 : i32
    %c0_i32_1 = arith.constant 0 : i32
    return %c0_i32, %c0_i32_0 : i32, i32
  }
  func.func @transform_14(%arg0: i32) -> (i32, i32) {
    %c0_i32 = arith.constant 0 : i32
    %c0_i32_0 = arith.constant 0 : i32
    %c0_i32_1 = arith.constant 0 : i32
    return %c0_i32, %c0_i32_0 : i32, i32
  }
  func.func @transform_15(%arg0: i32) -> (i32, i32) {
    %c0_i32 = arith.constant 0 : i32
    %c0_i32_0 = arith.constant 0 : i32
    %c0_i32_1 = arith.constant 0 : i32
    return %c0_i32, %c0_i32_0 : i32, i32
  }
  func.func @transform_16(%arg0: i32) -> (i32, i32) {
    %c0_i32 = arith.constant 0 : i32
    %c0_i32_0 = arith.constant 0 : i32
    %c0_i32_1 = arith.constant 0 : i32
    return %c0_i32, %c0_i32_0 : i32, i32
  }
  func.func @transform_17(%arg0: i32) -> (i32, i32) {
    %c0_i32 = arith.constant 0 : i32
    %c0_i32_0 = arith.constant 0 : i32
    %c0_i32_1 = arith.constant 0 : i32
    return %c0_i32, %c0_i32_0 : i32, i32
  }
  func.func @transform_18(%arg0: i32) -> (i32, i32) {
    %c0_i32 = arith.constant 0 : i32
    %c0_i32_0 = arith.constant 0 : i32
    return %arg0, %c0_i32 : i32, i32
  }
  func.func @transform_19(%arg0: i32) -> (i32, i32) {
    %c0_i32 = arith.constant 0 : i32
    %c0_i32_0 = arith.constant 0 : i32
    return %arg0, %c0_i32 : i32, i32
  }
}

</mosaic_0001>

<llo_original>
// kernel: vae_autoencoder_classifier_forward.1
$region0: #{vae_autoencoder_classifier_forward.1}
  #allocation0 [shape = 'u32[]', space=smem, size = 0x4, offset = 0x4, fixed_abs, tag = 'smem constant byte address 0x4 - core index']
  #allocation1 [shape = 'u32[144,128]{1,0:T(1,128)}', space=vmem, size = 0x12000, scoped, tag = 'internal scratch']
  %s0 = inlined_call_operand.vmem [shape: f32[8,784], index: 0, kind: input, shape index: {}]
  %s1 = inlined_call_operand.vmem [shape: f32[8,8], index: 1, kind: input, shape index: {}]
  %s2 = inlined_call_operand.vmem [shape: bf16[784,512], index: 2, kind: input, shape index: {}]
  %s3 = inlined_call_operand.vmem [shape: f32[1,512], index: 3, kind: input, shape index: {}]
  %s4 = inlined_call_operand.vmem [shape: bf16[512,256], index: 4, kind: input, shape index: {}]
  %s5 = inlined_call_operand.vmem [shape: f32[1,256], index: 5, kind: input, shape index: {}]
  %s6 = inlined_call_operand.vmem [shape: bf16[256,8], index: 6, kind: input, shape index: {}]
  %s7 = inlined_call_operand.vmem [shape: f32[1,8], index: 7, kind: input, shape index: {}]
  %s8 = inlined_call_operand.vmem [shape: bf16[256,8], index: 8, kind: input, shape index: {}]
  %s9 = inlined_call_operand.vmem [shape: f32[1,8], index: 9, kind: input, shape index: {}]
  %s10 = inlined_call_operand.vmem [shape: bf16[8,256], index: 10, kind: input, shape index: {}]
  %s11 = inlined_call_operand.vmem [shape: f32[1,256], index: 11, kind: input, shape index: {}]
  %s12 = inlined_call_operand.vmem [shape: bf16[256,512], index: 12, kind: input, shape index: {}]
  %s13 = inlined_call_operand.vmem [shape: f32[1,512], index: 13, kind: input, shape index: {}]
  %s14 = inlined_call_operand.vmem [shape: bf16[512,784], index: 14, kind: input, shape index: {}]
  %s15 = inlined_call_operand.vmem [shape: f32[1,784], index: 15, kind: input, shape index: {}]
  %s16 = inlined_call_operand.vmem [shape: bf16[512,10], index: 16, kind: input, shape index: {}]
  %s17 = inlined_call_operand.vmem [shape: f32[1,10], index: 17, kind: input, shape index: {}]
  %s18 = inlined_call_operand.vmem [shape: bf16[8,784], index: 18, kind: output, shape index: {0}]
  %s19 = inlined_call_operand.hbm [shape: f32[8,10], index: 19, kind: output, shape index: {1}]
  %20 = xla_tuple %s18, %s19
  %s21 = sld [smem:[#allocation0]]
  $region90: #{vae_autoencoder_classifier_forward.1} parent=0
    _
  %s23 = ssub.s32 1, %s21
  %s24 = scalar_select 0, %s23, %s21
  $region1: #{vae_autoencoder_classifier_forward.1} parent=0
    #allocation2 [shape = 'u8[4096]{0}', space=vmem, size = 0x1000, scoped, tag = 'output window, operand 1, single buffered']
    #allocation3 [shape = 's32[1]{0}', space=sflag, size = 0x4, scoped, tag = 'scoped memory for vae_autoencoder_classifier_forward.1']
    %25 = vsyncpa [#allocation3], 0
    // Predicated region
    $region2: #{vae_autoencoder_classifier_forward.1} parent=1 // pred_check
      _
    $region3: #{vae_autoencoder_classifier_forward.1} parent=1 // pred_check_branch
      %27 = sbr.rel (0) target = $region5
    $region4: #{vae_autoencoder_classifier_forward.1} parent=1 // pred_region
      _
    $region5: #{vae_autoencoder_classifier_forward.1} parent=1 // pred_fallthru
      _
    // Predicated region
    $region6: #{vae_autoencoder_classifier_forward.1} parent=1 // pred_check
      _
    $region7: #{vae_autoencoder_classifier_forward.1} parent=1 // pred_check_branch
      %29 = sbr.rel (0) target = $region9
    $region8: #{vae_autoencoder_classifier_forward.1} parent=1 // pred_region
      _
    $region9: #{vae_autoencoder_classifier_forward.1} parent=1 // pred_fallthru
      _
    // Predicated region
    $region10: #{vae_autoencoder_classifier_forward.1} parent=1 // pred_check
      _
    $region11: #{vae_autoencoder_classifier_forward.1} parent=1 // pred_check_branch
      %31 = sbr.rel (0) target = $region13
    $region12: #{vae_autoencoder_classifier_forward.1} parent=1 // pred_region
      _
    $region13: #{vae_autoencoder_classifier_forward.1} parent=1 // pred_fallthru
      _
    // Predicated region
    $region14: #{vae_autoencoder_classifier_forward.1} parent=1 // pred_check
      _
    $region15: #{vae_autoencoder_classifier_forward.1} parent=1 // pred_check_branch
      %33 = sbr.rel (0) target = $region17
    $region16: #{vae_autoencoder_classifier_forward.1} parent=1 // pred_region
      _
    $region17: #{vae_autoencoder_classifier_forward.1} parent=1 // pred_fallthru
      _
    // Predicated region
    $region18: #{vae_autoencoder_classifier_forward.1} parent=1 // pred_check
      _
    $region19: #{vae_autoencoder_classifier_forward.1} parent=1 // pred_check_branch
      %35 = sbr.rel (0) target = $region21
    $region20: #{vae_autoencoder_classifier_forward.1} parent=1 // pred_region
      _
    $region21: #{vae_autoencoder_classifier_forward.1} parent=1 // pred_fallthru
      _
    // Predicated region
    $region22: #{vae_autoencoder_classifier_forward.1} parent=1 // pred_check
      _
    $region23: #{vae_autoencoder_classifier_forward.1} parent=1 // pred_check_branch
      %37 = sbr.rel (0) target = $region25
    $region24: #{vae_autoencoder_classifier_forward.1} parent=1 // pred_region
      _
    $region25: #{vae_autoencoder_classifier_forward.1} parent=1 // pred_fallthru
      _
    // Predicated region
    $region26: #{vae_autoencoder_classifier_forward.1} parent=1 // pred_check
      _
    $region27: #{vae_autoencoder_classifier_forward.1} parent=1 // pred_check_branch
      %39 = sbr.rel (0) target = $region29
    $region28: #{vae_autoencoder_classifier_forward.1} parent=1 // pred_region
      _
    $region29: #{vae_autoencoder_classifier_forward.1} parent=1 // pred_fallthru
      _
    // Predicated region
    $region30: #{vae_autoencoder_classifier_forward.1} parent=1 // pred_check
      _
    $region31: #{vae_autoencoder_classifier_forward.1} parent=1 // pred_check_branch
      %41 = sbr.rel (0) target = $region33
    $region32: #{vae_autoencoder_classifier_forward.1} parent=1 // pred_region
      _
    $region33: #{vae_autoencoder_classifier_forward.1} parent=1 // pred_fallthru
      _
    // Predicated region
    $region34: #{vae_autoencoder_classifier_forward.1} parent=1 // pred_check
      _
    $region35: #{vae_autoencoder_classifier_forward.1} parent=1 // pred_check_branch
      %43 = sbr.rel (0) target = $region37
    $region36: #{vae_autoencoder_classifier_forward.1} parent=1 // pred_region
      _
    $region37: #{vae_autoencoder_classifier_forward.1} parent=1 // pred_fallthru
      _
    // Predicated region
    $region38: #{vae_autoencoder_classifier_forward.1} parent=1 // pred_check
      _
    $region39: #{vae_autoencoder_classifier_forward.1} parent=1 // pred_check_branch
      %45 = sbr.rel (0) target = $region41
    $region40: #{vae_autoencoder_classifier_forward.1} parent=1 // pred_region
      _
    $region41: #{vae_autoencoder_classifier_forward.1} parent=1 // pred_fallthru
      _
    // Predicated region
    $region42: #{vae_autoencoder_classifier_forward.1} parent=1 // pred_check
      _
    $region43: #{vae_autoencoder_classifier_forward.1} parent=1 // pred_check_branch
      %47 = sbr.rel (0) target = $region45
    $region44: #{vae_autoencoder_classifier_forward.1} parent=1 // pred_region
      _
    $region45: #{vae_autoencoder_classifier_forward.1} parent=1 // pred_fallthru
      _
    // Predicated region
    $region46: #{vae_autoencoder_classifier_forward.1} parent=1 // pred_check
      _
    $region47: #{vae_autoencoder_classifier_forward.1} parent=1 // pred_check_branch
      %49 = sbr.rel (0) target = $region49
    $region48: #{vae_autoencoder_classifier_forward.1} parent=1 // pred_region
      _
    $region49: #{vae_autoencoder_classifier_forward.1} parent=1 // pred_fallthru
      _
    // Predicated region
    $region50: #{vae_autoencoder_classifier_forward.1} parent=1 // pred_check
      _
    $region51: #{vae_autoencoder_classifier_forward.1} parent=1 // pred_check_branch
      %51 = sbr.rel (0) target = $region53
    $region52: #{vae_autoencoder_classifier_forward.1} parent=1 // pred_region
      _
    $region53: #{vae_autoencoder_classifier_forward.1} parent=1 // pred_fallthru
      _
    // Predicated region
    $region54: #{vae_autoencoder_classifier_forward.1} parent=1 // pred_check
      _
    $region55: #{vae_autoencoder_classifier_forward.1} parent=1 // pred_check_branch
      %53 = sbr.rel (0) target = $region57
    $region56: #{vae_autoencoder_classifier_forward.1} parent=1 // pred_region
      _
    $region57: #{vae_autoencoder_classifier_forward.1} parent=1 // pred_fallthru
      _
    // Predicated region
    $region58: #{vae_autoencoder_classifier_forward.1} parent=1 // pred_check
      _
    $region59: #{vae_autoencoder_classifier_forward.1} parent=1 // pred_check_branch
      %55 = sbr.rel (0) target = $region61
    $region60: #{vae_autoencoder_classifier_forward.1} parent=1 // pred_region
      _
    $region61: #{vae_autoencoder_classifier_forward.1} parent=1 // pred_fallthru
      _
    // Predicated region
    $region62: #{vae_autoencoder_classifier_forward.1} parent=1 // pred_check
      _
    $region63: #{vae_autoencoder_classifier_forward.1} parent=1 // pred_check_branch
      %57 = sbr.rel (0) target = $region65
    $region64: #{vae_autoencoder_classifier_forward.1} parent=1 // pred_region
      _
    $region65: #{vae_autoencoder_classifier_forward.1} parent=1 // pred_fallthru
      _
    // Predicated region
    $region66: #{vae_autoencoder_classifier_forward.1} parent=1 // pred_check
      _
    $region67: #{vae_autoencoder_classifier_forward.1} parent=1 // pred_check_branch
      %59 = sbr.rel (0) target = $region69
    $region68: #{vae_autoencoder_classifier_forward.1} parent=1 // pred_region
      _
    $region69: #{vae_autoencoder_classifier_forward.1} parent=1 // pred_fallthru
      _
    // Predicated region
    $region70: #{vae_autoencoder_classifier_forward.1} parent=1 // pred_check
      _
    $region71: #{vae_autoencoder_classifier_forward.1} parent=1 // pred_check_branch
      %61 = sbr.rel (0) target = $region73
    $region72: #{vae_autoencoder_classifier_forward.1} parent=1 // pred_region
      _
    $region73: #{vae_autoencoder_classifier_forward.1} parent=1 // pred_fallthru
      _
    %v63 = vld [vmem:[%s0] sm:$0xff]
    %v64 = vld [vmem:[%s0 + $0x8] sm:$0xff]
    %v65 = vld [vmem:[%s0 + $0x10] sm:$0xff]
    %v66 = vld [vmem:[%s0 + $0x18] sm:$0xff]
    %v67 = vld [vmem:[%s0 + $0x20] sm:$0xff]
    %v68 = vld [vmem:[%s0 + $0x28] sm:$0xff]
    %v69 = vld [vmem:[%s0 + $0x30] sm:$0xff]
    %v70 = vpack.c.bf16 %v63, %v63
    %v71 = vpack.c.bf16 %v64, %v64
    %v72 = vpack.c.bf16 %v65, %v65
    %v73 = vpack.c.bf16 %v66, %v66
    %v74 = vpack.c.bf16 %v67, %v67
    %v75 = vpack.c.bf16 %v68, %v68
    %v76 = vpack.c.bf16 %v69, %v69
    %v77 = vld [vmem:[%s2] sm:$0xff]
    %v78 = vld [vmem:[%s2 + $0x8] sm:$0xff]
    %v79 = vld [vmem:[%s2 + $0x10] sm:$0xff]
    %v80 = vld [vmem:[%s2 + $0x18] sm:$0xff]
    %v81 = vld [vmem:[%s2 + $0x20] sm:$0xff]
    %v82 = vld [vmem:[%s2 + $0x28] sm:$0xff]
    %v83 = vld [vmem:[%s2 + $0x30] sm:$0xff]
    %v84 = vld [vmem:[%s2 + $0x38] sm:$0xff]
    %v85 = vld [vmem:[%s2 + $0x40] sm:$0xff]
    %v86 = vld [vmem:[%s2 + $0x48] sm:$0xff]
    %v87 = vld [vmem:[%s2 + $0x50] sm:$0xff]
    %v88 = vld [vmem:[%s2 + $0x58] sm:$0xff]
    %v89 = vld [vmem:[%s2 + $0x60] sm:$0xff]
    %v90 = vld [vmem:[%s2 + $0x68] sm:$0xff]
    %v91 = vld [vmem:[%s2 + $0x70] sm:$0xff]
    %v92 = vld [vmem:[%s2 + $0x78] sm:$0xff]
    %v93 = vld [vmem:[%s2 + $0x80] sm:$0xff]
    %v94 = vld [vmem:[%s2 + $0x88] sm:$0xff]
    %v95 = vld [vmem:[%s2 + $0x90] sm:$0xff]
    %v96 = vld [vmem:[%s2 + $0x98] sm:$0xff]
    %v97 = vld [vmem:[%s2 + $0xa0] sm:$0xff]
    %v98 = vld [vmem:[%s2 + $0xa8] sm:$0xff]
    %v99 = vld [vmem:[%s2 + $0xb0] sm:$0xff]
    %v100 = vld [vmem:[%s2 + $0xb8] sm:$0xff]
    %v101 = vld [vmem:[%s2 + $0xc0] sm:$0xff]
    %v102 = vld [vmem:[%s2 + $0xc8] sm:$0xff]
    %v103 = vld [vmem:[%s2 + $0xd0] sm:$0xff]
    %v104 = vld [vmem:[%s2 + $0xd8] sm:$0xff]
    %v105 = vld [vmem:[%s2 + $0xe0] sm:$0xff]
    %v106 = vld [vmem:[%s2 + $0xe8] sm:$0xff]
    %v107 = vld [vmem:[%s2 + $0xf0] sm:$0xff]
    %v108 = vld [vmem:[%s2 + $0xf8] sm:$0xff]
    %v109 = vld [vmem:[%s2 + $0x100] sm:$0xff]
    %v110 = vld [vmem:[%s2 + $0x108] sm:$0xff]
    %v111 = vld [vmem:[%s2 + $0x110] sm:$0xff]
    %v112 = vld [vmem:[%s2 + $0x118] sm:$0xff]
    %v113 = vld [vmem:[%s2 + $0x120] sm:$0xff]
    %v114 = vld [vmem:[%s2 + $0x128] sm:$0xff]
    %v115 = vld [vmem:[%s2 + $0x130] sm:$0xff]
    %v116 = vld [vmem:[%s2 + $0x138] sm:$0xff]
    %v117 = vld [vmem:[%s2 + $0x140] sm:$0xff]
    %v118 = vld [vmem:[%s2 + $0x148] sm:$0xff]
    %v119 = vld [vmem:[%s2 + $0x150] sm:$0xff]
    %v120 = vld [vmem:[%s2 + $0x158] sm:$0xff]
    %v121 = vld [vmem:[%s2 + $0x160] sm:$0xff]
    %v122 = vld [vmem:[%s2 + $0x168] sm:$0xff]
    %v123 = vld [vmem:[%s2 + $0x170] sm:$0xff]
    %v124 = vld [vmem:[%s2 + $0x178] sm:$0xff]
    %v125 = vld [vmem:[%s2 + $0x180] sm:$0xff]
    %v126 = vld [vmem:[%s2 + $0x188] sm:$0xff]
    %v127 = vld [vmem:[%s2 + $0x190] sm:$0xff]
    %v128 = vld [vmem:[%s2 + $0x198] sm:$0xff]
    %v129 = vld [vmem:[%s2 + $0x1a0] sm:$0xff]
    %v130 = vld [vmem:[%s2 + $0x1a8] sm:$0xff]
    %v131 = vld [vmem:[%s2 + $0x1b0] sm:$0xff]
    %v132 = vld [vmem:[%s2 + $0x1b8] sm:$0xff]
    %v133 = vld [vmem:[%s2 + $0x1c0] sm:$0xff]
    %v134 = vld [vmem:[%s2 + $0x1c8] sm:$0xff]
    %v135 = vld [vmem:[%s2 + $0x1d0] sm:$0xff]
    %v136 = vld [vmem:[%s2 + $0x1d8] sm:$0xff]
    %v137 = vld [vmem:[%s2 + $0x1e0] sm:$0xff]
    %v138 = vld [vmem:[%s2 + $0x1e8] sm:$0xff]
    %v139 = vld [vmem:[%s2 + $0x1f0] sm:$0xff]
    %v140 = vld [vmem:[%s2 + $0x1f8] sm:$0xff]
    %v141 = vld [vmem:[%s2 + $0x200] sm:$0xff]
    %v142 = vld [vmem:[%s2 + $0x208] sm:$0xff]
    %v143 = vld [vmem:[%s2 + $0x210] sm:$0xff]
    %v144 = vld [vmem:[%s2 + $0x218] sm:$0xff]
    %v145 = vld [vmem:[%s2 + $0x220] sm:$0xff]
    %v146 = vld [vmem:[%s2 + $0x228] sm:$0xff]
    %v147 = vld [vmem:[%s2 + $0x230] sm:$0xff]
    %v148 = vld [vmem:[%s2 + $0x238] sm:$0xff]
    %v149 = vld [vmem:[%s2 + $0x240] sm:$0xff]
    %v150 = vld [vmem:[%s2 + $0x248] sm:$0xff]
    %v151 = vld [vmem:[%s2 + $0x250] sm:$0xff]
    %v152 = vld [vmem:[%s2 + $0x258] sm:$0xff]
    %v153 = vld [vmem:[%s2 + $0x260] sm:$0xff]
    %v154 = vld [vmem:[%s2 + $0x268] sm:$0xff]
    %v155 = vld [vmem:[%s2 + $0x270] sm:$0xff]
    %v156 = vld [vmem:[%s2 + $0x278] sm:$0xff]
    %v157 = vld [vmem:[%s2 + $0x280] sm:$0xff]
    %v158 = vld [vmem:[%s2 + $0x288] sm:$0xff]
    %v159 = vld [vmem:[%s2 + $0x290] sm:$0xff]
    %v160 = vld [vmem:[%s2 + $0x298] sm:$0xff]
    %v161 = vld [vmem:[%s2 + $0x2a0] sm:$0xff]
    %v162 = vld [vmem:[%s2 + $0x2a8] sm:$0xff]
    %v163 = vld [vmem:[%s2 + $0x2b0] sm:$0xff]
    %v164 = vld [vmem:[%s2 + $0x2b8] sm:$0xff]
    %v165 = vld [vmem:[%s2 + $0x2c0] sm:$0xff]
    %v166 = vld [vmem:[%s2 + $0x2c8] sm:$0xff]
    %v167 = vld [vmem:[%s2 + $0x2d0] sm:$0xff]
    %v168 = vld [vmem:[%s2 + $0x2d8] sm:$0xff]
    %v169 = vld [vmem:[%s2 + $0x2e0] sm:$0xff]
    %v170 = vld [vmem:[%s2 + $0x2e8] sm:$0xff]
    %v171 = vld [vmem:[%s2 + $0x2f0] sm:$0xff]
    %v172 = vld [vmem:[%s2 + $0x2f8] sm:$0xff]
    %v173 = vld [vmem:[%s2 + $0x300] sm:$0xff]
    %v174 = vld [vmem:[%s2 + $0x308] sm:$0xff]
    %v175 = vld [vmem:[%s2 + $0x310] sm:$0xff]
    %v176 = vld [vmem:[%s2 + $0x318] sm:$0xff]
    %v177 = vld [vmem:[%s2 + $0x320] sm:$0xff]
    %v178 = vld [vmem:[%s2 + $0x328] sm:$0xff]
    %v179 = vld [vmem:[%s2 + $0x330] sm:$0xff]
    %v180 = vld [vmem:[%s2 + $0x338] sm:$0xff]
    %v181 = vld [vmem:[%s2 + $0x340] sm:$0xff]
    %v182 = vld [vmem:[%s2 + $0x348] sm:$0xff]
    %v183 = vld [vmem:[%s2 + $0x350] sm:$0xff]
    %v184 = vld [vmem:[%s2 + $0x358] sm:$0xff]
    %v185 = vld [vmem:[%s2 + $0x360] sm:$0xff]
    %v186 = vld [vmem:[%s2 + $0x368] sm:$0xff]
    %v187 = vld [vmem:[%s2 + $0x370] sm:$0xff]
    %v188 = vld [vmem:[%s2 + $0x378] sm:$0xff]
    %v189 = vld [vmem:[%s2 + $0x380] sm:$0xff]
    %v190 = vld [vmem:[%s2 + $0x388] sm:$0xff]
    %v191 = vld [vmem:[%s2 + $0x390] sm:$0xff]
    %v192 = vld [vmem:[%s2 + $0x398] sm:$0xff]
    %v193 = vld [vmem:[%s2 + $0x3a0] sm:$0xff]
    %v194 = vld [vmem:[%s2 + $0x3a8] sm:$0xff]
    %v195 = vld [vmem:[%s2 + $0x3b0] sm:$0xff]
    %v196 = vld [vmem:[%s2 + $0x3b8] sm:$0xff]
    %v197 = vld [vmem:[%s2 + $0x3c0] sm:$0xff]
    %v198 = vld [vmem:[%s2 + $0x3c8] sm:$0xff]
    %v199 = vld [vmem:[%s2 + $0x3d0] sm:$0xff]
    %v200 = vld [vmem:[%s2 + $0x3d8] sm:$0xff]
    %v201 = vld [vmem:[%s2 + $0x3e0] sm:$0xff]
    %v202 = vld [vmem:[%s2 + $0x3e8] sm:$0xff]
    %v203 = vld [vmem:[%s2 + $0x3f0] sm:$0xff]
    %v204 = vld [vmem:[%s2 + $0x3f8] sm:$0xff]
    %v205 = vld [vmem:[%s2 + $0x400] sm:$0xff]
    %v206 = vld [vmem:[%s2 + $0x408] sm:$0xff]
    %v207 = vld [vmem:[%s2 + $0x410] sm:$0xff]
    %v208 = vld [vmem:[%s2 + $0x418] sm:$0xff]
    %v209 = vld [vmem:[%s2 + $0x420] sm:$0xff]
    %v210 = vld [vmem:[%s2 + $0x428] sm:$0xff]
    %v211 = vld [vmem:[%s2 + $0x430] sm:$0xff]
    %v212 = vld [vmem:[%s2 + $0x438] sm:$0xff]
    %v213 = vld [vmem:[%s2 + $0x440] sm:$0xff]
    %v214 = vld [vmem:[%s2 + $0x448] sm:$0xff]
    %v215 = vld [vmem:[%s2 + $0x450] sm:$0xff]
    %v216 = vld [vmem:[%s2 + $0x458] sm:$0xff]
    %v217 = vld [vmem:[%s2 + $0x460] sm:$0xff]
    %v218 = vld [vmem:[%s2 + $0x468] sm:$0xff]
    %v219 = vld [vmem:[%s2 + $0x470] sm:$0xff]
    %v220 = vld [vmem:[%s2 + $0x478] sm:$0xff]
    %v221 = vld [vmem:[%s2 + $0x480] sm:$0xff]
    %v222 = vld [vmem:[%s2 + $0x488] sm:$0xff]
    %v223 = vld [vmem:[%s2 + $0x490] sm:$0xff]
    %v224 = vld [vmem:[%s2 + $0x498] sm:$0xff]
    %v225 = vld [vmem:[%s2 + $0x4a0] sm:$0xff]
    %v226 = vld [vmem:[%s2 + $0x4a8] sm:$0xff]
    %v227 = vld [vmem:[%s2 + $0x4b0] sm:$0xff]
    %v228 = vld [vmem:[%s2 + $0x4b8] sm:$0xff]
    %v229 = vld [vmem:[%s2 + $0x4c0] sm:$0xff]
    %v230 = vld [vmem:[%s2 + $0x4c8] sm:$0xff]
    %v231 = vld [vmem:[%s2 + $0x4d0] sm:$0xff]
    %v232 = vld [vmem:[%s2 + $0x4d8] sm:$0xff]
    %v233 = vld [vmem:[%s2 + $0x4e0] sm:$0xff]
    %v234 = vld [vmem:[%s2 + $0x4e8] sm:$0xff]
    %v235 = vld [vmem:[%s2 + $0x4f0] sm:$0xff]
    %v236 = vld [vmem:[%s2 + $0x4f8] sm:$0xff]
    %v237 = vld [vmem:[%s2 + $0x500] sm:$0xff]
    %v238 = vld [vmem:[%s2 + $0x508] sm:$0xff]
    %v239 = vld [vmem:[%s2 + $0x510] sm:$0xff]
    %v240 = vld [vmem:[%s2 + $0x518] sm:$0xff]
    %v241 = vld [vmem:[%s2 + $0x520] sm:$0xff]
    %v242 = vld [vmem:[%s2 + $0x528] sm:$0xff]
    %v243 = vld [vmem:[%s2 + $0x530] sm:$0xff]
    %v244 = vld [vmem:[%s2 + $0x538] sm:$0xff]
    %v245 = vld [vmem:[%s2 + $0x540] sm:$0xff]
    %v246 = vld [vmem:[%s2 + $0x548] sm:$0xff]
    %v247 = vld [vmem:[%s2 + $0x550] sm:$0xff]
    %v248 = vld [vmem:[%s2 + $0x558] sm:$0xff]
    %v249 = vld [vmem:[%s2 + $0x560] sm:$0xff]
    %v250 = vld [vmem:[%s2 + $0x568] sm:$0xff]
    %v251 = vld [vmem:[%s2 + $0x570] sm:$0xff]
    %v252 = vld [vmem:[%s2 + $0x578] sm:$0xff]
    %v253 = vld [vmem:[%s2 + $0x580] sm:$0xff]
    %v254 = vld [vmem:[%s2 + $0x588] sm:$0xff]
    %v255 = vld [vmem:[%s2 + $0x590] sm:$0xff]
    %v256 = vld [vmem:[%s2 + $0x598] sm:$0xff]
    %v257 = vld [vmem:[%s2 + $0x5a0] sm:$0xff]
    %v258 = vld [vmem:[%s2 + $0x5a8] sm:$0xff]
    %v259 = vld [vmem:[%s2 + $0x5b0] sm:$0xff]
    %v260 = vld [vmem:[%s2 + $0x5b8] sm:$0xff]
    %v261 = vld [vmem:[%s2 + $0x5c0] sm:$0xff]
    %v262 = vld [vmem:[%s2 + $0x5c8] sm:$0xff]
    %v263 = vld [vmem:[%s2 + $0x5d0] sm:$0xff]
    %v264 = vld [vmem:[%s2 + $0x5d8] sm:$0xff]
    %v265 = vld [vmem:[%s2 + $0x5e0] sm:$0xff]
    %v266 = vld [vmem:[%s2 + $0x5e8] sm:$0xff]
    %v267 = vld [vmem:[%s2 + $0x5f0] sm:$0xff]
    %v268 = vld [vmem:[%s2 + $0x5f8] sm:$0xff]
    %v269 = vld [vmem:[%s2 + $0x600] sm:$0xff]
    %v270 = vld [vmem:[%s2 + $0x608] sm:$0xff]
    %v271 = vld [vmem:[%s2 + $0x610] sm:$0xff]
    %v272 = vld [vmem:[%s2 + $0x618] sm:$0xff]
    %v273 = vld [vmem:[%s3] sm:$0xf]
    %v275 = vlaneseq
    %v276 = vshrl.u32 %v275, 7
    %v277 = vsub.s32 0, %v276
    %v278 = vrot.slane %v273, %v277
    %v279 = vlaneseq
    %v280 = vshrl.u32 %v279, 7
    %v281 = vsub.s32 1, %v280
    %v282 = vrot.slane %v273, %v281
    %v283 = vlaneseq
    %v284 = vshrl.u32 %v283, 7
    %v285 = vsub.s32 2, %v284
    %v286 = vrot.slane %v273, %v285
    %v287 = vlaneseq
    %v288 = vshrl.u32 %v287, 7
    %v289 = vsub.s32 3, %v288
    %v290 = vrot.slane %v273, %v289
    %v491 = vunpack.c.l.b16 %v77
    %v492 = vunpack.c.h.b16 %v77
    %v493 = vunpack.c.l.b16 %v78
    %v494 = vunpack.c.h.b16 %v78
    %v495 = vunpack.c.l.b16 %v79
    %v496 = vunpack.c.h.b16 %v79
    %v497 = vunpack.c.l.b16 %v80
    %v498 = vunpack.c.h.b16 %v80
    %v499 = vunpack.c.l.b16 %v81
    %v500 = vunpack.c.h.b16 %v81
    %v501 = vunpack.c.l.b16 %v82
    %v502 = vunpack.c.h.b16 %v82
    %v503 = vunpack.c.l.b16 %v83
    %v504 = vunpack.c.h.b16 %v83
    %v505 = vunpack.c.l.b16 %v84
    %v506 = vunpack.c.h.b16 %v84
    %v507 = vunpack.c.l.b16 %v85
    %v508 = vunpack.c.h.b16 %v85
    %v509 = vunpack.c.l.b16 %v86
    %v510 = vunpack.c.h.b16 %v86
    %v511 = vunpack.c.l.b16 %v87
    %v512 = vunpack.c.h.b16 %v87
    %v513 = vunpack.c.l.b16 %v88
    %v514 = vunpack.c.h.b16 %v88
    %v515 = vunpack.c.l.b16 %v89
    %v516 = vunpack.c.h.b16 %v89
    %v517 = vunpack.c.l.b16 %v90
    %v518 = vunpack.c.h.b16 %v90
    %v519 = vunpack.c.l.b16 %v91
    %v520 = vunpack.c.h.b16 %v91
    %v521 = vunpack.c.l.b16 %v92
    %v522 = vunpack.c.h.b16 %v92
    %v523 = vunpack.c.l.b16 %v93
    %v524 = vunpack.c.h.b16 %v93
    %v525 = vunpack.c.l.b16 %v94
    %v526 = vunpack.c.h.b16 %v94
    %v527 = vunpack.c.l.b16 %v95
    %v528 = vunpack.c.h.b16 %v95
    %v529 = vunpack.c.l.b16 %v96
    %v530 = vunpack.c.h.b16 %v96
    %v531 = vunpack.c.l.b16 %v97
    %v532 = vunpack.c.h.b16 %v97
    %v533 = vunpack.c.l.b16 %v98
    %v534 = vunpack.c.h.b16 %v98
    %v535 = vunpack.c.l.b16 %v99
    %v536 = vunpack.c.h.b16 %v99
    %v537 = vunpack.c.l.b16 %v100
    %v538 = vunpack.c.h.b16 %v100
    %v539 = vunpack.c.l.b16 %v101
    %v540 = vunpack.c.h.b16 %v101
    %v541 = vunpack.c.l.b16 %v102
    %v542 = vunpack.c.h.b16 %v102
    %v543 = vunpack.c.l.b16 %v103
    %v544 = vunpack.c.h.b16 %v103
    %v545 = vunpack.c.l.b16 %v104
    %v546 = vunpack.c.h.b16 %v104
    %v547 = vunpack.c.l.b16 %v105
    %v548 = vunpack.c.h.b16 %v105
    %v549 = vunpack.c.l.b16 %v106
    %v550 = vunpack.c.h.b16 %v106
    %v551 = vunpack.c.l.b16 %v107
    %v552 = vunpack.c.h.b16 %v107
    %v553 = vunpack.c.l.b16 %v108
    %v554 = vunpack.c.h.b16 %v108
    %v555 = vunpack.c.l.b16 %v109
    %v556 = vunpack.c.h.b16 %v109
    %v557 = vunpack.c.l.b16 %v110
    %v558 = vunpack.c.h.b16 %v110
    %v559 = vunpack.c.l.b16 %v111
    %v560 = vunpack.c.h.b16 %v111
    %v561 = vunpack.c.l.b16 %v112
    %v562 = vunpack.c.h.b16 %v112
    %v563 = vunpack.c.l.b16 %v113
    %v564 = vunpack.c.h.b16 %v113
    %v565 = vunpack.c.l.b16 %v114
    %v566 = vunpack.c.h.b16 %v114
    %v567 = vunpack.c.l.b16 %v115
    %v568 = vunpack.c.h.b16 %v115
    %v569 = vunpack.c.l.b16 %v116
    %v570 = vunpack.c.h.b16 %v116
    %v571 = vunpack.c.l.b16 %v117
    %v572 = vunpack.c.h.b16 %v117
    %v573 = vunpack.c.l.b16 %v118
    %v574 = vunpack.c.h.b16 %v118
    %v575 = vunpack.c.l.b16 %v119
    %v576 = vunpack.c.h.b16 %v119
    %v577 = vunpack.c.l.b16 %v120
    %v578 = vunpack.c.h.b16 %v120
    %v579 = vunpack.c.l.b16 %v121
    %v580 = vunpack.c.h.b16 %v121
    %v581 = vunpack.c.l.b16 %v122
    %v582 = vunpack.c.h.b16 %v122
    %v583 = vunpack.c.l.b16 %v123
    %v584 = vunpack.c.h.b16 %v123
    %v585 = vunpack.c.l.b16 %v124
    %v586 = vunpack.c.h.b16 %v124
    %v587 = vunpack.c.l.b16 %v125
    %v588 = vunpack.c.h.b16 %v125
    %v589 = vunpack.c.l.b16 %v126
    %v590 = vunpack.c.h.b16 %v126
    %v591 = vunpack.c.l.b16 %v127
    %v592 = vunpack.c.h.b16 %v127
    %v593 = vunpack.c.l.b16 %v128
    %v594 = vunpack.c.h.b16 %v128
    %v595 = vunpack.c.l.b16 %v129
    %v596 = vunpack.c.h.b16 %v129
    %v597 = vunpack.c.l.b16 %v130
    %v598 = vunpack.c.h.b16 %v130
    %v599 = vunpack.c.l.b16 %v131
    %v600 = vunpack.c.h.b16 %v131
    %v601 = vunpack.c.l.b16 %v132
    %v602 = vunpack.c.h.b16 %v132
    %v603 = vunpack.c.l.b16 %v133
    %v604 = vunpack.c.h.b16 %v133
    %v605 = vunpack.c.l.b16 %v134
    %v606 = vunpack.c.h.b16 %v134
    %v607 = vunpack.c.l.b16 %v135
    %v608 = vunpack.c.h.b16 %v135
    %v609 = vunpack.c.l.b16 %v136
    %v610 = vunpack.c.h.b16 %v136
    %v611 = vunpack.c.l.b16 %v137
    %v612 = vunpack.c.h.b16 %v137
    %v613 = vunpack.c.l.b16 %v138
    %v614 = vunpack.c.h.b16 %v138
    %v615 = vunpack.c.l.b16 %v139
    %v616 = vunpack.c.h.b16 %v139
    %v617 = vunpack.c.l.b16 %v140
    %v618 = vunpack.c.h.b16 %v140
    %v619 = vunpack.c.l.b16 %v141
    %v620 = vunpack.c.h.b16 %v141
    %v621 = vunpack.c.l.b16 %v142
    %v622 = vunpack.c.h.b16 %v142
    %v623 = vunpack.c.l.b16 %v143
    %v624 = vunpack.c.h.b16 %v143
    %v625 = vunpack.c.l.b16 %v144
    %v626 = vunpack.c.h.b16 %v144
    %v627 = vunpack.c.l.b16 %v145
    %v628 = vunpack.c.h.b16 %v145
    %v629 = vunpack.c.l.b16 %v146
    %v630 = vunpack.c.h.b16 %v146
    %v631 = vunpack.c.l.b16 %v147
    %v632 = vunpack.c.h.b16 %v147
    %v633 = vunpack.c.l.b16 %v148
    %v634 = vunpack.c.h.b16 %v148
    %v635 = vunpack.c.l.b16 %v149
    %v636 = vunpack.c.h.b16 %v149
    %v637 = vunpack.c.l.b16 %v150
    %v638 = vunpack.c.h.b16 %v150
    %v639 = vunpack.c.l.b16 %v151
    %v640 = vunpack.c.h.b16 %v151
    %v641 = vunpack.c.l.b16 %v152
    %v642 = vunpack.c.h.b16 %v152
    %v643 = vunpack.c.l.b16 %v153
    %v644 = vunpack.c.h.b16 %v153
    %v645 = vunpack.c.l.b16 %v154
    %v646 = vunpack.c.h.b16 %v154
    %v647 = vunpack.c.l.b16 %v155
    %v648 = vunpack.c.h.b16 %v155
    %v649 = vunpack.c.l.b16 %v156
    %v650 = vunpack.c.h.b16 %v156
    %v651 = vunpack.c.l.b16 %v157
    %v652 = vunpack.c.h.b16 %v157
    %v653 = vunpack.c.l.b16 %v158
    %v654 = vunpack.c.h.b16 %v158
    %v655 = vunpack.c.l.b16 %v159
    %v656 = vunpack.c.h.b16 %v159
    %v657 = vunpack.c.l.b16 %v160
    %v658 = vunpack.c.h.b16 %v160
    %v659 = vunpack.c.l.b16 %v161
    %v660 = vunpack.c.h.b16 %v161
    %v661 = vunpack.c.l.b16 %v162
    %v662 = vunpack.c.h.b16 %v162
    %v663 = vunpack.c.l.b16 %v163
    %v664 = vunpack.c.h.b16 %v163
    %v665 = vunpack.c.l.b16 %v164
    %v666 = vunpack.c.h.b16 %v164
    %v667 = vunpack.c.l.b16 %v165
    %v668 = vunpack.c.h.b16 %v165
    %v669 = vunpack.c.l.b16 %v166
    %v670 = vunpack.c.h.b16 %v166
    %v671 = vunpack.c.l.b16 %v167
    %v672 = vunpack.c.h.b16 %v167
    %v673 = vunpack.c.l.b16 %v168
    %v674 = vunpack.c.h.b16 %v168
    %v675 = vunpack.c.l.b16 %v169
    %v676 = vunpack.c.h.b16 %v169
    %v677 = vunpack.c.l.b16 %v170
    %v678 = vunpack.c.h.b16 %v170
    %v679 = vunpack.c.l.b16 %v171
    %v680 = vunpack.c.h.b16 %v171
    %v681 = vunpack.c.l.b16 %v172
    %v682 = vunpack.c.h.b16 %v172
    %v683 = vunpack.c.l.b16 %v173
    %v684 = vunpack.c.h.b16 %v173
    %v685 = vunpack.c.l.b16 %v174
    %v686 = vunpack.c.h.b16 %v174
    %v687 = vunpack.c.l.b16 %v175
    %v688 = vunpack.c.h.b16 %v175
    %v689 = vunpack.c.l.b16 %v176
    %v690 = vunpack.c.h.b16 %v176
    %v691 = vunpack.c.l.b16 %v177
    %v692 = vunpack.c.h.b16 %v177
    %v693 = vunpack.c.l.b16 %v178
    %v694 = vunpack.c.h.b16 %v178
    %v695 = vunpack.c.l.b16 %v179
    %v696 = vunpack.c.h.b16 %v179
    %v697 = vunpack.c.l.b16 %v180
    %v698 = vunpack.c.h.b16 %v180
    %v699 = vunpack.c.l.b16 %v181
    %v700 = vunpack.c.h.b16 %v181
    %v701 = vunpack.c.l.b16 %v182
    %v702 = vunpack.c.h.b16 %v182
    %v703 = vunpack.c.l.b16 %v183
    %v704 = vunpack.c.h.b16 %v183
    %v705 = vunpack.c.l.b16 %v184
    %v706 = vunpack.c.h.b16 %v184
    %v707 = vunpack.c.l.b16 %v185
    %v708 = vunpack.c.h.b16 %v185
    %v709 = vunpack.c.l.b16 %v186
    %v710 = vunpack.c.h.b16 %v186
    %v711 = vunpack.c.l.b16 %v187
    %v712 = vunpack.c.h.b16 %v187
    %v713 = vunpack.c.l.b16 %v188
    %v714 = vunpack.c.h.b16 %v188
    %v715 = vunpack.c.l.b16 %v189
    %v716 = vunpack.c.h.b16 %v189
    %v717 = vunpack.c.l.b16 %v190
    %v718 = vunpack.c.h.b16 %v190
    %v719 = vunpack.c.l.b16 %v191
    %v720 = vunpack.c.h.b16 %v191
    %v721 = vunpack.c.l.b16 %v192
    %v722 = vunpack.c.h.b16 %v192
    %v723 = vunpack.c.l.b16 %v193
    %v724 = vunpack.c.h.b16 %v193
    %v725 = vunpack.c.l.b16 %v194
    %v726 = vunpack.c.h.b16 %v194
    %v727 = vunpack.c.l.b16 %v195
    %v728 = vunpack.c.h.b16 %v195
    %v729 = vunpack.c.l.b16 %v196
    %v730 = vunpack.c.h.b16 %v196
    %v731 = vunpack.c.l.b16 %v197
    %v732 = vunpack.c.h.b16 %v197
    %v733 = vunpack.c.l.b16 %v198
    %v734 = vunpack.c.h.b16 %v198
    %v735 = vunpack.c.l.b16 %v199
    %v736 = vunpack.c.h.b16 %v199
    %v737 = vunpack.c.l.b16 %v200
    %v738 = vunpack.c.h.b16 %v200
    %v739 = vunpack.c.l.b16 %v201
    %v740 = vunpack.c.h.b16 %v201
    %v741 = vunpack.c.l.b16 %v202
    %v742 = vunpack.c.h.b16 %v202
    %v743 = vunpack.c.l.b16 %v203
    %v744 = vunpack.c.h.b16 %v203
    %v745 = vunpack.c.l.b16 %v204
    %v746 = vunpack.c.h.b16 %v204
    %v747 = vunpack.c.l.b16 %v205
    %v748 = vunpack.c.h.b16 %v205
    %v749 = vunpack.c.l.b16 %v206
    %v750 = vunpack.c.h.b16 %v206
    %v751 = vunpack.c.l.b16 %v207
    %v752 = vunpack.c.h.b16 %v207
    %v753 = vunpack.c.l.b16 %v208
    %v754 = vunpack.c.h.b16 %v208
    %v755 = vunpack.c.l.b16 %v209
    %v756 = vunpack.c.h.b16 %v209
    %v757 = vunpack.c.l.b16 %v210
    %v758 = vunpack.c.h.b16 %v210
    %v759 = vunpack.c.l.b16 %v211
    %v760 = vunpack.c.h.b16 %v211
    %v761 = vunpack.c.l.b16 %v212
    %v762 = vunpack.c.h.b16 %v212
    %v763 = vunpack.c.l.b16 %v213
    %v764 = vunpack.c.h.b16 %v213
    %v765 = vunpack.c.l.b16 %v214
    %v766 = vunpack.c.h.b16 %v214
    %v767 = vunpack.c.l.b16 %v215
    %v768 = vunpack.c.h.b16 %v215
    %v769 = vunpack.c.l.b16 %v216
    %v770 = vunpack.c.h.b16 %v216
    %v771 = vunpack.c.l.b16 %v217
    %v772 = vunpack.c.h.b16 %v217
    %v773 = vunpack.c.l.b16 %v218
    %v774 = vunpack.c.h.b16 %v218
    %v775 = vunpack.c.l.b16 %v219
    %v776 = vunpack.c.h.b16 %v219
    %v777 = vunpack.c.l.b16 %v220
    %v778 = vunpack.c.h.b16 %v220
    %v779 = vunpack.c.l.b16 %v221
    %v780 = vunpack.c.h.b16 %v221
    %v781 = vunpack.c.l.b16 %v222
    %v782 = vunpack.c.h.b16 %v222
    %v783 = vunpack.c.l.b16 %v223
    %v784 = vunpack.c.h.b16 %v223
    %v785 = vunpack.c.l.b16 %v224
    %v786 = vunpack.c.h.b16 %v224
    %v787 = vunpack.c.l.b16 %v225
    %v788 = vunpack.c.h.b16 %v225
    %v789 = vunpack.c.l.b16 %v226
    %v790 = vunpack.c.h.b16 %v226
    %v791 = vunpack.c.l.b16 %v227
    %v792 = vunpack.c.h.b16 %v227
    %v793 = vunpack.c.l.b16 %v228
    %v794 = vunpack.c.h.b16 %v228
    %v795 = vunpack.c.l.b16 %v229
    %v796 = vunpack.c.h.b16 %v229
    %v797 = vunpack.c.l.b16 %v230
    %v798 = vunpack.c.h.b16 %v230
    %v799 = vunpack.c.l.b16 %v231
    %v800 = vunpack.c.h.b16 %v231
    %v801 = vunpack.c.l.b16 %v232
    %v802 = vunpack.c.h.b16 %v232
    %v803 = vunpack.c.l.b16 %v233
    %v804 = vunpack.c.h.b16 %v233
    %v805 = vunpack.c.l.b16 %v234
    %v806 = vunpack.c.h.b16 %v234
    %v807 = vunpack.c.l.b16 %v235
    %v808 = vunpack.c.h.b16 %v235
    %v809 = vunpack.c.l.b16 %v236
    %v810 = vunpack.c.h.b16 %v236
    %v811 = vunpack.c.l.b16 %v237
    %v812 = vunpack.c.h.b16 %v237
    %v813 = vunpack.c.l.b16 %v238
    %v814 = vunpack.c.h.b16 %v238
    %v815 = vunpack.c.l.b16 %v239
    %v816 = vunpack.c.h.b16 %v239
    %v817 = vunpack.c.l.b16 %v240
    %v818 = vunpack.c.h.b16 %v240
    %v819 = vunpack.c.l.b16 %v241
    %v820 = vunpack.c.h.b16 %v241
    %v821 = vunpack.c.l.b16 %v242
    %v822 = vunpack.c.h.b16 %v242
    %v823 = vunpack.c.l.b16 %v243
    %v824 = vunpack.c.h.b16 %v243
    %v825 = vunpack.c.l.b16 %v244
    %v826 = vunpack.c.h.b16 %v244
    %v827 = vunpack.c.l.b16 %v245
    %v828 = vunpack.c.h.b16 %v245
    %v829 = vunpack.c.l.b16 %v246
    %v830 = vunpack.c.h.b16 %v246
    %v831 = vunpack.c.l.b16 %v247
    %v832 = vunpack.c.h.b16 %v247
    %v833 = vunpack.c.l.b16 %v248
    %v834 = vunpack.c.h.b16 %v248
    %v835 = vunpack.c.l.b16 %v249
    %v836 = vunpack.c.h.b16 %v249
    %v837 = vunpack.c.l.b16 %v250
    %v838 = vunpack.c.h.b16 %v250
    %v839 = vunpack.c.l.b16 %v251
    %v840 = vunpack.c.h.b16 %v251
    %v841 = vunpack.c.l.b16 %v252
    %v842 = vunpack.c.h.b16 %v252
    %v843 = vunpack.c.l.b16 %v253
    %v844 = vunpack.c.h.b16 %v253
    %v845 = vunpack.c.l.b16 %v254
    %v846 = vunpack.c.h.b16 %v254
    %v847 = vunpack.c.l.b16 %v255
    %v848 = vunpack.c.h.b16 %v255
    %v849 = vunpack.c.l.b16 %v256
    %v850 = vunpack.c.h.b16 %v256
    %v851 = vunpack.c.l.b16 %v257
    %v852 = vunpack.c.h.b16 %v257
    %v853 = vunpack.c.l.b16 %v258
    %v854 = vunpack.c.h.b16 %v258
    %v855 = vunpack.c.l.b16 %v259
    %v856 = vunpack.c.h.b16 %v259
    %v857 = vunpack.c.l.b16 %v260
    %v858 = vunpack.c.h.b16 %v260
    %v859 = vunpack.c.l.b16 %v261
    %v860 = vunpack.c.h.b16 %v261
    %v861 = vunpack.c.l.b16 %v262
    %v862 = vunpack.c.h.b16 %v262
    %v863 = vunpack.c.l.b16 %v263
    %v864 = vunpack.c.h.b16 %v263
    %v865 = vunpack.c.l.b16 %v264
    %v866 = vunpack.c.h.b16 %v264
    %v867 = vunpack.c.l.b16 %v265
    %v868 = vunpack.c.h.b16 %v265
    %v869 = vunpack.c.l.b16 %v266
    %v870 = vunpack.c.h.b16 %v266
    %v871 = vunpack.c.l.b16 %v267
    %v872 = vunpack.c.h.b16 %v267
    %v873 = vunpack.c.l.b16 %v268
    %v874 = vunpack.c.h.b16 %v268
    %v875 = vunpack.c.l.b16 %v269
    %v876 = vunpack.c.h.b16 %v269
    %v877 = vunpack.c.l.b16 %v270
    %v878 = vunpack.c.h.b16 %v270
    %v879 = vunpack.c.l.b16 %v271
    %v880 = vunpack.c.h.b16 %v271
    %v881 = vunpack.c.l.b16 %v272
    %v882 = vunpack.c.h.b16 %v272
    %v883 = vpack.c.b16 %v495, %v491
    %v884 = vpack.c.b16 %v496, %v492
    %v885 = vpack.c.b16 %v497, %v493
    %v886 = vpack.c.b16 %v498, %v494
    %v887 = vpack.c.b16 %v503, %v499
    %v888 = vpack.c.b16 %v504, %v500
    %v889 = vpack.c.b16 %v505, %v501
    %v890 = vpack.c.b16 %v506, %v502
    %v891 = vpack.c.b16 %v511, %v507
    %v892 = vpack.c.b16 %v512, %v508
    %v893 = vpack.c.b16 %v513, %v509
    %v894 = vpack.c.b16 %v514, %v510
    %v895 = vpack.c.b16 %v519, %v515
    %v896 = vpack.c.b16 %v520, %v516
    %v897 = vpack.c.b16 %v521, %v517
    %v898 = vpack.c.b16 %v522, %v518
    %v899 = vpack.c.b16 %v527, %v523
    %v900 = vpack.c.b16 %v528, %v524
    %v901 = vpack.c.b16 %v529, %v525
    %v902 = vpack.c.b16 %v530, %v526
    %v903 = vpack.c.b16 %v535, %v531
    %v904 = vpack.c.b16 %v536, %v532
    %v905 = vpack.c.b16 %v537, %v533
    %v906 = vpack.c.b16 %v538, %v534
    %v907 = vpack.c.b16 %v543, %v539
    %v908 = vpack.c.b16 %v544, %v540
    %v909 = vpack.c.b16 %v545, %v541
    %v910 = vpack.c.b16 %v546, %v542
    %v911 = vpack.c.b16 %v551, %v547
    %v912 = vpack.c.b16 %v552, %v548
    %v913 = vpack.c.b16 %v553, %v549
    %v914 = vpack.c.b16 %v554, %v550
    %v915 = vpack.c.b16 %v559, %v555
    %v916 = vpack.c.b16 %v560, %v556
    %v917 = vpack.c.b16 %v561, %v557
    %v918 = vpack.c.b16 %v562, %v558
    %v919 = vpack.c.b16 %v567, %v563
    %v920 = vpack.c.b16 %v568, %v564
    %v921 = vpack.c.b16 %v569, %v565
    %v922 = vpack.c.b16 %v570, %v566
    %v923 = vpack.c.b16 %v575, %v571
    %v924 = vpack.c.b16 %v576, %v572
    %v925 = vpack.c.b16 %v577, %v573
    %v926 = vpack.c.b16 %v578, %v574
    %v927 = vpack.c.b16 %v583, %v579
    %v928 = vpack.c.b16 %v584, %v580
    %v929 = vpack.c.b16 %v585, %v581
    %v930 = vpack.c.b16 %v586, %v582
    %v931 = vpack.c.b16 %v591, %v587
    %v932 = vpack.c.b16 %v592, %v588
    %v933 = vpack.c.b16 %v593, %v589
    %v934 = vpack.c.b16 %v594, %v590
    %v935 = vpack.c.b16 %v599, %v595
    %v936 = vpack.c.b16 %v600, %v596
    %v937 = vpack.c.b16 %v601, %v597
    %v938 = vpack.c.b16 %v602, %v598
    %v939 = vpack.c.b16 %v607, %v603
    %v940 = vpack.c.b16 %v608, %v604
    %v941 = vpack.c.b16 %v609, %v605
    %v942 = vpack.c.b16 %v610, %v606
    %v943 = vpack.c.b16 %v615, %v611
    %v944 = vpack.c.b16 %v616, %v612
    %v945 = vpack.c.b16 %v617, %v613
    %v946 = vpack.c.b16 %v618, %v614
    %v947 = vpack.c.b16 %v623, %v619
    %v948 = vpack.c.b16 %v624, %v620
    %v949 = vpack.c.b16 %v625, %v621
    %v950 = vpack.c.b16 %v626, %v622
    %v951 = vpack.c.b16 %v631, %v627
    %v952 = vpack.c.b16 %v632, %v628
    %v953 = vpack.c.b16 %v633, %v629
    %v954 = vpack.c.b16 %v634, %v630
    %v955 = vpack.c.b16 %v639, %v635
    %v956 = vpack.c.b16 %v640, %v636
    %v957 = vpack.c.b16 %v641, %v637
    %v958 = vpack.c.b16 %v642, %v638
    %v959 = vpack.c.b16 %v647, %v643
    %v960 = vpack.c.b16 %v648, %v644
    %v961 = vpack.c.b16 %v649, %v645
    %v962 = vpack.c.b16 %v650, %v646
    %v963 = vpack.c.b16 %v655, %v651
    %v964 = vpack.c.b16 %v656, %v652
    %v965 = vpack.c.b16 %v657, %v653
    %v966 = vpack.c.b16 %v658, %v654
    %v967 = vpack.c.b16 %v663, %v659
    %v968 = vpack.c.b16 %v664, %v660
    %v969 = vpack.c.b16 %v665, %v661
    %v970 = vpack.c.b16 %v666, %v662
    %v971 = vpack.c.b16 %v671, %v667
    %v972 = vpack.c.b16 %v672, %v668
    %v973 = vpack.c.b16 %v673, %v669
    %v974 = vpack.c.b16 %v674, %v670
    %v975 = vpack.c.b16 %v679, %v675
    %v976 = vpack.c.b16 %v680, %v676
    %v977 = vpack.c.b16 %v681, %v677
    %v978 = vpack.c.b16 %v682, %v678
    %v979 = vpack.c.b16 %v687, %v683
    %v980 = vpack.c.b16 %v688, %v684
    %v981 = vpack.c.b16 %v689, %v685
    %v982 = vpack.c.b16 %v690, %v686
    %v983 = vpack.c.b16 %v695, %v691
    %v984 = vpack.c.b16 %v696, %v692
    %v985 = vpack.c.b16 %v697, %v693
    %v986 = vpack.c.b16 %v698, %v694
    %v987 = vpack.c.b16 %v703, %v699
    %v988 = vpack.c.b16 %v704, %v700
    %v989 = vpack.c.b16 %v705, %v701
    %v990 = vpack.c.b16 %v706, %v702
    %v991 = vpack.c.b16 %v711, %v707
    %v992 = vpack.c.b16 %v712, %v708
    %v993 = vpack.c.b16 %v713, %v709
    %v994 = vpack.c.b16 %v714, %v710
    %v995 = vpack.c.b16 %v719, %v715
    %v996 = vpack.c.b16 %v720, %v716
    %v997 = vpack.c.b16 %v721, %v717
    %v998 = vpack.c.b16 %v722, %v718
    %v999 = vpack.c.b16 %v727, %v723
    %v1000 = vpack.c.b16 %v728, %v724
    %v1001 = vpack.c.b16 %v729, %v725
    %v1002 = vpack.c.b16 %v730, %v726
    %v1003 = vpack.c.b16 %v735, %v731
    %v1004 = vpack.c.b16 %v736, %v732
    %v1005 = vpack.c.b16 %v737, %v733
    %v1006 = vpack.c.b16 %v738, %v734
    %v1007 = vpack.c.b16 %v743, %v739
    %v1008 = vpack.c.b16 %v744, %v740
    %v1009 = vpack.c.b16 %v745, %v741
    %v1010 = vpack.c.b16 %v746, %v742
    %v1011 = vpack.c.b16 %v751, %v747
    %v1012 = vpack.c.b16 %v752, %v748
    %v1013 = vpack.c.b16 %v753, %v749
    %v1014 = vpack.c.b16 %v754, %v750
    %v1015 = vpack.c.b16 %v759, %v755
    %v1016 = vpack.c.b16 %v760, %v756
    %v1017 = vpack.c.b16 %v761, %v757
    %v1018 = vpack.c.b16 %v762, %v758
    %v1019 = vpack.c.b16 %v767, %v763
    %v1020 = vpack.c.b16 %v768, %v764
    %v1021 = vpack.c.b16 %v769, %v765
    %v1022 = vpack.c.b16 %v770, %v766
    %v1023 = vpack.c.b16 %v775, %v771
    %v1024 = vpack.c.b16 %v776, %v772
    %v1025 = vpack.c.b16 %v777, %v773
    %v1026 = vpack.c.b16 %v778, %v774
    %v1027 = vpack.c.b16 %v783, %v779
    %v1028 = vpack.c.b16 %v784, %v780
    %v1029 = vpack.c.b16 %v785, %v781
    %v1030 = vpack.c.b16 %v786, %v782
    %v1031 = vpack.c.b16 %v791, %v787
    %v1032 = vpack.c.b16 %v792, %v788
    %v1033 = vpack.c.b16 %v793, %v789
    %v1034 = vpack.c.b16 %v794, %v790
    %v1035 = vpack.c.b16 %v799, %v795
    %v1036 = vpack.c.b16 %v800, %v796
    %v1037 = vpack.c.b16 %v801, %v797
    %v1038 = vpack.c.b16 %v802, %v798
    %v1039 = vpack.c.b16 %v807, %v803
    %v1040 = vpack.c.b16 %v808, %v804
    %v1041 = vpack.c.b16 %v809, %v805
    %v1042 = vpack.c.b16 %v810, %v806
    %v1043 = vpack.c.b16 %v815, %v811
    %v1044 = vpack.c.b16 %v816, %v812
    %v1045 = vpack.c.b16 %v817, %v813
    %v1046 = vpack.c.b16 %v818, %v814
    %v1047 = vpack.c.b16 %v823, %v819
    %v1048 = vpack.c.b16 %v824, %v820
    %v1049 = vpack.c.b16 %v825, %v821
    %v1050 = vpack.c.b16 %v826, %v822
    %v1051 = vpack.c.b16 %v831, %v827
    %v1052 = vpack.c.b16 %v832, %v828
    %v1053 = vpack.c.b16 %v833, %v829
    %v1054 = vpack.c.b16 %v834, %v830
    %v1055 = vpack.c.b16 %v839, %v835
    %v1056 = vpack.c.b16 %v840, %v836
    %v1057 = vpack.c.b16 %v841, %v837
    %v1058 = vpack.c.b16 %v842, %v838
    %v1059 = vpack.c.b16 %v847, %v843
    %v1060 = vpack.c.b16 %v848, %v844
    %v1061 = vpack.c.b16 %v849, %v845
    %v1062 = vpack.c.b16 %v850, %v846
    %v1063 = vpack.c.b16 %v855, %v851
    %v1064 = vpack.c.b16 %v856, %v852
    %v1065 = vpack.c.b16 %v857, %v853
    %v1066 = vpack.c.b16 %v858, %v854
    %v1067 = vpack.c.b16 %v863, %v859
    %v1068 = vpack.c.b16 %v864, %v860
    %v1069 = vpack.c.b16 %v865, %v861
    %v1070 = vpack.c.b16 %v866, %v862
    %v1071 = vpack.c.b16 %v871, %v867
    %v1072 = vpack.c.b16 %v872, %v868
    %v1073 = vpack.c.b16 %v873, %v869
    %v1074 = vpack.c.b16 %v874, %v870
    %v1075 = vpack.c.b16 %v879, %v875
    %v1076 = vpack.c.b16 %v880, %v876
    %v1077 = vpack.c.b16 %v881, %v877
    %v1078 = vpack.c.b16 %v882, %v878
    %vm1275 = vcmask 130048
    %v1277 = vsel %vm1275, %v76, 0
    %1279 = vmatprep.subr.bf16.mxu0 %v884
    %1280 = vmatpush1.bf16.msra.mxu0 %v883
    %1281 = vmatprep.subr.bf16.mxu0 %v888
    %1282 = vmatpush1.bf16.msra.mxu0 %v887
    %1283 = vmatprep.subr.bf16.mxu0 %v892
    %1284 = vmatpush1.bf16.msra.mxu0 %v891
    %1285 = vmatprep.subr.bf16.mxu0 %v896
    %1286 = vmatpush1.bf16.msra.mxu0 %v895
    %1287 = vmatprep.subr.bf16.mxu0 %v900
    %1288 = vmatpush1.bf16.msra.mxu0 %v899
    %1289 = vmatprep.subr.bf16.mxu0 %v904
    %1290 = vmatpush1.bf16.msra.mxu0 %v903
    %1291 = vmatprep.subr.bf16.mxu0 %v908
    %1292 = vmatpush1.bf16.msra.mxu0 %v907
    %1293 = vmatprep.subr.bf16.mxu0 %v912
    %1294 = vmatpush1.bf16.msra.mxu0 %v911
    %1295 = vmatprep.subr.bf16.mxu0 %v916
    %1296 = vmatpush1.bf16.msra.mxu0 %v915
    %1297 = vmatprep.subr.bf16.mxu0 %v920
    %1298 = vmatpush1.bf16.msra.mxu0 %v919
    %1299 = vmatprep.subr.bf16.mxu0 %v924
    %1300 = vmatpush1.bf16.msra.mxu0 %v923
    %1301 = vmatprep.subr.bf16.mxu0 %v928
    %1302 = vmatpush1.bf16.msra.mxu0 %v927
    %1303 = vmatprep.subr.bf16.mxu0 %v932
    %1304 = vmatpush1.bf16.msra.mxu0 %v931
    %1305 = vmatprep.subr.bf16.mxu0 %v936
    %1306 = vmatpush1.bf16.msra.mxu0 %v935
    %1307 = vmatprep.subr.bf16.mxu0 %v940
    %1308 = vmatpush1.bf16.msra.mxu0 %v939
    %1309 = vmatprep.subr.bf16.mxu0 %v944
    %1310 = vmatpush1.bf16.msra.mxu0 %v943
    %1311 = vmatprep.mubr.bf16.mxu0 %v71
    %1312 = vmatmul.mubr.bf16.gmra.mrb[0].mxu0 %v70
    %v1313 = vpop.f32.mrb[0].mxu0
    %v1314 = vadd.f32 %v278, %v1313
    %v1315 = vpop.f32.mrb[0].mxu0
    %v1316 = vadd.f32 %v282, %v1315
    %v1317 = vpop.f32.mrb[0].mxu0
    %v1318 = vpop.f32.mrb[0].mxu0
    %1319 = vdwg.mxu0
    %1320 = vmatprep.subr.bf16.mxu0 %v948
    %1321 = vmatpush1.bf16.msra.mxu0 %v947
    %1322 = vmatprep.subr.bf16.mxu0 %v952
    %1323 = vmatpush1.bf16.msra.mxu0 %v951
    %1324 = vmatprep.subr.bf16.mxu0 %v956
    %1325 = vmatpush1.bf16.msra.mxu0 %v955
    %1326 = vmatprep.subr.bf16.mxu0 %v960
    %1327 = vmatpush1.bf16.msra.mxu0 %v959
    %1328 = vmatprep.subr.bf16.mxu0 %v964
    %1329 = vmatpush1.bf16.msra.mxu0 %v963
    %1330 = vmatprep.subr.bf16.mxu0 %v968
    %1331 = vmatpush1.bf16.msra.mxu0 %v967
    %1332 = vmatprep.subr.bf16.mxu0 %v972
    %1333 = vmatpush1.bf16.msra.mxu0 %v971
    %1334 = vmatprep.subr.bf16.mxu0 %v976
    %1335 = vmatpush1.bf16.msra.mxu0 %v975
    %1336 = vmatprep.subr.bf16.mxu0 %v980
    %1337 = vmatpush1.bf16.msra.mxu0 %v979
    %1338 = vmatprep.subr.bf16.mxu0 %v984
    %1339 = vmatpush1.bf16.msra.mxu0 %v983
    %1340 = vmatprep.subr.bf16.mxu0 %v988
    %1341 = vmatpush1.bf16.msra.mxu0 %v987
    %1342 = vmatprep.subr.bf16.mxu0 %v992
    %1343 = vmatpush1.bf16.msra.mxu0 %v991
    %1344 = vmatprep.subr.bf16.mxu0 %v996
    %1345 = vmatpush1.bf16.msra.mxu0 %v995
    %1346 = vmatprep.subr.bf16.mxu0 %v1000
    %1347 = vmatpush1.bf16.msra.mxu0 %v999
    %1348 = vmatprep.subr.bf16.mxu0 %v1004
    %1349 = vmatpush1.bf16.msra.mxu0 %v1003
    %1350 = vmatprep.subr.bf16.mxu0 %v1008
    %1351 = vmatpush1.bf16.msra.mxu0 %v1007
    %1352 = vmatprep.mubr.bf16.mxu0 %v73
    %1353 = vmatmul.mubr.bf16.gmra.mrb[0].mxu0 %v72
    %v1354 = vpop.f32.mrb[0].mxu0
    %v1355 = vadd.f32 %v1314, %v1354
    %v1356 = vpop.f32.mrb[0].mxu0
    %v1357 = vadd.f32 %v1316, %v1356
    %v1358 = vpop.f32.mrb[0].mxu0
    %v1359 = vpop.f32.mrb[0].mxu0
    %1360 = vdwg.mxu0
    %1361 = vmatprep.subr.bf16.mxu0 %v1012
    %1362 = vmatpush1.bf16.msra.mxu0 %v1011
    %1363 = vmatprep.subr.bf16.mxu0 %v1016
    %1364 = vmatpush1.bf16.msra.mxu0 %v1015
    %1365 = vmatprep.subr.bf16.mxu0 %v1020
    %1366 = vmatpush1.bf16.msra.mxu0 %v1019
    %1367 = vmatprep.subr.bf16.mxu0 %v1024
    %1368 = vmatpush1.bf16.msra.mxu0 %v1023
    %1369 = vmatprep.subr.bf16.mxu0 %v1028
    %1370 = vmatpush1.bf16.msra.mxu0 %v1027
    %1371 = vmatprep.subr.bf16.mxu0 %v1032
    %1372 = vmatpush1.bf16.msra.mxu0 %v1031
    %1373 = vmatprep.subr.bf16.mxu0 %v1036
    %1374 = vmatpush1.bf16.msra.mxu0 %v1035
    %1375 = vmatprep.subr.bf16.mxu0 %v1040
    %1376 = vmatpush1.bf16.msra.mxu0 %v1039
    %1377 = vmatprep.subr.bf16.mxu0 %v1044
    %1378 = vmatpush1.bf16.msra.mxu0 %v1043
    %1379 = vmatprep.subr.bf16.mxu0 %v1048
    %1380 = vmatpush1.bf16.msra.mxu0 %v1047
    %1381 = vmatprep.subr.bf16.mxu0 %v1052
    %1382 = vmatpush1.bf16.msra.mxu0 %v1051
    %1383 = vmatprep.subr.bf16.mxu0 %v1056
    %1384 = vmatpush1.bf16.msra.mxu0 %v1055
    %1385 = vmatprep.subr.bf16.mxu0 %v1060
    %1386 = vmatpush1.bf16.msra.mxu0 %v1059
    %1387 = vmatprep.subr.bf16.mxu0 %v1064
    %1388 = vmatpush1.bf16.msra.mxu0 %v1063
    %1389 = vmatprep.subr.bf16.mxu0 %v1068
    %1390 = vmatpush1.bf16.msra.mxu0 %v1067
    %1391 = vmatprep.subr.bf16.mxu0 %v1072
    %1392 = vmatpush1.bf16.msra.mxu0 %v1071
    %1393 = vmatprep.mubr.bf16.mxu0 %v75
    %1394 = vmatmul.mubr.bf16.gmra.mrb[0].mxu0 %v74
    %v1395 = vpop.f32.mrb[0].mxu0
    %v1396 = vadd.f32 %v1355, %v1395
    %v1397 = vpop.f32.mrb[0].mxu0
    %v1398 = vadd.f32 %v1357, %v1397
    %v1399 = vpop.f32.mrb[0].mxu0
    %v1400 = vpop.f32.mrb[0].mxu0
    %1401 = vdwg.mxu0
    %1402 = vmatprep.subr.bf16.mxu0 %v1076
    %1403 = vmatpush1.bf16.msra.mxu0 %v1075
    %1404 = vmatprep.subr.bf16.mxu0 0
    %1405 = vmatpush1.bf16.msra.mxu0 0
    %1406 = vmatprep.subr.bf16.mxu0 0
    %1407 = vmatpush1.bf16.msra.mxu0 0
    %1408 = vmatprep.subr.bf16.mxu0 0
    %1409 = vmatpush1.bf16.msra.mxu0 0
    %1410 = vmatprep.subr.bf16.mxu0 0
    %1411 = vmatpush1.bf16.msra.mxu0 0
    %1412 = vmatprep.subr.bf16.mxu0 0
    %1413 = vmatpush1.bf16.msra.mxu0 0
    %1414 = vmatprep.subr.bf16.mxu0 0
    %1415 = vmatpush1.bf16.msra.mxu0 0
    %1416 = vmatprep.subr.bf16.mxu0 0
    %1417 = vmatpush1.bf16.msra.mxu0 0
    %1418 = vmatprep.subr.bf16.mxu0 0
    %1419 = vmatpush1.bf16.msra.mxu0 0
    %1420 = vmatprep.subr.bf16.mxu0 0
    %1421 = vmatpush1.bf16.msra.mxu0 0
    %1422 = vmatprep.subr.bf16.mxu0 0
    %1423 = vmatpush1.bf16.msra.mxu0 0
    %1424 = vmatprep.subr.bf16.mxu0 0
    %1425 = vmatpush1.bf16.msra.mxu0 0
    %1426 = vmatprep.subr.bf16.mxu0 0
    %1427 = vmatpush1.bf16.msra.mxu0 0
    %1428 = vmatprep.subr.bf16.mxu0 0
    %1429 = vmatpush1.bf16.msra.mxu0 0
    %1430 = vmatprep.subr.bf16.mxu0 0
    %1431 = vmatpush1.bf16.msra.mxu0 0
    %1432 = vmatprep.subr.bf16.mxu0 0
    %1433 = vmatpush1.bf16.msra.mxu0 0
    %1434 = vmatprep.mubr.bf16.mxu0 0
    %1435 = vmatmul.mubr.bf16.gmra.mrb[0].mxu0 %v1277
    %v1436 = vpop.f32.mrb[0].mxu0
    %v1437 = vadd.f32 %v1396, %v1436
    %v1438 = vpop.f32.mrb[0].mxu0
    %v1439 = vadd.f32 %v1398, %v1438
    %v1440 = vpop.f32.mrb[0].mxu0
    %v1441 = vpop.f32.mrb[0].mxu0
    %1442 = vdwg.mxu0
    %1443 = vmatprep.subr.bf16.mxu0 %v886
    %1444 = vmatpush1.bf16.msra.mxu0 %v885
    %1445 = vmatprep.subr.bf16.mxu0 %v890
    %1446 = vmatpush1.bf16.msra.mxu0 %v889
    %1447 = vmatprep.subr.bf16.mxu0 %v894
    %1448 = vmatpush1.bf16.msra.mxu0 %v893
    %1449 = vmatprep.subr.bf16.mxu0 %v898
    %1450 = vmatpush1.bf16.msra.mxu0 %v897
    %1451 = vmatprep.subr.bf16.mxu0 %v902
    %1452 = vmatpush1.bf16.msra.mxu0 %v901
    %1453 = vmatprep.subr.bf16.mxu0 %v906
    %1454 = vmatpush1.bf16.msra.mxu0 %v905
    %1455 = vmatprep.subr.bf16.mxu0 %v910
    %1456 = vmatpush1.bf16.msra.mxu0 %v909
    %1457 = vmatprep.subr.bf16.mxu0 %v914
    %1458 = vmatpush1.bf16.msra.mxu0 %v913
    %1459 = vmatprep.subr.bf16.mxu0 %v918
    %1460 = vmatpush1.bf16.msra.mxu0 %v917
    %1461 = vmatprep.subr.bf16.mxu0 %v922
    %1462 = vmatpush1.bf16.msra.mxu0 %v921
    %1463 = vmatprep.subr.bf16.mxu0 %v926
    %1464 = vmatpush1.bf16.msra.mxu0 %v925
    %1465 = vmatprep.subr.bf16.mxu0 %v930
    %1466 = vmatpush1.bf16.msra.mxu0 %v929
    %1467 = vmatprep.subr.bf16.mxu0 %v934
    %1468 = vmatpush1.bf16.msra.mxu0 %v933
    %1469 = vmatprep.subr.bf16.mxu0 %v938
    %1470 = vmatpush1.bf16.msra.mxu0 %v937
    %1471 = vmatprep.subr.bf16.mxu0 %v942
    %1472 = vmatpush1.bf16.msra.mxu0 %v941
    %1473 = vmatprep.subr.bf16.mxu0 %v946
    %1474 = vmatpush1.bf16.msra.mxu0 %v945
    %1475 = vmatprep.mubr.bf16.mxu0 %v71
    %1476 = vmatmul.mubr.bf16.gmra.mrb[0].mxu0 %v70
    %v1477 = vpop.f32.mrb[0].mxu0
    %v1478 = vadd.f32 %v286, %v1477
    %v1479 = vpop.f32.mrb[0].mxu0
    %v1480 = vadd.f32 %v290, %v1479
    %v1481 = vpop.f32.mrb[0].mxu0
    %v1482 = vpop.f32.mrb[0].mxu0
    %1483 = vdwg.mxu0
    %1484 = vmatprep.subr.bf16.mxu0 %v950
    %1485 = vmatpush1.bf16.msra.mxu0 %v949
    %1486 = vmatprep.subr.bf16.mxu0 %v954
    %1487 = vmatpush1.bf16.msra.mxu0 %v953
    %1488 = vmatprep.subr.bf16.mxu0 %v958
    %1489 = vmatpush1.bf16.msra.mxu0 %v957
    %1490 = vmatprep.subr.bf16.mxu0 %v962
    %1491 = vmatpush1.bf16.msra.mxu0 %v961
    %1492 = vmatprep.subr.bf16.mxu0 %v966
    %1493 = vmatpush1.bf16.msra.mxu0 %v965
    %1494 = vmatprep.subr.bf16.mxu0 %v970
    %1495 = vmatpush1.bf16.msra.mxu0 %v969
    %1496 = vmatprep.subr.bf16.mxu0 %v974
    %1497 = vmatpush1.bf16.msra.mxu0 %v973
    %1498 = vmatprep.subr.bf16.mxu0 %v978
    %1499 = vmatpush1.bf16.msra.mxu0 %v977
    %1500 = vmatprep.subr.bf16.mxu0 %v982
    %1501 = vmatpush1.bf16.msra.mxu0 %v981
    %1502 = vmatprep.subr.bf16.mxu0 %v986
    %1503 = vmatpush1.bf16.msra.mxu0 %v985
    %1504 = vmatprep.subr.bf16.mxu0 %v990
    %1505 = vmatpush1.bf16.msra.mxu0 %v989
    %1506 = vmatprep.subr.bf16.mxu0 %v994
    %1507 = vmatpush1.bf16.msra.mxu0 %v993
    %1508 = vmatprep.subr.bf16.mxu0 %v998
    %1509 = vmatpush1.bf16.msra.mxu0 %v997
    %1510 = vmatprep.subr.bf16.mxu0 %v1002
    %1511 = vmatpush1.bf16.msra.mxu0 %v1001
    %1512 = vmatprep.subr.bf16.mxu0 %v1006
    %1513 = vmatpush1.bf16.msra.mxu0 %v1005
    %1514 = vmatprep.subr.bf16.mxu0 %v1010
    %1515 = vmatpush1.bf16.msra.mxu0 %v1009
    %1516 = vmatprep.mubr.bf16.mxu0 %v73
    %1517 = vmatmul.mubr.bf16.gmra.mrb[0].mxu0 %v72
    %v1518 = vpop.f32.mrb[0].mxu0
    %v1519 = vadd.f32 %v1478, %v1518
    %v1520 = vpop.f32.mrb[0].mxu0
    %v1521 = vadd.f32 %v1480, %v1520
    %v1522 = vpop.f32.mrb[0].mxu0
    %v1523 = vpop.f32.mrb[0].mxu0
    %1524 = vdwg.mxu0
    %1525 = vmatprep.subr.bf16.mxu0 %v1014
    %1526 = vmatpush1.bf16.msra.mxu0 %v1013
    %1527 = vmatprep.subr.bf16.mxu0 %v1018
    %1528 = vmatpush1.bf16.msra.mxu0 %v1017
    %1529 = vmatprep.subr.bf16.mxu0 %v1022
    %1530 = vmatpush1.bf16.msra.mxu0 %v1021
    %1531 = vmatprep.subr.bf16.mxu0 %v1026
    %1532 = vmatpush1.bf16.msra.mxu0 %v1025
    %1533 = vmatprep.subr.bf16.mxu0 %v1030
    %1534 = vmatpush1.bf16.msra.mxu0 %v1029
    %1535 = vmatprep.subr.bf16.mxu0 %v1034
    %1536 = vmatpush1.bf16.msra.mxu0 %v1033
    %1537 = vmatprep.subr.bf16.mxu0 %v1038
    %1538 = vmatpush1.bf16.msra.mxu0 %v1037
    %1539 = vmatprep.subr.bf16.mxu0 %v1042
    %1540 = vmatpush1.bf16.msra.mxu0 %v1041
    %1541 = vmatprep.subr.bf16.mxu0 %v1046
    %1542 = vmatpush1.bf16.msra.mxu0 %v1045
    %1543 = vmatprep.subr.bf16.mxu0 %v1050
    %1544 = vmatpush1.bf16.msra.mxu0 %v1049
    %1545 = vmatprep.subr.bf16.mxu0 %v1054
    %1546 = vmatpush1.bf16.msra.mxu0 %v1053
    %1547 = vmatprep.subr.bf16.mxu0 %v1058
    %1548 = vmatpush1.bf16.msra.mxu0 %v1057
    %1549 = vmatprep.subr.bf16.mxu0 %v1062
    %1550 = vmatpush1.bf16.msra.mxu0 %v1061
    %1551 = vmatprep.subr.bf16.mxu0 %v1066
    %1552 = vmatpush1.bf16.msra.mxu0 %v1065
    %1553 = vmatprep.subr.bf16.mxu0 %v1070
    %1554 = vmatpush1.bf16.msra.mxu0 %v1069
    %1555 = vmatprep.subr.bf16.mxu0 %v1074
    %1556 = vmatpush1.bf16.msra.mxu0 %v1073
    %1557 = vmatprep.mubr.bf16.mxu0 %v75
    %1558 = vmatmul.mubr.bf16.gmra.mrb[0].mxu0 %v74
    %v1559 = vpop.f32.mrb[0].mxu0
    %v1560 = vadd.f32 %v1519, %v1559
    %v1561 = vpop.f32.mrb[0].mxu0
    %v1562 = vadd.f32 %v1521, %v1561
    %v1563 = vpop.f32.mrb[0].mxu0
    %v1564 = vpop.f32.mrb[0].mxu0
    %1565 = vdwg.mxu0
    %1566 = vmatprep.subr.bf16.mxu0 %v1078
    %1567 = vmatpush1.bf16.msra.mxu0 %v1077
    %1568 = vmatprep.subr.bf16.mxu0 0
    %1569 = vmatpush1.bf16.msra.mxu0 0
    %1570 = vmatprep.subr.bf16.mxu0 0
    %1571 = vmatpush1.bf16.msra.mxu0 0
    %1572 = vmatprep.subr.bf16.mxu0 0
    %1573 = vmatpush1.bf16.msra.mxu0 0
    %1574 = vmatprep.subr.bf16.mxu0 0
    %1575 = vmatpush1.bf16.msra.mxu0 0
    %1576 = vmatprep.subr.bf16.mxu0 0
    %1577 = vmatpush1.bf16.msra.mxu0 0
    %1578 = vmatprep.subr.bf16.mxu0 0
    %1579 = vmatpush1.bf16.msra.mxu0 0
    %1580 = vmatprep.subr.bf16.mxu0 0
    %1581 = vmatpush1.bf16.msra.mxu0 0
    %1582 = vmatprep.subr.bf16.mxu0 0
    %1583 = vmatpush1.bf16.msra.mxu0 0
    %1584 = vmatprep.subr.bf16.mxu0 0
    %1585 = vmatpush1.bf16.msra.mxu0 0
    %1586 = vmatprep.subr.bf16.mxu0 0
    %1587 = vmatpush1.bf16.msra.mxu0 0
    %1588 = vmatprep.subr.bf16.mxu0 0
    %1589 = vmatpush1.bf16.msra.mxu0 0
    %1590 = vmatprep.subr.bf16.mxu0 0
    %1591 = vmatpush1.bf16.msra.mxu0 0
    %1592 = vmatprep.subr.bf16.mxu0 0
    %1593 = vmatpush1.bf16.msra.mxu0 0
    %1594 = vmatprep.subr.bf16.mxu0 0
    %1595 = vmatpush1.bf16.msra.mxu0 0
    %1596 = vmatprep.subr.bf16.mxu0 0
    %1597 = vmatpush1.bf16.msra.mxu0 0
    %1598 = vmatprep.mubr.bf16.mxu0 0
    %1599 = vmatmul.mubr.bf16.gmra.mrb[0].mxu0 %v1277
    %v1600 = vpop.f32.mrb[0].mxu0
    %v1601 = vadd.f32 %v1560, %v1600
    %v1602 = vpop.f32.mrb[0].mxu0
    %v1603 = vadd.f32 %v1562, %v1602
    %v1604 = vpop.f32.mrb[0].mxu0
    %v1605 = vpop.f32.mrb[0].mxu0
    %1606 = vdwg.mxu0
    %v1607 = vmax.f32 %v1437, 0.0
    %v1608 = vmax.f32 %v1439, 0.0
    %v1609 = vmax.f32 %v1601, 0.0
    %v1610 = vmax.f32 %v1603, 0.0
    %v1611 = vpack.c.bf16 %v1607, %v1607
    %v1612 = vpack.c.bf16 %v1608, %v1608
    %v1613 = vpack.c.bf16 %v1609, %v1609
    %v1614 = vpack.c.bf16 %v1610, %v1610
    %v1615 = vld [vmem:[%s4] sm:$0xff]
    %v1616 = vld [vmem:[%s4 + $0x8] sm:$0xff]
    %v1617 = vld [vmem:[%s4 + $0x10] sm:$0xff]
    %v1618 = vld [vmem:[%s4 + $0x18] sm:$0xff]
    %v1619 = vld [vmem:[%s4 + $0x20] sm:$0xff]
    %v1620 = vld [vmem:[%s4 + $0x28] sm:$0xff]
    %v1621 = vld [vmem:[%s4 + $0x30] sm:$0xff]
    %v1622 = vld [vmem:[%s4 + $0x38] sm:$0xff]
    %v1623 = vld [vmem:[%s4 + $0x40] sm:$0xff]
    %v1624 = vld [vmem:[%s4 + $0x48] sm:$0xff]
    %v1625 = vld [vmem:[%s4 + $0x50] sm:$0xff]
    %v1626 = vld [vmem:[%s4 + $0x58] sm:$0xff]
    %v1627 = vld [vmem:[%s4 + $0x60] sm:$0xff]
    %v1628 = vld [vmem:[%s4 + $0x68] sm:$0xff]
    %v1629 = vld [vmem:[%s4 + $0x70] sm:$0xff]
    %v1630 = vld [vmem:[%s4 + $0x78] sm:$0xff]
    %v1631 = vld [vmem:[%s4 + $0x80] sm:$0xff]
    %v1632 = vld [vmem:[%s4 + $0x88] sm:$0xff]
    %v1633 = vld [vmem:[%s4 + $0x90] sm:$0xff]
    %v1634 = vld [vmem:[%s4 + $0x98] sm:$0xff]
    %v1635 = vld [vmem:[%s4 + $0xa0] sm:$0xff]
    %v1636 = vld [vmem:[%s4 + $0xa8] sm:$0xff]
    %v1637 = vld [vmem:[%s4 + $0xb0] sm:$0xff]
    %v1638 = vld [vmem:[%s4 + $0xb8] sm:$0xff]
    %v1639 = vld [vmem:[%s4 + $0xc0] sm:$0xff]
    %v1640 = vld [vmem:[%s4 + $0xc8] sm:$0xff]
    %v1641 = vld [vmem:[%s4 + $0xd0] sm:$0xff]
    %v1642 = vld [vmem:[%s4 + $0xd8] sm:$0xff]
    %v1643 = vld [vmem:[%s4 + $0xe0] sm:$0xff]
    %v1644 = vld [vmem:[%s4 + $0xe8] sm:$0xff]
    %v1645 = vld [vmem:[%s4 + $0xf0] sm:$0xff]
    %v1646 = vld [vmem:[%s4 + $0xf8] sm:$0xff]
    %v1647 = vld [vmem:[%s4 + $0x100] sm:$0xff]
    %v1648 = vld [vmem:[%s4 + $0x108] sm:$0xff]
    %v1649 = vld [vmem:[%s4 + $0x110] sm:$0xff]
    %v1650 = vld [vmem:[%s4 + $0x118] sm:$0xff]
    %v1651 = vld [vmem:[%s4 + $0x120] sm:$0xff]
    %v1652 = vld [vmem:[%s4 + $0x128] sm:$0xff]
    %v1653 = vld [vmem:[%s4 + $0x130] sm:$0xff]
    %v1654 = vld [vmem:[%s4 + $0x138] sm:$0xff]
    %v1655 = vld [vmem:[%s4 + $0x140] sm:$0xff]
    %v1656 = vld [vmem:[%s4 + $0x148] sm:$0xff]
    %v1657 = vld [vmem:[%s4 + $0x150] sm:$0xff]
    %v1658 = vld [vmem:[%s4 + $0x158] sm:$0xff]
    %v1659 = vld [vmem:[%s4 + $0x160] sm:$0xff]
    %v1660 = vld [vmem:[%s4 + $0x168] sm:$0xff]
    %v1661 = vld [vmem:[%s4 + $0x170] sm:$0xff]
    %v1662 = vld [vmem:[%s4 + $0x178] sm:$0xff]
    %v1663 = vld [vmem:[%s4 + $0x180] sm:$0xff]
    %v1664 = vld [vmem:[%s4 + $0x188] sm:$0xff]
    %v1665 = vld [vmem:[%s4 + $0x190] sm:$0xff]
    %v1666 = vld [vmem:[%s4 + $0x198] sm:$0xff]
    %v1667 = vld [vmem:[%s4 + $0x1a0] sm:$0xff]
    %v1668 = vld [vmem:[%s4 + $0x1a8] sm:$0xff]
    %v1669 = vld [vmem:[%s4 + $0x1b0] sm:$0xff]
    %v1670 = vld [vmem:[%s4 + $0x1b8] sm:$0xff]
    %v1671 = vld [vmem:[%s4 + $0x1c0] sm:$0xff]
    %v1672 = vld [vmem:[%s4 + $0x1c8] sm:$0xff]
    %v1673 = vld [vmem:[%s4 + $0x1d0] sm:$0xff]
    %v1674 = vld [vmem:[%s4 + $0x1d8] sm:$0xff]
    %v1675 = vld [vmem:[%s4 + $0x1e0] sm:$0xff]
    %v1676 = vld [vmem:[%s4 + $0x1e8] sm:$0xff]
    %v1677 = vld [vmem:[%s4 + $0x1f0] sm:$0xff]
    %v1678 = vld [vmem:[%s4 + $0x1f8] sm:$0xff]
    %v1679 = vld [vmem:[%s5] sm:$0x3]
    %v1681 = vlaneseq
    %v1682 = vshrl.u32 %v1681, 7
    %v1683 = vsub.s32 0, %v1682
    %v1684 = vrot.slane %v1679, %v1683
    %v1685 = vlaneseq
    %v1686 = vshrl.u32 %v1685, 7
    %v1687 = vsub.s32 1, %v1686
    %v1688 = vrot.slane %v1679, %v1687
    %v1755 = vunpack.c.l.b16 %v1615
    %v1756 = vunpack.c.h.b16 %v1615
    %v1757 = vunpack.c.l.b16 %v1616
    %v1758 = vunpack.c.h.b16 %v1616
    %v1759 = vunpack.c.l.b16 %v1617
    %v1760 = vunpack.c.h.b16 %v1617
    %v1761 = vunpack.c.l.b16 %v1618
    %v1762 = vunpack.c.h.b16 %v1618
    %v1763 = vunpack.c.l.b16 %v1619
    %v1764 = vunpack.c.h.b16 %v1619
    %v1765 = vunpack.c.l.b16 %v1620
    %v1766 = vunpack.c.h.b16 %v1620
    %v1767 = vunpack.c.l.b16 %v1621
    %v1768 = vunpack.c.h.b16 %v1621
    %v1769 = vunpack.c.l.b16 %v1622
    %v1770 = vunpack.c.h.b16 %v1622
    %v1771 = vunpack.c.l.b16 %v1623
    %v1772 = vunpack.c.h.b16 %v1623
    %v1773 = vunpack.c.l.b16 %v1624
    %v1774 = vunpack.c.h.b16 %v1624
    %v1775 = vunpack.c.l.b16 %v1625
    %v1776 = vunpack.c.h.b16 %v1625
    %v1777 = vunpack.c.l.b16 %v1626
    %v1778 = vunpack.c.h.b16 %v1626
    %v1779 = vunpack.c.l.b16 %v1627
    %v1780 = vunpack.c.h.b16 %v1627
    %v1781 = vunpack.c.l.b16 %v1628
    %v1782 = vunpack.c.h.b16 %v1628
    %v1783 = vunpack.c.l.b16 %v1629
    %v1784 = vunpack.c.h.b16 %v1629
    %v1785 = vunpack.c.l.b16 %v1630
    %v1786 = vunpack.c.h.b16 %v1630
    %v1787 = vunpack.c.l.b16 %v1631
    %v1788 = vunpack.c.h.b16 %v1631
    %v1789 = vunpack.c.l.b16 %v1632
    %v1790 = vunpack.c.h.b16 %v1632
    %v1791 = vunpack.c.l.b16 %v1633
    %v1792 = vunpack.c.h.b16 %v1633
    %v1793 = vunpack.c.l.b16 %v1634
    %v1794 = vunpack.c.h.b16 %v1634
    %v1795 = vunpack.c.l.b16 %v1635
    %v1796 = vunpack.c.h.b16 %v1635
    %v1797 = vunpack.c.l.b16 %v1636
    %v1798 = vunpack.c.h.b16 %v1636
    %v1799 = vunpack.c.l.b16 %v1637
    %v1800 = vunpack.c.h.b16 %v1637
    %v1801 = vunpack.c.l.b16 %v1638
    %v1802 = vunpack.c.h.b16 %v1638
    %v1803 = vunpack.c.l.b16 %v1639
    %v1804 = vunpack.c.h.b16 %v1639
    %v1805 = vunpack.c.l.b16 %v1640
    %v1806 = vunpack.c.h.b16 %v1640
    %v1807 = vunpack.c.l.b16 %v1641
    %v1808 = vunpack.c.h.b16 %v1641
    %v1809 = vunpack.c.l.b16 %v1642
    %v1810 = vunpack.c.h.b16 %v1642
    %v1811 = vunpack.c.l.b16 %v1643
    %v1812 = vunpack.c.h.b16 %v1643
    %v1813 = vunpack.c.l.b16 %v1644
    %v1814 = vunpack.c.h.b16 %v1644
    %v1815 = vunpack.c.l.b16 %v1645
    %v1816 = vunpack.c.h.b16 %v1645
    %v1817 = vunpack.c.l.b16 %v1646
    %v1818 = vunpack.c.h.b16 %v1646
    %v1819 = vunpack.c.l.b16 %v1647
    %v1820 = vunpack.c.h.b16 %v1647
    %v1821 = vunpack.c.l.b16 %v1648
    %v1822 = vunpack.c.h.b16 %v1648
    %v1823 = vunpack.c.l.b16 %v1649
    %v1824 = vunpack.c.h.b16 %v1649
    %v1825 = vunpack.c.l.b16 %v1650
    %v1826 = vunpack.c.h.b16 %v1650
    %v1827 = vunpack.c.l.b16 %v1651
    %v1828 = vunpack.c.h.b16 %v1651
    %v1829 = vunpack.c.l.b16 %v1652
    %v1830 = vunpack.c.h.b16 %v1652
    %v1831 = vunpack.c.l.b16 %v1653
    %v1832 = vunpack.c.h.b16 %v1653
    %v1833 = vunpack.c.l.b16 %v1654
    %v1834 = vunpack.c.h.b16 %v1654
    %v1835 = vunpack.c.l.b16 %v1655
    %v1836 = vunpack.c.h.b16 %v1655
    %v1837 = vunpack.c.l.b16 %v1656
    %v1838 = vunpack.c.h.b16 %v1656
    %v1839 = vunpack.c.l.b16 %v1657
    %v1840 = vunpack.c.h.b16 %v1657
    %v1841 = vunpack.c.l.b16 %v1658
    %v1842 = vunpack.c.h.b16 %v1658
    %v1843 = vunpack.c.l.b16 %v1659
    %v1844 = vunpack.c.h.b16 %v1659
    %v1845 = vunpack.c.l.b16 %v1660
    %v1846 = vunpack.c.h.b16 %v1660
    %v1847 = vunpack.c.l.b16 %v1661
    %v1848 = vunpack.c.h.b16 %v1661
    %v1849 = vunpack.c.l.b16 %v1662
    %v1850 = vunpack.c.h.b16 %v1662
    %v1851 = vunpack.c.l.b16 %v1663
    %v1852 = vunpack.c.h.b16 %v1663
    %v1853 = vunpack.c.l.b16 %v1664
    %v1854 = vunpack.c.h.b16 %v1664
    %v1855 = vunpack.c.l.b16 %v1665
    %v1856 = vunpack.c.h.b16 %v1665
    %v1857 = vunpack.c.l.b16 %v1666
    %v1858 = vunpack.c.h.b16 %v1666
    %v1859 = vunpack.c.l.b16 %v1667
    %v1860 = vunpack.c.h.b16 %v1667
    %v1861 = vunpack.c.l.b16 %v1668
    %v1862 = vunpack.c.h.b16 %v1668
    %v1863 = vunpack.c.l.b16 %v1669
    %v1864 = vunpack.c.h.b16 %v1669
    %v1865 = vunpack.c.l.b16 %v1670
    %v1866 = vunpack.c.h.b16 %v1670
    %v1867 = vunpack.c.l.b16 %v1671
    %v1868 = vunpack.c.h.b16 %v1671
    %v1869 = vunpack.c.l.b16 %v1672
    %v1870 = vunpack.c.h.b16 %v1672
    %v1871 = vunpack.c.l.b16 %v1673
    %v1872 = vunpack.c.h.b16 %v1673
    %v1873 = vunpack.c.l.b16 %v1674
    %v1874 = vunpack.c.h.b16 %v1674
    %v1875 = vunpack.c.l.b16 %v1675
    %v1876 = vunpack.c.h.b16 %v1675
    %v1877 = vunpack.c.l.b16 %v1676
    %v1878 = vunpack.c.h.b16 %v1676
    %v1879 = vunpack.c.l.b16 %v1677
    %v1880 = vunpack.c.h.b16 %v1677
    %v1881 = vunpack.c.l.b16 %v1678
    %v1882 = vunpack.c.h.b16 %v1678
    %v1883 = vpack.c.b16 %v1757, %v1755
    %v1884 = vpack.c.b16 %v1758, %v1756
    %v1885 = vpack.c.b16 %v1761, %v1759
    %v1886 = vpack.c.b16 %v1762, %v1760
    %v1887 = vpack.c.b16 %v1765, %v1763
    %v1888 = vpack.c.b16 %v1766, %v1764
    %v1889 = vpack.c.b16 %v1769, %v1767
    %v1890 = vpack.c.b16 %v1770, %v1768
    %v1891 = vpack.c.b16 %v1773, %v1771
    %v1892 = vpack.c.b16 %v1774, %v1772
    %v1893 = vpack.c.b16 %v1777, %v1775
    %v1894 = vpack.c.b16 %v1778, %v1776
    %v1895 = vpack.c.b16 %v1781, %v1779
    %v1896 = vpack.c.b16 %v1782, %v1780
    %v1897 = vpack.c.b16 %v1785, %v1783
    %v1898 = vpack.c.b16 %v1786, %v1784
    %v1899 = vpack.c.b16 %v1789, %v1787
    %v1900 = vpack.c.b16 %v1790, %v1788
    %v1901 = vpack.c.b16 %v1793, %v1791
    %v1902 = vpack.c.b16 %v1794, %v1792
    %v1903 = vpack.c.b16 %v1797, %v1795
    %v1904 = vpack.c.b16 %v1798, %v1796
    %v1905 = vpack.c.b16 %v1801, %v1799
    %v1906 = vpack.c.b16 %v1802, %v1800
    %v1907 = vpack.c.b16 %v1805, %v1803
    %v1908 = vpack.c.b16 %v1806, %v1804
    %v1909 = vpack.c.b16 %v1809, %v1807
    %v1910 = vpack.c.b16 %v1810, %v1808
    %v1911 = vpack.c.b16 %v1813, %v1811
    %v1912 = vpack.c.b16 %v1814, %v1812
    %v1913 = vpack.c.b16 %v1817, %v1815
    %v1914 = vpack.c.b16 %v1818, %v1816
    %v1915 = vpack.c.b16 %v1821, %v1819
    %v1916 = vpack.c.b16 %v1822, %v1820
    %v1917 = vpack.c.b16 %v1825, %v1823
    %v1918 = vpack.c.b16 %v1826, %v1824
    %v1919 = vpack.c.b16 %v1829, %v1827
    %v1920 = vpack.c.b16 %v1830, %v1828
    %v1921 = vpack.c.b16 %v1833, %v1831
    %v1922 = vpack.c.b16 %v1834, %v1832
    %v1923 = vpack.c.b16 %v1837, %v1835
    %v1924 = vpack.c.b16 %v1838, %v1836
    %v1925 = vpack.c.b16 %v1841, %v1839
    %v1926 = vpack.c.b16 %v1842, %v1840
    %v1927 = vpack.c.b16 %v1845, %v1843
    %v1928 = vpack.c.b16 %v1846, %v1844
    %v1929 = vpack.c.b16 %v1849, %v1847
    %v1930 = vpack.c.b16 %v1850, %v1848
    %v1931 = vpack.c.b16 %v1853, %v1851
    %v1932 = vpack.c.b16 %v1854, %v1852
    %v1933 = vpack.c.b16 %v1857, %v1855
    %v1934 = vpack.c.b16 %v1858, %v1856
    %v1935 = vpack.c.b16 %v1861, %v1859
    %v1936 = vpack.c.b16 %v1862, %v1860
    %v1937 = vpack.c.b16 %v1865, %v1863
    %v1938 = vpack.c.b16 %v1866, %v1864
    %v1939 = vpack.c.b16 %v1869, %v1867
    %v1940 = vpack.c.b16 %v1870, %v1868
    %v1941 = vpack.c.b16 %v1873, %v1871
    %v1942 = vpack.c.b16 %v1874, %v1872
    %v1943 = vpack.c.b16 %v1877, %v1875
    %v1944 = vpack.c.b16 %v1878, %v1876
    %v1945 = vpack.c.b16 %v1881, %v1879
    %v1946 = vpack.c.b16 %v1882, %v1880
    %2011 = vmatprep.subr.bf16.mxu0 %v1884
    %2012 = vmatpush1.bf16.msra.mxu0 %v1883
    %2013 = vmatprep.subr.bf16.mxu0 %v1886
    %2014 = vmatpush1.bf16.msra.mxu0 %v1885
    %2015 = vmatprep.subr.bf16.mxu0 %v1888
    %2016 = vmatpush1.bf16.msra.mxu0 %v1887
    %2017 = vmatprep.subr.bf16.mxu0 %v1890
    %2018 = vmatpush1.bf16.msra.mxu0 %v1889
    %2019 = vmatprep.subr.bf16.mxu0 %v1892
    %2020 = vmatpush1.bf16.msra.mxu0 %v1891
    %2021 = vmatprep.subr.bf16.mxu0 %v1894
    %2022 = vmatpush1.bf16.msra.mxu0 %v1893
    %2023 = vmatprep.subr.bf16.mxu0 %v1896
    %2024 = vmatpush1.bf16.msra.mxu0 %v1895
    %2025 = vmatprep.subr.bf16.mxu0 %v1898
    %2026 = vmatpush1.bf16.msra.mxu0 %v1897
    %2027 = vmatprep.subr.bf16.mxu0 %v1900
    %2028 = vmatpush1.bf16.msra.mxu0 %v1899
    %2029 = vmatprep.subr.bf16.mxu0 %v1902
    %2030 = vmatpush1.bf16.msra.mxu0 %v1901
    %2031 = vmatprep.subr.bf16.mxu0 %v1904
    %2032 = vmatpush1.bf16.msra.mxu0 %v1903
    %2033 = vmatprep.subr.bf16.mxu0 %v1906
    %2034 = vmatpush1.bf16.msra.mxu0 %v1905
    %2035 = vmatprep.subr.bf16.mxu0 %v1908
    %2036 = vmatpush1.bf16.msra.mxu0 %v1907
    %2037 = vmatprep.subr.bf16.mxu0 %v1910
    %2038 = vmatpush1.bf16.msra.mxu0 %v1909
    %2039 = vmatprep.subr.bf16.mxu0 %v1912
    %2040 = vmatpush1.bf16.msra.mxu0 %v1911
    %2041 = vmatprep.subr.bf16.mxu0 %v1914
    %2042 = vmatpush1.bf16.msra.mxu0 %v1913
    %2043 = vmatprep.mubr.bf16.mxu0 %v1612
    %2044 = vmatmul.mubr.bf16.gmra.mrb[0].mxu0 %v1611
    %v2045 = vpop.f32.mrb[0].mxu0
    %v2046 = vadd.f32 %v1684, %v2045
    %v2047 = vpop.f32.mrb[0].mxu0
    %v2048 = vadd.f32 %v1688, %v2047
    %v2049 = vpop.f32.mrb[0].mxu0
    %v2050 = vpop.f32.mrb[0].mxu0
    %2051 = vdwg.mxu0
    %2052 = vmatprep.subr.bf16.mxu0 %v1916
    %2053 = vmatpush1.bf16.msra.mxu0 %v1915
    %2054 = vmatprep.subr.bf16.mxu0 %v1918
    %2055 = vmatpush1.bf16.msra.mxu0 %v1917
    %2056 = vmatprep.subr.bf16.mxu0 %v1920
    %2057 = vmatpush1.bf16.msra.mxu0 %v1919
    %2058 = vmatprep.subr.bf16.mxu0 %v1922
    %2059 = vmatpush1.bf16.msra.mxu0 %v1921
    %2060 = vmatprep.subr.bf16.mxu0 %v1924
    %2061 = vmatpush1.bf16.msra.mxu0 %v1923
    %2062 = vmatprep.subr.bf16.mxu0 %v1926
    %2063 = vmatpush1.bf16.msra.mxu0 %v1925
    %2064 = vmatprep.subr.bf16.mxu0 %v1928
    %2065 = vmatpush1.bf16.msra.mxu0 %v1927
    %2066 = vmatprep.subr.bf16.mxu0 %v1930
    %2067 = vmatpush1.bf16.msra.mxu0 %v1929
    %2068 = vmatprep.subr.bf16.mxu0 %v1932
    %2069 = vmatpush1.bf16.msra.mxu0 %v1931
    %2070 = vmatprep.subr.bf16.mxu0 %v1934
    %2071 = vmatpush1.bf16.msra.mxu0 %v1933
    %2072 = vmatprep.subr.bf16.mxu0 %v1936
    %2073 = vmatpush1.bf16.msra.mxu0 %v1935
    %2074 = vmatprep.subr.bf16.mxu0 %v1938
    %2075 = vmatpush1.bf16.msra.mxu0 %v1937
    %2076 = vmatprep.subr.bf16.mxu0 %v1940
    %2077 = vmatpush1.bf16.msra.mxu0 %v1939
    %2078 = vmatprep.subr.bf16.mxu0 %v1942
    %2079 = vmatpush1.bf16.msra.mxu0 %v1941
    %2080 = vmatprep.subr.bf16.mxu0 %v1944
    %2081 = vmatpush1.bf16.msra.mxu0 %v1943
    %2082 = vmatprep.subr.bf16.mxu0 %v1946
    %2083 = vmatpush1.bf16.msra.mxu0 %v1945
    %2084 = vmatprep.mubr.bf16.mxu0 %v1614
    %2085 = vmatmul.mubr.bf16.gmra.mrb[0].mxu0 %v1613
    %v2086 = vpop.f32.mrb[0].mxu0
    %v2087 = vadd.f32 %v2046, %v2086
    %v2088 = vpop.f32.mrb[0].mxu0
    %v2089 = vadd.f32 %v2048, %v2088
    %v2090 = vpop.f32.mrb[0].mxu0
    %v2091 = vpop.f32.mrb[0].mxu0
    %2092 = vdwg.mxu0
    %v2093 = vmax.f32 %v2087, 0.0
    %v2094 = vmax.f32 %v2089, 0.0
    %v2095 = vpack.c.bf16 %v2093, %v2093
    %v2096 = vpack.c.bf16 %v2094, %v2094
    %v2097 = vld [vmem:[%s6] sm:$0xf]
    %v2098 = vld [vmem:[%s6 + $0x4] sm:$0xf]
    %v2099 = vld [vmem:[%s6 + $0x8] sm:$0xf]
    %v2100 = vld [vmem:[%s6 + $0xc] sm:$0xf]
    %v2101 = vld [vmem:[%s6 + $0x10] sm:$0xf]
    %v2102 = vld [vmem:[%s6 + $0x14] sm:$0xf]
    %v2103 = vld [vmem:[%s6 + $0x18] sm:$0xf]
    %v2104 = vld [vmem:[%s6 + $0x1c] sm:$0xf]
    %v2105 = vld [vmem:[%s6 + $0x20] sm:$0xf]
    %v2106 = vld [vmem:[%s6 + $0x24] sm:$0xf]
    %v2107 = vld [vmem:[%s6 + $0x28] sm:$0xf]
    %v2108 = vld [vmem:[%s6 + $0x2c] sm:$0xf]
    %v2109 = vld [vmem:[%s6 + $0x30] sm:$0xf]
    %v2110 = vld [vmem:[%s6 + $0x34] sm:$0xf]
    %v2111 = vld [vmem:[%s6 + $0x38] sm:$0xf]
    %v2112 = vld [vmem:[%s6 + $0x3c] sm:$0xf]
    %v2113 = vld [vmem:[%s6 + $0x40] sm:$0xf]
    %v2114 = vld [vmem:[%s6 + $0x44] sm:$0xf]
    %v2115 = vld [vmem:[%s6 + $0x48] sm:$0xf]
    %v2116 = vld [vmem:[%s6 + $0x4c] sm:$0xf]
    %v2117 = vld [vmem:[%s6 + $0x50] sm:$0xf]
    %v2118 = vld [vmem:[%s6 + $0x54] sm:$0xf]
    %v2119 = vld [vmem:[%s6 + $0x58] sm:$0xf]
    %v2120 = vld [vmem:[%s6 + $0x5c] sm:$0xf]
    %v2121 = vld [vmem:[%s6 + $0x60] sm:$0xf]
    %v2122 = vld [vmem:[%s6 + $0x64] sm:$0xf]
    %v2123 = vld [vmem:[%s6 + $0x68] sm:$0xf]
    %v2124 = vld [vmem:[%s6 + $0x6c] sm:$0xf]
    %v2125 = vld [vmem:[%s6 + $0x70] sm:$0xf]
    %v2126 = vld [vmem:[%s6 + $0x74] sm:$0xf]
    %v2127 = vld [vmem:[%s6 + $0x78] sm:$0xf]
    %v2128 = vld [vmem:[%s6 + $0x7c] sm:$0xf]
    %v2129 = vld [vmem:[%s7] sm:$0x1]
    %v2131 = vlaneseq
    %v2132 = vshrl.u32 %v2131, 7
    %v2133 = vsub.s32 0, %v2132
    %v2134 = vrot.slane %v2129, %v2133
    %v2168 = vunpack.c.l.b16 %v2097
    %v2169 = vunpack.c.l.b16 %v2098
    %v2170 = vunpack.c.l.b16 %v2099
    %v2171 = vunpack.c.l.b16 %v2100
    %v2172 = vunpack.c.l.b16 %v2101
    %v2173 = vunpack.c.l.b16 %v2102
    %v2174 = vunpack.c.l.b16 %v2103
    %v2175 = vunpack.c.l.b16 %v2104
    %v2176 = vunpack.c.l.b16 %v2105
    %v2177 = vunpack.c.l.b16 %v2106
    %v2178 = vunpack.c.l.b16 %v2107
    %v2179 = vunpack.c.l.b16 %v2108
    %v2180 = vunpack.c.l.b16 %v2109
    %v2181 = vunpack.c.l.b16 %v2110
    %v2182 = vunpack.c.l.b16 %v2111
    %v2183 = vunpack.c.l.b16 %v2112
    %v2184 = vunpack.c.l.b16 %v2113
    %v2185 = vunpack.c.l.b16 %v2114
    %v2186 = vunpack.c.l.b16 %v2115
    %v2187 = vunpack.c.l.b16 %v2116
    %v2188 = vunpack.c.l.b16 %v2117
    %v2189 = vunpack.c.l.b16 %v2118
    %v2190 = vunpack.c.l.b16 %v2119
    %v2191 = vunpack.c.l.b16 %v2120
    %v2192 = vunpack.c.l.b16 %v2121
    %v2193 = vunpack.c.l.b16 %v2122
    %v2194 = vunpack.c.l.b16 %v2123
    %v2195 = vunpack.c.l.b16 %v2124
    %v2196 = vunpack.c.l.b16 %v2125
    %v2197 = vunpack.c.l.b16 %v2126
    %v2198 = vunpack.c.l.b16 %v2127
    %v2199 = vunpack.c.l.b16 %v2128
    %v2200 = vpack.c.b16 %v2169, %v2168
    %v2201 = vpack.c.b16 %v2171, %v2170
    %v2202 = vpack.c.b16 %v2173, %v2172
    %v2203 = vpack.c.b16 %v2175, %v2174
    %v2204 = vpack.c.b16 %v2177, %v2176
    %v2205 = vpack.c.b16 %v2179, %v2178
    %v2206 = vpack.c.b16 %v2181, %v2180
    %v2207 = vpack.c.b16 %v2183, %v2182
    %v2208 = vpack.c.b16 %v2185, %v2184
    %v2209 = vpack.c.b16 %v2187, %v2186
    %v2210 = vpack.c.b16 %v2189, %v2188
    %v2211 = vpack.c.b16 %v2191, %v2190
    %v2212 = vpack.c.b16 %v2193, %v2192
    %v2213 = vpack.c.b16 %v2195, %v2194
    %v2214 = vpack.c.b16 %v2197, %v2196
    %v2215 = vpack.c.b16 %v2199, %v2198
    %2232 = vmatprep.subr.bf16.mxu0 0
    %2233 = vmatpush1.bf16.msra.mxu0 %v2200
    %2234 = vmatprep.subr.bf16.mxu0 0
    %2235 = vmatpush1.bf16.msra.mxu0 %v2201
    %2236 = vmatprep.subr.bf16.mxu0 0
    %2237 = vmatpush1.bf16.msra.mxu0 %v2202
    %2238 = vmatprep.subr.bf16.mxu0 0
    %2239 = vmatpush1.bf16.msra.mxu0 %v2203
    %2240 = vmatprep.subr.bf16.mxu0 0
    %2241 = vmatpush1.bf16.msra.mxu0 %v2204
    %2242 = vmatprep.subr.bf16.mxu0 0
    %2243 = vmatpush1.bf16.msra.mxu0 %v2205
    %2244 = vmatprep.subr.bf16.mxu0 0
    %2245 = vmatpush1.bf16.msra.mxu0 %v2206
    %2246 = vmatprep.subr.bf16.mxu0 0
    %2247 = vmatpush1.bf16.msra.mxu0 %v2207
    %2248 = vmatprep.subr.bf16.mxu0 0
    %2249 = vmatpush1.bf16.msra.mxu0 %v2208
    %2250 = vmatprep.subr.bf16.mxu0 0
    %2251 = vmatpush1.bf16.msra.mxu0 %v2209
    %2252 = vmatprep.subr.bf16.mxu0 0
    %2253 = vmatpush1.bf16.msra.mxu0 %v2210
    %2254 = vmatprep.subr.bf16.mxu0 0
    %2255 = vmatpush1.bf16.msra.mxu0 %v2211
    %2256 = vmatprep.subr.bf16.mxu0 0
    %2257 = vmatpush1.bf16.msra.mxu0 %v2212
    %2258 = vmatprep.subr.bf16.mxu0 0
    %2259 = vmatpush1.bf16.msra.mxu0 %v2213
    %2260 = vmatprep.subr.bf16.mxu0 0
    %2261 = vmatpush1.bf16.msra.mxu0 %v2214
    %2262 = vmatprep.subr.bf16.mxu0 0
    %2263 = vmatpush1.bf16.msra.mxu0 %v2215
    %2264 = vmatprep.mubr.bf16.mxu0 %v2096
    %2265 = vmatmul.mubr.bf16.gmra.mrb[0].mxu0 %v2095
    %v2266 = vpop.f32.mrb[0].mxu0
    %v2267 = vadd.f32 %v2134, %v2266
    %v2268 = vpop.f32.mrb[0].mxu0
    %v2269 = vpop.f32.mrb[0].mxu0
    %v2270 = vpop.f32.mrb[0].mxu0
    %2271 = vdwg.mxu0
    %v2272 = vld [vmem:[%s8] sm:$0xf]
    %v2273 = vld [vmem:[%s8 + $0x4] sm:$0xf]
    %v2274 = vld [vmem:[%s8 + $0x8] sm:$0xf]
    %v2275 = vld [vmem:[%s8 + $0xc] sm:$0xf]
    %v2276 = vld [vmem:[%s8 + $0x10] sm:$0xf]
    %v2277 = vld [vmem:[%s8 + $0x14] sm:$0xf]
    %v2278 = vld [vmem:[%s8 + $0x18] sm:$0xf]
    %v2279 = vld [vmem:[%s8 + $0x1c] sm:$0xf]
    %v2280 = vld [vmem:[%s8 + $0x20] sm:$0xf]
    %v2281 = vld [vmem:[%s8 + $0x24] sm:$0xf]
    %v2282 = vld [vmem:[%s8 + $0x28] sm:$0xf]
    %v2283 = vld [vmem:[%s8 + $0x2c] sm:$0xf]
    %v2284 = vld [vmem:[%s8 + $0x30] sm:$0xf]
    %v2285 = vld [vmem:[%s8 + $0x34] sm:$0xf]
    %v2286 = vld [vmem:[%s8 + $0x38] sm:$0xf]
    %v2287 = vld [vmem:[%s8 + $0x3c] sm:$0xf]
    %v2288 = vld [vmem:[%s8 + $0x40] sm:$0xf]
    %v2289 = vld [vmem:[%s8 + $0x44] sm:$0xf]
    %v2290 = vld [vmem:[%s8 + $0x48] sm:$0xf]
    %v2291 = vld [vmem:[%s8 + $0x4c] sm:$0xf]
    %v2292 = vld [vmem:[%s8 + $0x50] sm:$0xf]
    %v2293 = vld [vmem:[%s8 + $0x54] sm:$0xf]
    %v2294 = vld [vmem:[%s8 + $0x58] sm:$0xf]
    %v2295 = vld [vmem:[%s8 + $0x5c] sm:$0xf]
    %v2296 = vld [vmem:[%s8 + $0x60] sm:$0xf]
    %v2297 = vld [vmem:[%s8 + $0x64] sm:$0xf]
    %v2298 = vld [vmem:[%s8 + $0x68] sm:$0xf]
    %v2299 = vld [vmem:[%s8 + $0x6c] sm:$0xf]
    %v2300 = vld [vmem:[%s8 + $0x70] sm:$0xf]
    %v2301 = vld [vmem:[%s8 + $0x74] sm:$0xf]
    %v2302 = vld [vmem:[%s8 + $0x78] sm:$0xf]
    %v2303 = vld [vmem:[%s8 + $0x7c] sm:$0xf]
    %v2304 = vld [vmem:[%s9] sm:$0x1]
    %v2306 = vlaneseq
    %v2307 = vshrl.u32 %v2306, 7
    %v2308 = vsub.s32 0, %v2307
    %v2309 = vrot.slane %v2304, %v2308
    %v2343 = vunpack.c.l.b16 %v2272
    %v2344 = vunpack.c.l.b16 %v2273
    %v2345 = vunpack.c.l.b16 %v2274
    %v2346 = vunpack.c.l.b16 %v2275
    %v2347 = vunpack.c.l.b16 %v2276
    %v2348 = vunpack.c.l.b16 %v2277
    %v2349 = vunpack.c.l.b16 %v2278
    %v2350 = vunpack.c.l.b16 %v2279
    %v2351 = vunpack.c.l.b16 %v2280
    %v2352 = vunpack.c.l.b16 %v2281
    %v2353 = vunpack.c.l.b16 %v2282
    %v2354 = vunpack.c.l.b16 %v2283
    %v2355 = vunpack.c.l.b16 %v2284
    %v2356 = vunpack.c.l.b16 %v2285
    %v2357 = vunpack.c.l.b16 %v2286
    %v2358 = vunpack.c.l.b16 %v2287
    %v2359 = vunpack.c.l.b16 %v2288
    %v2360 = vunpack.c.l.b16 %v2289
    %v2361 = vunpack.c.l.b16 %v2290
    %v2362 = vunpack.c.l.b16 %v2291
    %v2363 = vunpack.c.l.b16 %v2292
    %v2364 = vunpack.c.l.b16 %v2293
    %v2365 = vunpack.c.l.b16 %v2294
    %v2366 = vunpack.c.l.b16 %v2295
    %v2367 = vunpack.c.l.b16 %v2296
    %v2368 = vunpack.c.l.b16 %v2297
    %v2369 = vunpack.c.l.b16 %v2298
    %v2370 = vunpack.c.l.b16 %v2299
    %v2371 = vunpack.c.l.b16 %v2300
    %v2372 = vunpack.c.l.b16 %v2301
    %v2373 = vunpack.c.l.b16 %v2302
    %v2374 = vunpack.c.l.b16 %v2303
    %v2375 = vpack.c.b16 %v2344, %v2343
    %v2376 = vpack.c.b16 %v2346, %v2345
    %v2377 = vpack.c.b16 %v2348, %v2347
    %v2378 = vpack.c.b16 %v2350, %v2349
    %v2379 = vpack.c.b16 %v2352, %v2351
    %v2380 = vpack.c.b16 %v2354, %v2353
    %v2381 = vpack.c.b16 %v2356, %v2355
    %v2382 = vpack.c.b16 %v2358, %v2357
    %v2383 = vpack.c.b16 %v2360, %v2359
    %v2384 = vpack.c.b16 %v2362, %v2361
    %v2385 = vpack.c.b16 %v2364, %v2363
    %v2386 = vpack.c.b16 %v2366, %v2365
    %v2387 = vpack.c.b16 %v2368, %v2367
    %v2388 = vpack.c.b16 %v2370, %v2369
    %v2389 = vpack.c.b16 %v2372, %v2371
    %v2390 = vpack.c.b16 %v2374, %v2373
    %2407 = vmatprep.subr.bf16.mxu0 0
    %2408 = vmatpush1.bf16.msra.mxu0 %v2375
    %2409 = vmatprep.subr.bf16.mxu0 0
    %2410 = vmatpush1.bf16.msra.mxu0 %v2376
    %2411 = vmatprep.subr.bf16.mxu0 0
    %2412 = vmatpush1.bf16.msra.mxu0 %v2377
    %2413 = vmatprep.subr.bf16.mxu0 0
    %2414 = vmatpush1.bf16.msra.mxu0 %v2378
    %2415 = vmatprep.subr.bf16.mxu0 0
    %2416 = vmatpush1.bf16.msra.mxu0 %v2379
    %2417 = vmatprep.subr.bf16.mxu0 0
    %2418 = vmatpush1.bf16.msra.mxu0 %v2380
    %2419 = vmatprep.subr.bf16.mxu0 0
    %2420 = vmatpush1.bf16.msra.mxu0 %v2381
    %2421 = vmatprep.subr.bf16.mxu0 0
    %2422 = vmatpush1.bf16.msra.mxu0 %v2382
    %2423 = vmatprep.subr.bf16.mxu0 0
    %2424 = vmatpush1.bf16.msra.mxu0 %v2383
    %2425 = vmatprep.subr.bf16.mxu0 0
    %2426 = vmatpush1.bf16.msra.mxu0 %v2384
    %2427 = vmatprep.subr.bf16.mxu0 0
    %2428 = vmatpush1.bf16.msra.mxu0 %v2385
    %2429 = vmatprep.subr.bf16.mxu0 0
    %2430 = vmatpush1.bf16.msra.mxu0 %v2386
    %2431 = vmatprep.subr.bf16.mxu0 0
    %2432 = vmatpush1.bf16.msra.mxu0 %v2387
    %2433 = vmatprep.subr.bf16.mxu0 0
    %2434 = vmatpush1.bf16.msra.mxu0 %v2388
    %2435 = vmatprep.subr.bf16.mxu0 0
    %2436 = vmatpush1.bf16.msra.mxu0 %v2389
    %2437 = vmatprep.subr.bf16.mxu0 0
    %2438 = vmatpush1.bf16.msra.mxu0 %v2390
    %2439 = vmatprep.mubr.bf16.mxu0 %v2096
    %2440 = vmatmul.mubr.bf16.gmra.mrb[0].mxu0 %v2095
    %v2441 = vpop.f32.mrb[0].mxu0
    %v2442 = vadd.f32 %v2309, %v2441
    %v2443 = vpop.f32.mrb[0].mxu0
    %v2444 = vpop.f32.mrb[0].mxu0
    %v2445 = vpop.f32.mrb[0].mxu0
    %2446 = vdwg.mxu0
    %v2447 = vmul.f32 %v2442, 1.442695
    %v2448 = vpow.pop %v2447
    %v2449 = vld [vmem:[%s1] sm:$0xff]
    %v2450 = vmul.f32 %v2448, %v2449
    %v2451 = vadd.f32 %v2267, %v2450
    %v2452 = vpack.c.bf16 %v2451, %v2451
    %v2453 = vld [vmem:[%s10] sm:$0xff]
    %v2454 = vld [vmem:[%s11] sm:$0x3]
    %v2456 = vlaneseq
    %v2457 = vshrl.u32 %v2456, 7
    %v2458 = vsub.s32 0, %v2457
    %v2459 = vrot.slane %v2454, %v2458
    %v2460 = vlaneseq
    %v2461 = vshrl.u32 %v2460, 7
    %v2462 = vsub.s32 1, %v2461
    %v2463 = vrot.slane %v2454, %v2462
    %v2467 = vunpack.c.l.b16 %v2453
    %v2468 = vunpack.c.h.b16 %v2453
    %v2469 = vpack.c.b16 %v2467, %v2467
    %v2470 = vpack.c.b16 %v2468, %v2468
    %vm2471 = vcmask 64512
    %v2473 = vsel %vm2471, %v2452, 0
    %vm2475 = vcmask 1043456
    %v2477 = vsel %vm2475, %v2469, 0
    %v2480 = vsel %vm2475, %v2470, 0
    %2482 = vmatprep.subr.bf16.mxu0 %v2480
    %2483 = vmatpush1.bf16.msra.mxu0 %v2477
    %2484 = vmatprep.subr.bf16.mxu0 0
    %2485 = vmatpush1.bf16.msra.mxu0 0
    %2486 = vmatprep.subr.bf16.mxu0 0
    %2487 = vmatpush1.bf16.msra.mxu0 0
    %2488 = vmatprep.subr.bf16.mxu0 0
    %2489 = vmatpush1.bf16.msra.mxu0 0
    %2490 = vmatprep.subr.bf16.mxu0 0
    %2491 = vmatpush1.bf16.msra.mxu0 0
    %2492 = vmatprep.subr.bf16.mxu0 0
    %2493 = vmatpush1.bf16.msra.mxu0 0
    %2494 = vmatprep.subr.bf16.mxu0 0
    %2495 = vmatpush1.bf16.msra.mxu0 0
    %2496 = vmatprep.subr.bf16.mxu0 0
    %2497 = vmatpush1.bf16.msra.mxu0 0
    %2498 = vmatprep.subr.bf16.mxu0 0
    %2499 = vmatpush1.bf16.msra.mxu0 0
    %2500 = vmatprep.subr.bf16.mxu0 0
    %2501 = vmatpush1.bf16.msra.mxu0 0
    %2502 = vmatprep.subr.bf16.mxu0 0
    %2503 = vmatpush1.bf16.msra.mxu0 0
    %2504 = vmatprep.subr.bf16.mxu0 0
    %2505 = vmatpush1.bf16.msra.mxu0 0
    %2506 = vmatprep.subr.bf16.mxu0 0
    %2507 = vmatpush1.bf16.msra.mxu0 0
    %2508 = vmatprep.subr.bf16.mxu0 0
    %2509 = vmatpush1.bf16.msra.mxu0 0
    %2510 = vmatprep.subr.bf16.mxu0 0
    %2511 = vmatpush1.bf16.msra.mxu0 0
    %2512 = vmatprep.subr.bf16.mxu0 0
    %2513 = vmatpush1.bf16.msra.mxu0 0
    %2514 = vmatprep.mubr.bf16.mxu0 0
    %2515 = vmatmul.mubr.bf16.gmra.mrb[0].mxu0 %v2473
    %v2516 = vpop.f32.mrb[0].mxu0
    %v2517 = vadd.f32 %v2459, %v2516
    %v2518 = vpop.f32.mrb[0].mxu0
    %v2519 = vadd.f32 %v2463, %v2518
    %v2520 = vpop.f32.mrb[0].mxu0
    %v2521 = vpop.f32.mrb[0].mxu0
    %2522 = vdwg.mxu0
    %v2523 = vmax.f32 %v2517, 0.0
    %v2524 = vmax.f32 %v2519, 0.0
    %v2525 = vpack.c.bf16 %v2523, %v2523
    %v2526 = vpack.c.bf16 %v2524, %v2524
    %v2527 = vld [vmem:[%s12] sm:$0xff]
    %v2528 = vld [vmem:[%s12 + $0x8] sm:$0xff]
    %v2529 = vld [vmem:[%s12 + $0x10] sm:$0xff]
    %v2530 = vld [vmem:[%s12 + $0x18] sm:$0xff]
    %v2531 = vld [vmem:[%s12 + $0x20] sm:$0xff]
    %v2532 = vld [vmem:[%s12 + $0x28] sm:$0xff]
    %v2533 = vld [vmem:[%s12 + $0x30] sm:$0xff]
    %v2534 = vld [vmem:[%s12 + $0x38] sm:$0xff]
    %v2535 = vld [vmem:[%s12 + $0x40] sm:$0xff]
    %v2536 = vld [vmem:[%s12 + $0x48] sm:$0xff]
    %v2537 = vld [vmem:[%s12 + $0x50] sm:$0xff]
    %v2538 = vld [vmem:[%s12 + $0x58] sm:$0xff]
    %v2539 = vld [vmem:[%s12 + $0x60] sm:$0xff]
    %v2540 = vld [vmem:[%s12 + $0x68] sm:$0xff]
    %v2541 = vld [vmem:[%s12 + $0x70] sm:$0xff]
    %v2542 = vld [vmem:[%s12 + $0x78] sm:$0xff]
    %v2543 = vld [vmem:[%s12 + $0x80] sm:$0xff]
    %v2544 = vld [vmem:[%s12 + $0x88] sm:$0xff]
    %v2545 = vld [vmem:[%s12 + $0x90] sm:$0xff]
    %v2546 = vld [vmem:[%s12 + $0x98] sm:$0xff]
    %v2547 = vld [vmem:[%s12 + $0xa0] sm:$0xff]
    %v2548 = vld [vmem:[%s12 + $0xa8] sm:$0xff]
    %v2549 = vld [vmem:[%s12 + $0xb0] sm:$0xff]
    %v2550 = vld [vmem:[%s12 + $0xb8] sm:$0xff]
    %v2551 = vld [vmem:[%s12 + $0xc0] sm:$0xff]
    %v2552 = vld [vmem:[%s12 + $0xc8] sm:$0xff]
    %v2553 = vld [vmem:[%s12 + $0xd0] sm:$0xff]
    %v2554 = vld [vmem:[%s12 + $0xd8] sm:$0xff]
    %v2555 = vld [vmem:[%s12 + $0xe0] sm:$0xff]
    %v2556 = vld [vmem:[%s12 + $0xe8] sm:$0xff]
    %v2557 = vld [vmem:[%s12 + $0xf0] sm:$0xff]
    %v2558 = vld [vmem:[%s12 + $0xf8] sm:$0xff]
    %v2559 = vld [vmem:[%s12 + $0x100] sm:$0xff]
    %v2560 = vld [vmem:[%s12 + $0x108] sm:$0xff]
    %v2561 = vld [vmem:[%s12 + $0x110] sm:$0xff]
    %v2562 = vld [vmem:[%s12 + $0x118] sm:$0xff]
    %v2563 = vld [vmem:[%s12 + $0x120] sm:$0xff]
    %v2564 = vld [vmem:[%s12 + $0x128] sm:$0xff]
    %v2565 = vld [vmem:[%s12 + $0x130] sm:$0xff]
    %v2566 = vld [vmem:[%s12 + $0x138] sm:$0xff]
    %v2567 = vld [vmem:[%s12 + $0x140] sm:$0xff]
    %v2568 = vld [vmem:[%s12 + $0x148] sm:$0xff]
    %v2569 = vld [vmem:[%s12 + $0x150] sm:$0xff]
    %v2570 = vld [vmem:[%s12 + $0x158] sm:$0xff]
    %v2571 = vld [vmem:[%s12 + $0x160] sm:$0xff]
    %v2572 = vld [vmem:[%s12 + $0x168] sm:$0xff]
    %v2573 = vld [vmem:[%s12 + $0x170] sm:$0xff]
    %v2574 = vld [vmem:[%s12 + $0x178] sm:$0xff]
    %v2575 = vld [vmem:[%s12 + $0x180] sm:$0xff]
    %v2576 = vld [vmem:[%s12 + $0x188] sm:$0xff]
    %v2577 = vld [vmem:[%s12 + $0x190] sm:$0xff]
    %v2578 = vld [vmem:[%s12 + $0x198] sm:$0xff]
    %v2579 = vld [vmem:[%s12 + $0x1a0] sm:$0xff]
    %v2580 = vld [vmem:[%s12 + $0x1a8] sm:$0xff]
    %v2581 = vld [vmem:[%s12 + $0x1b0] sm:$0xff]
    %v2582 = vld [vmem:[%s12 + $0x1b8] sm:$0xff]
    %v2583 = vld [vmem:[%s12 + $0x1c0] sm:$0xff]
    %v2584 = vld [vmem:[%s12 + $0x1c8] sm:$0xff]
    %v2585 = vld [vmem:[%s12 + $0x1d0] sm:$0xff]
    %v2586 = vld [vmem:[%s12 + $0x1d8] sm:$0xff]
    %v2587 = vld [vmem:[%s12 + $0x1e0] sm:$0xff]
    %v2588 = vld [vmem:[%s12 + $0x1e8] sm:$0xff]
    %v2589 = vld [vmem:[%s12 + $0x1f0] sm:$0xff]
    %v2590 = vld [vmem:[%s12 + $0x1f8] sm:$0xff]
    %v2591 = vld [vmem:[%s13] sm:$0xf]
    %v2593 = vlaneseq
    %v2594 = vshrl.u32 %v2593, 7
    %v2595 = vsub.s32 0, %v2594
    %v2596 = vrot.slane %v2591, %v2595
    %v2597 = vlaneseq
    %v2598 = vshrl.u32 %v2597, 7
    %v2599 = vsub.s32 1, %v2598
    %v2600 = vrot.slane %v2591, %v2599
    %v2601 = vlaneseq
    %v2602 = vshrl.u32 %v2601, 7
    %v2603 = vsub.s32 2, %v2602
    %v2604 = vrot.slane %v2591, %v2603
    %v2605 = vlaneseq
    %v2606 = vshrl.u32 %v2605, 7
    %v2607 = vsub.s32 3, %v2606
    %v2608 = vrot.slane %v2591, %v2607
    %v2677 = vunpack.c.l.b16 %v2527
    %v2678 = vunpack.c.h.b16 %v2527
    %v2679 = vunpack.c.l.b16 %v2528
    %v2680 = vunpack.c.h.b16 %v2528
    %v2681 = vunpack.c.l.b16 %v2529
    %v2682 = vunpack.c.h.b16 %v2529
    %v2683 = vunpack.c.l.b16 %v2530
    %v2684 = vunpack.c.h.b16 %v2530
    %v2685 = vunpack.c.l.b16 %v2531
    %v2686 = vunpack.c.h.b16 %v2531
    %v2687 = vunpack.c.l.b16 %v2532
    %v2688 = vunpack.c.h.b16 %v2532
    %v2689 = vunpack.c.l.b16 %v2533
    %v2690 = vunpack.c.h.b16 %v2533
    %v2691 = vunpack.c.l.b16 %v2534
    %v2692 = vunpack.c.h.b16 %v2534
    %v2693 = vunpack.c.l.b16 %v2535
    %v2694 = vunpack.c.h.b16 %v2535
    %v2695 = vunpack.c.l.b16 %v2536
    %v2696 = vunpack.c.h.b16 %v2536
    %v2697 = vunpack.c.l.b16 %v2537
    %v2698 = vunpack.c.h.b16 %v2537
    %v2699 = vunpack.c.l.b16 %v2538
    %v2700 = vunpack.c.h.b16 %v2538
    %v2701 = vunpack.c.l.b16 %v2539
    %v2702 = vunpack.c.h.b16 %v2539
    %v2703 = vunpack.c.l.b16 %v2540
    %v2704 = vunpack.c.h.b16 %v2540
    %v2705 = vunpack.c.l.b16 %v2541
    %v2706 = vunpack.c.h.b16 %v2541
    %v2707 = vunpack.c.l.b16 %v2542
    %v2708 = vunpack.c.h.b16 %v2542
    %v2709 = vunpack.c.l.b16 %v2543
    %v2710 = vunpack.c.h.b16 %v2543
    %v2711 = vunpack.c.l.b16 %v2544
    %v2712 = vunpack.c.h.b16 %v2544
    %v2713 = vunpack.c.l.b16 %v2545
    %v2714 = vunpack.c.h.b16 %v2545
    %v2715 = vunpack.c.l.b16 %v2546
    %v2716 = vunpack.c.h.b16 %v2546
    %v2717 = vunpack.c.l.b16 %v2547
    %v2718 = vunpack.c.h.b16 %v2547
    %v2719 = vunpack.c.l.b16 %v2548
    %v2720 = vunpack.c.h.b16 %v2548
    %v2721 = vunpack.c.l.b16 %v2549
    %v2722 = vunpack.c.h.b16 %v2549
    %v2723 = vunpack.c.l.b16 %v2550
    %v2724 = vunpack.c.h.b16 %v2550
    %v2725 = vunpack.c.l.b16 %v2551
    %v2726 = vunpack.c.h.b16 %v2551
    %v2727 = vunpack.c.l.b16 %v2552
    %v2728 = vunpack.c.h.b16 %v2552
    %v2729 = vunpack.c.l.b16 %v2553
    %v2730 = vunpack.c.h.b16 %v2553
    %v2731 = vunpack.c.l.b16 %v2554
    %v2732 = vunpack.c.h.b16 %v2554
    %v2733 = vunpack.c.l.b16 %v2555
    %v2734 = vunpack.c.h.b16 %v2555
    %v2735 = vunpack.c.l.b16 %v2556
    %v2736 = vunpack.c.h.b16 %v2556
    %v2737 = vunpack.c.l.b16 %v2557
    %v2738 = vunpack.c.h.b16 %v2557
    %v2739 = vunpack.c.l.b16 %v2558
    %v2740 = vunpack.c.h.b16 %v2558
    %v2741 = vunpack.c.l.b16 %v2559
    %v2742 = vunpack.c.h.b16 %v2559
    %v2743 = vunpack.c.l.b16 %v2560
    %v2744 = vunpack.c.h.b16 %v2560
    %v2745 = vunpack.c.l.b16 %v2561
    %v2746 = vunpack.c.h.b16 %v2561
    %v2747 = vunpack.c.l.b16 %v2562
    %v2748 = vunpack.c.h.b16 %v2562
    %v2749 = vunpack.c.l.b16 %v2563
    %v2750 = vunpack.c.h.b16 %v2563
    %v2751 = vunpack.c.l.b16 %v2564
    %v2752 = vunpack.c.h.b16 %v2564
    %v2753 = vunpack.c.l.b16 %v2565
    %v2754 = vunpack.c.h.b16 %v2565
    %v2755 = vunpack.c.l.b16 %v2566
    %v2756 = vunpack.c.h.b16 %v2566
    %v2757 = vunpack.c.l.b16 %v2567
    %v2758 = vunpack.c.h.b16 %v2567
    %v2759 = vunpack.c.l.b16 %v2568
    %v2760 = vunpack.c.h.b16 %v2568
    %v2761 = vunpack.c.l.b16 %v2569
    %v2762 = vunpack.c.h.b16 %v2569
    %v2763 = vunpack.c.l.b16 %v2570
    %v2764 = vunpack.c.h.b16 %v2570
    %v2765 = vunpack.c.l.b16 %v2571
    %v2766 = vunpack.c.h.b16 %v2571
    %v2767 = vunpack.c.l.b16 %v2572
    %v2768 = vunpack.c.h.b16 %v2572
    %v2769 = vunpack.c.l.b16 %v2573
    %v2770 = vunpack.c.h.b16 %v2573
    %v2771 = vunpack.c.l.b16 %v2574
    %v2772 = vunpack.c.h.b16 %v2574
    %v2773 = vunpack.c.l.b16 %v2575
    %v2774 = vunpack.c.h.b16 %v2575
    %v2775 = vunpack.c.l.b16 %v2576
    %v2776 = vunpack.c.h.b16 %v2576
    %v2777 = vunpack.c.l.b16 %v2577
    %v2778 = vunpack.c.h.b16 %v2577
    %v2779 = vunpack.c.l.b16 %v2578
    %v2780 = vunpack.c.h.b16 %v2578
    %v2781 = vunpack.c.l.b16 %v2579
    %v2782 = vunpack.c.h.b16 %v2579
    %v2783 = vunpack.c.l.b16 %v2580
    %v2784 = vunpack.c.h.b16 %v2580
    %v2785 = vunpack.c.l.b16 %v2581
    %v2786 = vunpack.c.h.b16 %v2581
    %v2787 = vunpack.c.l.b16 %v2582
    %v2788 = vunpack.c.h.b16 %v2582
    %v2789 = vunpack.c.l.b16 %v2583
    %v2790 = vunpack.c.h.b16 %v2583
    %v2791 = vunpack.c.l.b16 %v2584
    %v2792 = vunpack.c.h.b16 %v2584
    %v2793 = vunpack.c.l.b16 %v2585
    %v2794 = vunpack.c.h.b16 %v2585
    %v2795 = vunpack.c.l.b16 %v2586
    %v2796 = vunpack.c.h.b16 %v2586
    %v2797 = vunpack.c.l.b16 %v2587
    %v2798 = vunpack.c.h.b16 %v2587
    %v2799 = vunpack.c.l.b16 %v2588
    %v2800 = vunpack.c.h.b16 %v2588
    %v2801 = vunpack.c.l.b16 %v2589
    %v2802 = vunpack.c.h.b16 %v2589
    %v2803 = vunpack.c.l.b16 %v2590
    %v2804 = vunpack.c.h.b16 %v2590
    %v2805 = vpack.c.b16 %v2681, %v2677
    %v2806 = vpack.c.b16 %v2682, %v2678
    %v2807 = vpack.c.b16 %v2683, %v2679
    %v2808 = vpack.c.b16 %v2684, %v2680
    %v2809 = vpack.c.b16 %v2689, %v2685
    %v2810 = vpack.c.b16 %v2690, %v2686
    %v2811 = vpack.c.b16 %v2691, %v2687
    %v2812 = vpack.c.b16 %v2692, %v2688
    %v2813 = vpack.c.b16 %v2697, %v2693
    %v2814 = vpack.c.b16 %v2698, %v2694
    %v2815 = vpack.c.b16 %v2699, %v2695
    %v2816 = vpack.c.b16 %v2700, %v2696
    %v2817 = vpack.c.b16 %v2705, %v2701
    %v2818 = vpack.c.b16 %v2706, %v2702
    %v2819 = vpack.c.b16 %v2707, %v2703
    %v2820 = vpack.c.b16 %v2708, %v2704
    %v2821 = vpack.c.b16 %v2713, %v2709
    %v2822 = vpack.c.b16 %v2714, %v2710
    %v2823 = vpack.c.b16 %v2715, %v2711
    %v2824 = vpack.c.b16 %v2716, %v2712
    %v2825 = vpack.c.b16 %v2721, %v2717
    %v2826 = vpack.c.b16 %v2722, %v2718
    %v2827 = vpack.c.b16 %v2723, %v2719
    %v2828 = vpack.c.b16 %v2724, %v2720
    %v2829 = vpack.c.b16 %v2729, %v2725
    %v2830 = vpack.c.b16 %v2730, %v2726
    %v2831 = vpack.c.b16 %v2731, %v2727
    %v2832 = vpack.c.b16 %v2732, %v2728
    %v2833 = vpack.c.b16 %v2737, %v2733
    %v2834 = vpack.c.b16 %v2738, %v2734
    %v2835 = vpack.c.b16 %v2739, %v2735
    %v2836 = vpack.c.b16 %v2740, %v2736
    %v2837 = vpack.c.b16 %v2745, %v2741
    %v2838 = vpack.c.b16 %v2746, %v2742
    %v2839 = vpack.c.b16 %v2747, %v2743
    %v2840 = vpack.c.b16 %v2748, %v2744
    %v2841 = vpack.c.b16 %v2753, %v2749
    %v2842 = vpack.c.b16 %v2754, %v2750
    %v2843 = vpack.c.b16 %v2755, %v2751
    %v2844 = vpack.c.b16 %v2756, %v2752
    %v2845 = vpack.c.b16 %v2761, %v2757
    %v2846 = vpack.c.b16 %v2762, %v2758
    %v2847 = vpack.c.b16 %v2763, %v2759
    %v2848 = vpack.c.b16 %v2764, %v2760
    %v2849 = vpack.c.b16 %v2769, %v2765
    %v2850 = vpack.c.b16 %v2770, %v2766
    %v2851 = vpack.c.b16 %v2771, %v2767
    %v2852 = vpack.c.b16 %v2772, %v2768
    %v2853 = vpack.c.b16 %v2777, %v2773
    %v2854 = vpack.c.b16 %v2778, %v2774
    %v2855 = vpack.c.b16 %v2779, %v2775
    %v2856 = vpack.c.b16 %v2780, %v2776
    %v2857 = vpack.c.b16 %v2785, %v2781
    %v2858 = vpack.c.b16 %v2786, %v2782
    %v2859 = vpack.c.b16 %v2787, %v2783
    %v2860 = vpack.c.b16 %v2788, %v2784
    %v2861 = vpack.c.b16 %v2793, %v2789
    %v2862 = vpack.c.b16 %v2794, %v2790
    %v2863 = vpack.c.b16 %v2795, %v2791
    %v2864 = vpack.c.b16 %v2796, %v2792
    %v2865 = vpack.c.b16 %v2801, %v2797
    %v2866 = vpack.c.b16 %v2802, %v2798
    %v2867 = vpack.c.b16 %v2803, %v2799
    %v2868 = vpack.c.b16 %v2804, %v2800
    %2933 = vmatprep.subr.bf16.mxu0 %v2806
    %2934 = vmatpush1.bf16.msra.mxu0 %v2805
    %2935 = vmatprep.subr.bf16.mxu0 %v2810
    %2936 = vmatpush1.bf16.msra.mxu0 %v2809
    %2937 = vmatprep.subr.bf16.mxu0 %v2814
    %2938 = vmatpush1.bf16.msra.mxu0 %v2813
    %2939 = vmatprep.subr.bf16.mxu0 %v2818
    %2940 = vmatpush1.bf16.msra.mxu0 %v2817
    %2941 = vmatprep.subr.bf16.mxu0 %v2822
    %2942 = vmatpush1.bf16.msra.mxu0 %v2821
    %2943 = vmatprep.subr.bf16.mxu0 %v2826
    %2944 = vmatpush1.bf16.msra.mxu0 %v2825
    %2945 = vmatprep.subr.bf16.mxu0 %v2830
    %2946 = vmatpush1.bf16.msra.mxu0 %v2829
    %2947 = vmatprep.subr.bf16.mxu0 %v2834
    %2948 = vmatpush1.bf16.msra.mxu0 %v2833
    %2949 = vmatprep.subr.bf16.mxu0 %v2838
    %2950 = vmatpush1.bf16.msra.mxu0 %v2837
    %2951 = vmatprep.subr.bf16.mxu0 %v2842
    %2952 = vmatpush1.bf16.msra.mxu0 %v2841
    %2953 = vmatprep.subr.bf16.mxu0 %v2846
    %2954 = vmatpush1.bf16.msra.mxu0 %v2845
    %2955 = vmatprep.subr.bf16.mxu0 %v2850
    %2956 = vmatpush1.bf16.msra.mxu0 %v2849
    %2957 = vmatprep.subr.bf16.mxu0 %v2854
    %2958 = vmatpush1.bf16.msra.mxu0 %v2853
    %2959 = vmatprep.subr.bf16.mxu0 %v2858
    %2960 = vmatpush1.bf16.msra.mxu0 %v2857
    %2961 = vmatprep.subr.bf16.mxu0 %v2862
    %2962 = vmatpush1.bf16.msra.mxu0 %v2861
    %2963 = vmatprep.subr.bf16.mxu0 %v2866
    %2964 = vmatpush1.bf16.msra.mxu0 %v2865
    %2965 = vmatprep.mubr.bf16.mxu0 %v2526
    %2966 = vmatmul.mubr.bf16.gmra.mrb[0].mxu0 %v2525
    %v2967 = vpop.f32.mrb[0].mxu0
    %v2968 = vadd.f32 %v2596, %v2967
    %v2969 = vpop.f32.mrb[0].mxu0
    %v2970 = vadd.f32 %v2600, %v2969
    %v2971 = vpop.f32.mrb[0].mxu0
    %v2972 = vpop.f32.mrb[0].mxu0
    %2973 = vdwg.mxu0
    %2974 = vmatprep.subr.bf16.mxu0 %v2808
    %2975 = vmatpush1.bf16.msra.mxu0 %v2807
    %2976 = vmatprep.subr.bf16.mxu0 %v2812
    %2977 = vmatpush1.bf16.msra.mxu0 %v2811
    %2978 = vmatprep.subr.bf16.mxu0 %v2816
    %2979 = vmatpush1.bf16.msra.mxu0 %v2815
    %2980 = vmatprep.subr.bf16.mxu0 %v2820
    %2981 = vmatpush1.bf16.msra.mxu0 %v2819
    %2982 = vmatprep.subr.bf16.mxu0 %v2824
    %2983 = vmatpush1.bf16.msra.mxu0 %v2823
    %2984 = vmatprep.subr.bf16.mxu0 %v2828
    %2985 = vmatpush1.bf16.msra.mxu0 %v2827
    %2986 = vmatprep.subr.bf16.mxu0 %v2832
    %2987 = vmatpush1.bf16.msra.mxu0 %v2831
    %2988 = vmatprep.subr.bf16.mxu0 %v2836
    %2989 = vmatpush1.bf16.msra.mxu0 %v2835
    %2990 = vmatprep.subr.bf16.mxu0 %v2840
    %2991 = vmatpush1.bf16.msra.mxu0 %v2839
    %2992 = vmatprep.subr.bf16.mxu0 %v2844
    %2993 = vmatpush1.bf16.msra.mxu0 %v2843
    %2994 = vmatprep.subr.bf16.mxu0 %v2848
    %2995 = vmatpush1.bf16.msra.mxu0 %v2847
    %2996 = vmatprep.subr.bf16.mxu0 %v2852
    %2997 = vmatpush1.bf16.msra.mxu0 %v2851
    %2998 = vmatprep.subr.bf16.mxu0 %v2856
    %2999 = vmatpush1.bf16.msra.mxu0 %v2855
    %3000 = vmatprep.subr.bf16.mxu0 %v2860
    %3001 = vmatpush1.bf16.msra.mxu0 %v2859
    %3002 = vmatprep.subr.bf16.mxu0 %v2864
    %3003 = vmatpush1.bf16.msra.mxu0 %v2863
    %3004 = vmatprep.subr.bf16.mxu0 %v2868
    %3005 = vmatpush1.bf16.msra.mxu0 %v2867
    %3006 = vmatprep.mubr.bf16.mxu0 %v2526
    %3007 = vmatmul.mubr.bf16.gmra.mrb[0].mxu0 %v2525
    %v3008 = vpop.f32.mrb[0].mxu0
    %v3009 = vadd.f32 %v2604, %v3008
    %v3010 = vpop.f32.mrb[0].mxu0
    %v3011 = vadd.f32 %v2608, %v3010
    %v3012 = vpop.f32.mrb[0].mxu0
    %v3013 = vpop.f32.mrb[0].mxu0
    %3014 = vdwg.mxu0
    %v3015 = vmax.f32 %v2968, 0.0
    %v3016 = vmax.f32 %v2970, 0.0
    %v3017 = vmax.f32 %v3009, 0.0
    %v3018 = vmax.f32 %v3011, 0.0
    %v3019 = vpack.c.bf16 %v3015, %v3015
    %v3020 = vpack.c.bf16 %v3016, %v3016
    %v3021 = vpack.c.bf16 %v3017, %v3017
    %v3022 = vpack.c.bf16 %v3018, %v3018
    %v3023 = vld [vmem:[%s14] sm:$0xff]
    %v3024 = vld [vmem:[%s14 + $0x8] sm:$0xff]
    %v3025 = vld [vmem:[%s14 + $0x10] sm:$0xff]
    %v3026 = vld [vmem:[%s14 + $0x18] sm:$0xf]
    %v3027 = vld [vmem:[%s14 + $0x1c] sm:$0xff]
    %v3028 = vld [vmem:[%s14 + $0x24] sm:$0xff]
    %v3029 = vld [vmem:[%s14 + $0x2c] sm:$0xff]
    %v3030 = vld [vmem:[%s14 + $0x34] sm:$0xf]
    %v3031 = vld [vmem:[%s14 + $0x38] sm:$0xff]
    %v3032 = vld [vmem:[%s14 + $0x40] sm:$0xff]
    %v3033 = vld [vmem:[%s14 + $0x48] sm:$0xff]
    %v3034 = vld [vmem:[%s14 + $0x50] sm:$0xf]
    %v3035 = vld [vmem:[%s14 + $0x54] sm:$0xff]
    %v3036 = vld [vmem:[%s14 + $0x5c] sm:$0xff]
    %v3037 = vld [vmem:[%s14 + $0x64] sm:$0xff]
    %v3038 = vld [vmem:[%s14 + $0x6c] sm:$0xf]
    %v3039 = vld [vmem:[%s14 + $0x70] sm:$0xff]
    %v3040 = vld [vmem:[%s14 + $0x78] sm:$0xff]
    %v3041 = vld [vmem:[%s14 + $0x80] sm:$0xff]
    %v3042 = vld [vmem:[%s14 + $0x88] sm:$0xf]
    %v3043 = vld [vmem:[%s14 + $0x8c] sm:$0xff]
    %v3044 = vld [vmem:[%s14 + $0x94] sm:$0xff]
    %v3045 = vld [vmem:[%s14 + $0x9c] sm:$0xff]
    %v3046 = vld [vmem:[%s14 + $0xa4] sm:$0xf]
    %v3047 = vld [vmem:[%s14 + $0xa8] sm:$0xff]
    %v3048 = vld [vmem:[%s14 + $0xb0] sm:$0xff]
    %v3049 = vld [vmem:[%s14 + $0xb8] sm:$0xff]
    %v3050 = vld [vmem:[%s14 + $0xc0] sm:$0xf]
    %v3051 = vld [vmem:[%s14 + $0xc4] sm:$0xff]
    %v3052 = vld [vmem:[%s14 + $0xcc] sm:$0xff]
    %v3053 = vld [vmem:[%s14 + $0xd4] sm:$0xff]
    %v3054 = vld [vmem:[%s14 + $0xdc] sm:$0xf]
    %v3055 = vld [vmem:[%s14 + $0xe0] sm:$0xff]
    %v3056 = vld [vmem:[%s14 + $0xe8] sm:$0xff]
    %v3057 = vld [vmem:[%s14 + $0xf0] sm:$0xff]
    %v3058 = vld [vmem:[%s14 + $0xf8] sm:$0xf]
    %v3059 = vld [vmem:[%s14 + $0xfc] sm:$0xff]
    %v3060 = vld [vmem:[%s14 + $0x104] sm:$0xff]
    %v3061 = vld [vmem:[%s14 + $0x10c] sm:$0xff]
    %v3062 = vld [vmem:[%s14 + $0x114] sm:$0xf]
    %v3063 = vld [vmem:[%s14 + $0x118] sm:$0xff]
    %v3064 = vld [vmem:[%s14 + $0x120] sm:$0xff]
    %v3065 = vld [vmem:[%s14 + $0x128] sm:$0xff]
    %v3066 = vld [vmem:[%s14 + $0x130] sm:$0xf]
    %v3067 = vld [vmem:[%s14 + $0x134] sm:$0xff]
    %v3068 = vld [vmem:[%s14 + $0x13c] sm:$0xff]
    %v3069 = vld [vmem:[%s14 + $0x144] sm:$0xff]
    %v3070 = vld [vmem:[%s14 + $0x14c] sm:$0xf]
    %v3071 = vld [vmem:[%s14 + $0x150] sm:$0xff]
    %v3072 = vld [vmem:[%s14 + $0x158] sm:$0xff]
    %v3073 = vld [vmem:[%s14 + $0x160] sm:$0xff]
    %v3074 = vld [vmem:[%s14 + $0x168] sm:$0xf]
    %v3075 = vld [vmem:[%s14 + $0x16c] sm:$0xff]
    %v3076 = vld [vmem:[%s14 + $0x174] sm:$0xff]
    %v3077 = vld [vmem:[%s14 + $0x17c] sm:$0xff]
    %v3078 = vld [vmem:[%s14 + $0x184] sm:$0xf]
    %v3079 = vld [vmem:[%s14 + $0x188] sm:$0xff]
    %v3080 = vld [vmem:[%s14 + $0x190] sm:$0xff]
    %v3081 = vld [vmem:[%s14 + $0x198] sm:$0xff]
    %v3082 = vld [vmem:[%s14 + $0x1a0] sm:$0xf]
    %v3083 = vld [vmem:[%s14 + $0x1a4] sm:$0xff]
    %v3084 = vld [vmem:[%s14 + $0x1ac] sm:$0xff]
    %v3085 = vld [vmem:[%s14 + $0x1b4] sm:$0xff]
    %v3086 = vld [vmem:[%s14 + $0x1bc] sm:$0xf]
    %v3087 = vld [vmem:[%s14 + $0x1c0] sm:$0xff]
    %v3088 = vld [vmem:[%s14 + $0x1c8] sm:$0xff]
    %v3089 = vld [vmem:[%s14 + $0x1d0] sm:$0xff]
    %v3090 = vld [vmem:[%s14 + $0x1d8] sm:$0xf]
    %v3091 = vld [vmem:[%s14 + $0x1dc] sm:$0xff]
    %v3092 = vld [vmem:[%s14 + $0x1e4] sm:$0xff]
    %v3093 = vld [vmem:[%s14 + $0x1ec] sm:$0xff]
    %v3094 = vld [vmem:[%s14 + $0x1f4] sm:$0xf]
    %v3095 = vld [vmem:[%s14 + $0x1f8] sm:$0xff]
    %v3096 = vld [vmem:[%s14 + $0x200] sm:$0xff]
    %v3097 = vld [vmem:[%s14 + $0x208] sm:$0xff]
    %v3098 = vld [vmem:[%s14 + $0x210] sm:$0xf]
    %v3099 = vld [vmem:[%s14 + $0x214] sm:$0xff]
    %v3100 = vld [vmem:[%s14 + $0x21c] sm:$0xff]
    %v3101 = vld [vmem:[%s14 + $0x224] sm:$0xff]
    %v3102 = vld [vmem:[%s14 + $0x22c] sm:$0xf]
    %v3103 = vld [vmem:[%s14 + $0x230] sm:$0xff]
    %v3104 = vld [vmem:[%s14 + $0x238] sm:$0xff]
    %v3105 = vld [vmem:[%s14 + $0x240] sm:$0xff]
    %v3106 = vld [vmem:[%s14 + $0x248] sm:$0xf]
    %v3107 = vld [vmem:[%s14 + $0x24c] sm:$0xff]
    %v3108 = vld [vmem:[%s14 + $0x254] sm:$0xff]
    %v3109 = vld [vmem:[%s14 + $0x25c] sm:$0xff]
    %v3110 = vld [vmem:[%s14 + $0x264] sm:$0xf]
    %v3111 = vld [vmem:[%s14 + $0x268] sm:$0xff]
    %v3112 = vld [vmem:[%s14 + $0x270] sm:$0xff]
    %v3113 = vld [vmem:[%s14 + $0x278] sm:$0xff]
    %v3114 = vld [vmem:[%s14 + $0x280] sm:$0xf]
    %v3115 = vld [vmem:[%s14 + $0x284] sm:$0xff]
    %v3116 = vld [vmem:[%s14 + $0x28c] sm:$0xff]
    %v3117 = vld [vmem:[%s14 + $0x294] sm:$0xff]
    %v3118 = vld [vmem:[%s14 + $0x29c] sm:$0xf]
    %v3119 = vld [vmem:[%s14 + $0x2a0] sm:$0xff]
    %v3120 = vld [vmem:[%s14 + $0x2a8] sm:$0xff]
    %v3121 = vld [vmem:[%s14 + $0x2b0] sm:$0xff]
    %v3122 = vld [vmem:[%s14 + $0x2b8] sm:$0xf]
    %v3123 = vld [vmem:[%s14 + $0x2bc] sm:$0xff]
    %v3124 = vld [vmem:[%s14 + $0x2c4] sm:$0xff]
    %v3125 = vld [vmem:[%s14 + $0x2cc] sm:$0xff]
    %v3126 = vld [vmem:[%s14 + $0x2d4] sm:$0xf]
    %v3127 = vld [vmem:[%s14 + $0x2d8] sm:$0xff]
    %v3128 = vld [vmem:[%s14 + $0x2e0] sm:$0xff]
    %v3129 = vld [vmem:[%s14 + $0x2e8] sm:$0xff]
    %v3130 = vld [vmem:[%s14 + $0x2f0] sm:$0xf]
    %v3131 = vld [vmem:[%s14 + $0x2f4] sm:$0xff]
    %v3132 = vld [vmem:[%s14 + $0x2fc] sm:$0xff]
    %v3133 = vld [vmem:[%s14 + $0x304] sm:$0xff]
    %v3134 = vld [vmem:[%s14 + $0x30c] sm:$0xf]
    %v3135 = vld [vmem:[%s14 + $0x310] sm:$0xff]
    %v3136 = vld [vmem:[%s14 + $0x318] sm:$0xff]
    %v3137 = vld [vmem:[%s14 + $0x320] sm:$0xff]
    %v3138 = vld [vmem:[%s14 + $0x328] sm:$0xf]
    %v3139 = vld [vmem:[%s14 + $0x32c] sm:$0xff]
    %v3140 = vld [vmem:[%s14 + $0x334] sm:$0xff]
    %v3141 = vld [vmem:[%s14 + $0x33c] sm:$0xff]
    %v3142 = vld [vmem:[%s14 + $0x344] sm:$0xf]
    %v3143 = vld [vmem:[%s14 + $0x348] sm:$0xff]
    %v3144 = vld [vmem:[%s14 + $0x350] sm:$0xff]
    %v3145 = vld [vmem:[%s14 + $0x358] sm:$0xff]
    %v3146 = vld [vmem:[%s14 + $0x360] sm:$0xf]
    %v3147 = vld [vmem:[%s14 + $0x364] sm:$0xff]
    %v3148 = vld [vmem:[%s14 + $0x36c] sm:$0xff]
    %v3149 = vld [vmem:[%s14 + $0x374] sm:$0xff]
    %v3150 = vld [vmem:[%s14 + $0x37c] sm:$0xf]
    %v3151 = vld [vmem:[%s14 + $0x380] sm:$0xff]
    %v3152 = vld [vmem:[%s14 + $0x388] sm:$0xff]
    %v3153 = vld [vmem:[%s14 + $0x390] sm:$0xff]
    %v3154 = vld [vmem:[%s14 + $0x398] sm:$0xf]
    %v3155 = vld [vmem:[%s14 + $0x39c] sm:$0xff]
    %v3156 = vld [vmem:[%s14 + $0x3a4] sm:$0xff]
    %v3157 = vld [vmem:[%s14 + $0x3ac] sm:$0xff]
    %v3158 = vld [vmem:[%s14 + $0x3b4] sm:$0xf]
    %v3159 = vld [vmem:[%s14 + $0x3b8] sm:$0xff]
    %v3160 = vld [vmem:[%s14 + $0x3c0] sm:$0xff]
    %v3161 = vld [vmem:[%s14 + $0x3c8] sm:$0xff]
    %v3162 = vld [vmem:[%s14 + $0x3d0] sm:$0xf]
    %v3163 = vld [vmem:[%s14 + $0x3d4] sm:$0xff]
    %v3164 = vld [vmem:[%s14 + $0x3dc] sm:$0xff]
    %v3165 = vld [vmem:[%s14 + $0x3e4] sm:$0xff]
    %v3166 = vld [vmem:[%s14 + $0x3ec] sm:$0xf]
    %v3167 = vld [vmem:[%s14 + $0x3f0] sm:$0xff]
    %v3168 = vld [vmem:[%s14 + $0x3f8] sm:$0xff]
    %v3169 = vld [vmem:[%s14 + $0x400] sm:$0xff]
    %v3170 = vld [vmem:[%s14 + $0x408] sm:$0xf]
    %v3171 = vld [vmem:[%s14 + $0x40c] sm:$0xff]
    %v3172 = vld [vmem:[%s14 + $0x414] sm:$0xff]
    %v3173 = vld [vmem:[%s14 + $0x41c] sm:$0xff]
    %v3174 = vld [vmem:[%s14 + $0x424] sm:$0xf]
    %v3175 = vld [vmem:[%s14 + $0x428] sm:$0xff]
    %v3176 = vld [vmem:[%s14 + $0x430] sm:$0xff]
    %v3177 = vld [vmem:[%s14 + $0x438] sm:$0xff]
    %v3178 = vld [vmem:[%s14 + $0x440] sm:$0xf]
    %v3179 = vld [vmem:[%s14 + $0x444] sm:$0xff]
    %v3180 = vld [vmem:[%s14 + $0x44c] sm:$0xff]
    %v3181 = vld [vmem:[%s14 + $0x454] sm:$0xff]
    %v3182 = vld [vmem:[%s14 + $0x45c] sm:$0xf]
    %v3183 = vld [vmem:[%s14 + $0x460] sm:$0xff]
    %v3184 = vld [vmem:[%s14 + $0x468] sm:$0xff]
    %v3185 = vld [vmem:[%s14 + $0x470] sm:$0xff]
    %v3186 = vld [vmem:[%s14 + $0x478] sm:$0xf]
    %v3187 = vld [vmem:[%s14 + $0x47c] sm:$0xff]
    %v3188 = vld [vmem:[%s14 + $0x484] sm:$0xff]
    %v3189 = vld [vmem:[%s14 + $0x48c] sm:$0xff]
    %v3190 = vld [vmem:[%s14 + $0x494] sm:$0xf]
    %v3191 = vld [vmem:[%s14 + $0x498] sm:$0xff]
    %v3192 = vld [vmem:[%s14 + $0x4a0] sm:$0xff]
    %v3193 = vld [vmem:[%s14 + $0x4a8] sm:$0xff]
    %v3194 = vld [vmem:[%s14 + $0x4b0] sm:$0xf]
    %v3195 = vld [vmem:[%s14 + $0x4b4] sm:$0xff]
    %v3196 = vld [vmem:[%s14 + $0x4bc] sm:$0xff]
    %v3197 = vld [vmem:[%s14 + $0x4c4] sm:$0xff]
    %v3198 = vld [vmem:[%s14 + $0x4cc] sm:$0xf]
    %v3199 = vld [vmem:[%s14 + $0x4d0] sm:$0xff]
    %v3200 = vld [vmem:[%s14 + $0x4d8] sm:$0xff]
    %v3201 = vld [vmem:[%s14 + $0x4e0] sm:$0xff]
    %v3202 = vld [vmem:[%s14 + $0x4e8] sm:$0xf]
    %v3203 = vld [vmem:[%s14 + $0x4ec] sm:$0xff]
    %v3204 = vld [vmem:[%s14 + $0x4f4] sm:$0xff]
    %v3205 = vld [vmem:[%s14 + $0x4fc] sm:$0xff]
    %v3206 = vld [vmem:[%s14 + $0x504] sm:$0xf]
    %v3207 = vld [vmem:[%s14 + $0x508] sm:$0xff]
    %v3208 = vld [vmem:[%s14 + $0x510] sm:$0xff]
    %v3209 = vld [vmem:[%s14 + $0x518] sm:$0xff]
    %v3210 = vld [vmem:[%s14 + $0x520] sm:$0xf]
    %v3211 = vld [vmem:[%s14 + $0x524] sm:$0xff]
    %v3212 = vld [vmem:[%s14 + $0x52c] sm:$0xff]
    %v3213 = vld [vmem:[%s14 + $0x534] sm:$0xff]
    %v3214 = vld [vmem:[%s14 + $0x53c] sm:$0xf]
    %v3215 = vld [vmem:[%s14 + $0x540] sm:$0xff]
    %v3216 = vld [vmem:[%s14 + $0x548] sm:$0xff]
    %v3217 = vld [vmem:[%s14 + $0x550] sm:$0xff]
    %v3218 = vld [vmem:[%s14 + $0x558] sm:$0xf]
    %v3219 = vld [vmem:[%s14 + $0x55c] sm:$0xff]
    %v3220 = vld [vmem:[%s14 + $0x564] sm:$0xff]
    %v3221 = vld [vmem:[%s14 + $0x56c] sm:$0xff]
    %v3222 = vld [vmem:[%s14 + $0x574] sm:$0xf]
    %v3223 = vld [vmem:[%s14 + $0x578] sm:$0xff]
    %v3224 = vld [vmem:[%s14 + $0x580] sm:$0xff]
    %v3225 = vld [vmem:[%s14 + $0x588] sm:$0xff]
    %v3226 = vld [vmem:[%s14 + $0x590] sm:$0xf]
    %v3227 = vld [vmem:[%s14 + $0x594] sm:$0xff]
    %v3228 = vld [vmem:[%s14 + $0x59c] sm:$0xff]
    %v3229 = vld [vmem:[%s14 + $0x5a4] sm:$0xff]
    %v3230 = vld [vmem:[%s14 + $0x5ac] sm:$0xf]
    %v3231 = vld [vmem:[%s14 + $0x5b0] sm:$0xff]
    %v3232 = vld [vmem:[%s14 + $0x5b8] sm:$0xff]
    %v3233 = vld [vmem:[%s14 + $0x5c0] sm:$0xff]
    %v3234 = vld [vmem:[%s14 + $0x5c8] sm:$0xf]
    %v3235 = vld [vmem:[%s14 + $0x5cc] sm:$0xff]
    %v3236 = vld [vmem:[%s14 + $0x5d4] sm:$0xff]
    %v3237 = vld [vmem:[%s14 + $0x5dc] sm:$0xff]
    %v3238 = vld [vmem:[%s14 + $0x5e4] sm:$0xf]
    %v3239 = vld [vmem:[%s14 + $0x5e8] sm:$0xff]
    %v3240 = vld [vmem:[%s14 + $0x5f0] sm:$0xff]
    %v3241 = vld [vmem:[%s14 + $0x5f8] sm:$0xff]
    %v3242 = vld [vmem:[%s14 + $0x600] sm:$0xf]
    %v3243 = vld [vmem:[%s14 + $0x604] sm:$0xff]
    %v3244 = vld [vmem:[%s14 + $0x60c] sm:$0xff]
    %v3245 = vld [vmem:[%s14 + $0x614] sm:$0xff]
    %v3246 = vld [vmem:[%s14 + $0x61c] sm:$0xf]
    %v3247 = vld [vmem:[%s14 + $0x620] sm:$0xff]
    %v3248 = vld [vmem:[%s14 + $0x628] sm:$0xff]
    %v3249 = vld [vmem:[%s14 + $0x630] sm:$0xff]
    %v3250 = vld [vmem:[%s14 + $0x638] sm:$0xf]
    %v3251 = vld [vmem:[%s14 + $0x63c] sm:$0xff]
    %v3252 = vld [vmem:[%s14 + $0x644] sm:$0xff]
    %v3253 = vld [vmem:[%s14 + $0x64c] sm:$0xff]
    %v3254 = vld [vmem:[%s14 + $0x654] sm:$0xf]
    %v3255 = vld [vmem:[%s14 + $0x658] sm:$0xff]
    %v3256 = vld [vmem:[%s14 + $0x660] sm:$0xff]
    %v3257 = vld [vmem:[%s14 + $0x668] sm:$0xff]
    %v3258 = vld [vmem:[%s14 + $0x670] sm:$0xf]
    %v3259 = vld [vmem:[%s14 + $0x674] sm:$0xff]
    %v3260 = vld [vmem:[%s14 + $0x67c] sm:$0xff]
    %v3261 = vld [vmem:[%s14 + $0x684] sm:$0xff]
    %v3262 = vld [vmem:[%s14 + $0x68c] sm:$0xf]
    %v3263 = vld [vmem:[%s14 + $0x690] sm:$0xff]
    %v3264 = vld [vmem:[%s14 + $0x698] sm:$0xff]
    %v3265 = vld [vmem:[%s14 + $0x6a0] sm:$0xff]
    %v3266 = vld [vmem:[%s14 + $0x6a8] sm:$0xf]
    %v3267 = vld [vmem:[%s14 + $0x6ac] sm:$0xff]
    %v3268 = vld [vmem:[%s14 + $0x6b4] sm:$0xff]
    %v3269 = vld [vmem:[%s14 + $0x6bc] sm:$0xff]
    %v3270 = vld [vmem:[%s14 + $0x6c4] sm:$0xf]
    %v3271 = vld [vmem:[%s14 + $0x6c8] sm:$0xff]
    %v3272 = vld [vmem:[%s14 + $0x6d0] sm:$0xff]
    %v3273 = vld [vmem:[%s14 + $0x6d8] sm:$0xff]
    %v3274 = vld [vmem:[%s14 + $0x6e0] sm:$0xf]
    %v3275 = vld [vmem:[%s14 + $0x6e4] sm:$0xff]
    %v3276 = vld [vmem:[%s14 + $0x6ec] sm:$0xff]
    %v3277 = vld [vmem:[%s14 + $0x6f4] sm:$0xff]
    %v3278 = vld [vmem:[%s14 + $0x6fc] sm:$0xf]
    %v3279 = vld [vmem:[%s15] sm:$0x7f]
    %v3281 = vlaneseq
    %v3282 = vshrl.u32 %v3281, 7
    %v3283 = vsub.s32 0, %v3282
    %v3284 = vrot.slane %v3279, %v3283
    %v3285 = vlaneseq
    %v3286 = vshrl.u32 %v3285, 7
    %v3287 = vsub.s32 1, %v3286
    %v3288 = vrot.slane %v3279, %v3287
    %v3289 = vlaneseq
    %v3290 = vshrl.u32 %v3289, 7
    %v3291 = vsub.s32 2, %v3290
    %v3292 = vrot.slane %v3279, %v3291
    %v3293 = vlaneseq
    %v3294 = vshrl.u32 %v3293, 7
    %v3295 = vsub.s32 3, %v3294
    %v3296 = vrot.slane %v3279, %v3295
    %v3297 = vlaneseq
    %v3298 = vshrl.u32 %v3297, 7
    %v3299 = vsub.s32 4, %v3298
    %v3300 = vrot.slane %v3279, %v3299
    %v3301 = vlaneseq
    %v3302 = vshrl.u32 %v3301, 7
    %v3303 = vsub.s32 5, %v3302
    %v3304 = vrot.slane %v3279, %v3303
    %v3305 = vlaneseq
    %v3306 = vshrl.u32 %v3305, 7
    %v3307 = vsub.s32 6, %v3306
    %v3308 = vrot.slane %v3279, %v3307
    %v3572 = vunpack.c.l.b16 %v3023
    %v3573 = vunpack.c.h.b16 %v3023
    %v3574 = vunpack.c.l.b16 %v3024
    %v3575 = vunpack.c.h.b16 %v3024
    %v3576 = vunpack.c.l.b16 %v3025
    %v3577 = vunpack.c.h.b16 %v3025
    %v3578 = vunpack.c.l.b16 %v3026
    %v3579 = vunpack.c.l.b16 %v3027
    %v3580 = vunpack.c.h.b16 %v3027
    %v3581 = vunpack.c.l.b16 %v3028
    %v3582 = vunpack.c.h.b16 %v3028
    %v3583 = vunpack.c.l.b16 %v3029
    %v3584 = vunpack.c.h.b16 %v3029
    %v3585 = vunpack.c.l.b16 %v3030
    %v3586 = vunpack.c.l.b16 %v3031
    %v3587 = vunpack.c.h.b16 %v3031
    %v3588 = vunpack.c.l.b16 %v3032
    %v3589 = vunpack.c.h.b16 %v3032
    %v3590 = vunpack.c.l.b16 %v3033
    %v3591 = vunpack.c.h.b16 %v3033
    %v3592 = vunpack.c.l.b16 %v3034
    %v3593 = vunpack.c.l.b16 %v3035
    %v3594 = vunpack.c.h.b16 %v3035
    %v3595 = vunpack.c.l.b16 %v3036
    %v3596 = vunpack.c.h.b16 %v3036
    %v3597 = vunpack.c.l.b16 %v3037
    %v3598 = vunpack.c.h.b16 %v3037
    %v3599 = vunpack.c.l.b16 %v3038
    %v3600 = vunpack.c.l.b16 %v3039
    %v3601 = vunpack.c.h.b16 %v3039
    %v3602 = vunpack.c.l.b16 %v3040
    %v3603 = vunpack.c.h.b16 %v3040
    %v3604 = vunpack.c.l.b16 %v3041
    %v3605 = vunpack.c.h.b16 %v3041
    %v3606 = vunpack.c.l.b16 %v3042
    %v3607 = vunpack.c.l.b16 %v3043
    %v3608 = vunpack.c.h.b16 %v3043
    %v3609 = vunpack.c.l.b16 %v3044
    %v3610 = vunpack.c.h.b16 %v3044
    %v3611 = vunpack.c.l.b16 %v3045
    %v3612 = vunpack.c.h.b16 %v3045
    %v3613 = vunpack.c.l.b16 %v3046
    %v3614 = vunpack.c.l.b16 %v3047
    %v3615 = vunpack.c.h.b16 %v3047
    %v3616 = vunpack.c.l.b16 %v3048
    %v3617 = vunpack.c.h.b16 %v3048
    %v3618 = vunpack.c.l.b16 %v3049
    %v3619 = vunpack.c.h.b16 %v3049
    %v3620 = vunpack.c.l.b16 %v3050
    %v3621 = vunpack.c.l.b16 %v3051
    %v3622 = vunpack.c.h.b16 %v3051
    %v3623 = vunpack.c.l.b16 %v3052
    %v3624 = vunpack.c.h.b16 %v3052
    %v3625 = vunpack.c.l.b16 %v3053
    %v3626 = vunpack.c.h.b16 %v3053
    %v3627 = vunpack.c.l.b16 %v3054
    %v3628 = vunpack.c.l.b16 %v3055
    %v3629 = vunpack.c.h.b16 %v3055
    %v3630 = vunpack.c.l.b16 %v3056
    %v3631 = vunpack.c.h.b16 %v3056
    %v3632 = vunpack.c.l.b16 %v3057
    %v3633 = vunpack.c.h.b16 %v3057
    %v3634 = vunpack.c.l.b16 %v3058
    %v3635 = vunpack.c.l.b16 %v3059
    %v3636 = vunpack.c.h.b16 %v3059
    %v3637 = vunpack.c.l.b16 %v3060
    %v3638 = vunpack.c.h.b16 %v3060
    %v3639 = vunpack.c.l.b16 %v3061
    %v3640 = vunpack.c.h.b16 %v3061
    %v3641 = vunpack.c.l.b16 %v3062
    %v3642 = vunpack.c.l.b16 %v3063
    %v3643 = vunpack.c.h.b16 %v3063
    %v3644 = vunpack.c.l.b16 %v3064
    %v3645 = vunpack.c.h.b16 %v3064
    %v3646 = vunpack.c.l.b16 %v3065
    %v3647 = vunpack.c.h.b16 %v3065
    %v3648 = vunpack.c.l.b16 %v3066
    %v3649 = vunpack.c.l.b16 %v3067
    %v3650 = vunpack.c.h.b16 %v3067
    %v3651 = vunpack.c.l.b16 %v3068
    %v3652 = vunpack.c.h.b16 %v3068
    %v3653 = vunpack.c.l.b16 %v3069
    %v3654 = vunpack.c.h.b16 %v3069
    %v3655 = vunpack.c.l.b16 %v3070
    %v3656 = vunpack.c.l.b16 %v3071
    %v3657 = vunpack.c.h.b16 %v3071
    %v3658 = vunpack.c.l.b16 %v3072
    %v3659 = vunpack.c.h.b16 %v3072
    %v3660 = vunpack.c.l.b16 %v3073
    %v3661 = vunpack.c.h.b16 %v3073
    %v3662 = vunpack.c.l.b16 %v3074
    %v3663 = vunpack.c.l.b16 %v3075
    %v3664 = vunpack.c.h.b16 %v3075
    %v3665 = vunpack.c.l.b16 %v3076
    %v3666 = vunpack.c.h.b16 %v3076
    %v3667 = vunpack.c.l.b16 %v3077
    %v3668 = vunpack.c.h.b16 %v3077
    %v3669 = vunpack.c.l.b16 %v3078
    %v3670 = vunpack.c.l.b16 %v3079
    %v3671 = vunpack.c.h.b16 %v3079
    %v3672 = vunpack.c.l.b16 %v3080
    %v3673 = vunpack.c.h.b16 %v3080
    %v3674 = vunpack.c.l.b16 %v3081
    %v3675 = vunpack.c.h.b16 %v3081
    %v3676 = vunpack.c.l.b16 %v3082
    %v3677 = vunpack.c.l.b16 %v3083
    %v3678 = vunpack.c.h.b16 %v3083
    %v3679 = vunpack.c.l.b16 %v3084
    %v3680 = vunpack.c.h.b16 %v3084
    %v3681 = vunpack.c.l.b16 %v3085
    %v3682 = vunpack.c.h.b16 %v3085
    %v3683 = vunpack.c.l.b16 %v3086
    %v3684 = vunpack.c.l.b16 %v3087
    %v3685 = vunpack.c.h.b16 %v3087
    %v3686 = vunpack.c.l.b16 %v3088
    %v3687 = vunpack.c.h.b16 %v3088
    %v3688 = vunpack.c.l.b16 %v3089
    %v3689 = vunpack.c.h.b16 %v3089
    %v3690 = vunpack.c.l.b16 %v3090
    %v3691 = vunpack.c.l.b16 %v3091
    %v3692 = vunpack.c.h.b16 %v3091
    %v3693 = vunpack.c.l.b16 %v3092
    %v3694 = vunpack.c.h.b16 %v3092
    %v3695 = vunpack.c.l.b16 %v3093
    %v3696 = vunpack.c.h.b16 %v3093
    %v3697 = vunpack.c.l.b16 %v3094
    %v3698 = vunpack.c.l.b16 %v3095
    %v3699 = vunpack.c.h.b16 %v3095
    %v3700 = vunpack.c.l.b16 %v3096
    %v3701 = vunpack.c.h.b16 %v3096
    %v3702 = vunpack.c.l.b16 %v3097
    %v3703 = vunpack.c.h.b16 %v3097
    %v3704 = vunpack.c.l.b16 %v3098
    %v3705 = vunpack.c.l.b16 %v3099
    %v3706 = vunpack.c.h.b16 %v3099
    %v3707 = vunpack.c.l.b16 %v3100
    %v3708 = vunpack.c.h.b16 %v3100
    %v3709 = vunpack.c.l.b16 %v3101
    %v3710 = vunpack.c.h.b16 %v3101
    %v3711 = vunpack.c.l.b16 %v3102
    %v3712 = vunpack.c.l.b16 %v3103
    %v3713 = vunpack.c.h.b16 %v3103
    %v3714 = vunpack.c.l.b16 %v3104
    %v3715 = vunpack.c.h.b16 %v3104
    %v3716 = vunpack.c.l.b16 %v3105
    %v3717 = vunpack.c.h.b16 %v3105
    %v3718 = vunpack.c.l.b16 %v3106
    %v3719 = vunpack.c.l.b16 %v3107
    %v3720 = vunpack.c.h.b16 %v3107
    %v3721 = vunpack.c.l.b16 %v3108
    %v3722 = vunpack.c.h.b16 %v3108
    %v3723 = vunpack.c.l.b16 %v3109
    %v3724 = vunpack.c.h.b16 %v3109
    %v3725 = vunpack.c.l.b16 %v3110
    %v3726 = vunpack.c.l.b16 %v3111
    %v3727 = vunpack.c.h.b16 %v3111
    %v3728 = vunpack.c.l.b16 %v3112
    %v3729 = vunpack.c.h.b16 %v3112
    %v3730 = vunpack.c.l.b16 %v3113
    %v3731 = vunpack.c.h.b16 %v3113
    %v3732 = vunpack.c.l.b16 %v3114
    %v3733 = vunpack.c.l.b16 %v3115
    %v3734 = vunpack.c.h.b16 %v3115
    %v3735 = vunpack.c.l.b16 %v3116
    %v3736 = vunpack.c.h.b16 %v3116
    %v3737 = vunpack.c.l.b16 %v3117
    %v3738 = vunpack.c.h.b16 %v3117
    %v3739 = vunpack.c.l.b16 %v3118
    %v3740 = vunpack.c.l.b16 %v3119
    %v3741 = vunpack.c.h.b16 %v3119
    %v3742 = vunpack.c.l.b16 %v3120
    %v3743 = vunpack.c.h.b16 %v3120
    %v3744 = vunpack.c.l.b16 %v3121
    %v3745 = vunpack.c.h.b16 %v3121
    %v3746 = vunpack.c.l.b16 %v3122
    %v3747 = vunpack.c.l.b16 %v3123
    %v3748 = vunpack.c.h.b16 %v3123
    %v3749 = vunpack.c.l.b16 %v3124
    %v3750 = vunpack.c.h.b16 %v3124
    %v3751 = vunpack.c.l.b16 %v3125
    %v3752 = vunpack.c.h.b16 %v3125
    %v3753 = vunpack.c.l.b16 %v3126
    %v3754 = vunpack.c.l.b16 %v3127
    %v3755 = vunpack.c.h.b16 %v3127
    %v3756 = vunpack.c.l.b16 %v3128
    %v3757 = vunpack.c.h.b16 %v3128
    %v3758 = vunpack.c.l.b16 %v3129
    %v3759 = vunpack.c.h.b16 %v3129
    %v3760 = vunpack.c.l.b16 %v3130
    %v3761 = vunpack.c.l.b16 %v3131
    %v3762 = vunpack.c.h.b16 %v3131
    %v3763 = vunpack.c.l.b16 %v3132
    %v3764 = vunpack.c.h.b16 %v3132
    %v3765 = vunpack.c.l.b16 %v3133
    %v3766 = vunpack.c.h.b16 %v3133
    %v3767 = vunpack.c.l.b16 %v3134
    %v3768 = vunpack.c.l.b16 %v3135
    %v3769 = vunpack.c.h.b16 %v3135
    %v3770 = vunpack.c.l.b16 %v3136
    %v3771 = vunpack.c.h.b16 %v3136
    %v3772 = vunpack.c.l.b16 %v3137
    %v3773 = vunpack.c.h.b16 %v3137
    %v3774 = vunpack.c.l.b16 %v3138
    %v3775 = vunpack.c.l.b16 %v3139
    %v3776 = vunpack.c.h.b16 %v3139
    %v3777 = vunpack.c.l.b16 %v3140
    %v3778 = vunpack.c.h.b16 %v3140
    %v3779 = vunpack.c.l.b16 %v3141
    %v3780 = vunpack.c.h.b16 %v3141
    %v3781 = vunpack.c.l.b16 %v3142
    %v3782 = vunpack.c.l.b16 %v3143
    %v3783 = vunpack.c.h.b16 %v3143
    %v3784 = vunpack.c.l.b16 %v3144
    %v3785 = vunpack.c.h.b16 %v3144
    %v3786 = vunpack.c.l.b16 %v3145
    %v3787 = vunpack.c.h.b16 %v3145
    %v3788 = vunpack.c.l.b16 %v3146
    %v3789 = vunpack.c.l.b16 %v3147
    %v3790 = vunpack.c.h.b16 %v3147
    %v3791 = vunpack.c.l.b16 %v3148
    %v3792 = vunpack.c.h.b16 %v3148
    %v3793 = vunpack.c.l.b16 %v3149
    %v3794 = vunpack.c.h.b16 %v3149
    %v3795 = vunpack.c.l.b16 %v3150
    %v3796 = vunpack.c.l.b16 %v3151
    %v3797 = vunpack.c.h.b16 %v3151
    %v3798 = vunpack.c.l.b16 %v3152
    %v3799 = vunpack.c.h.b16 %v3152
    %v3800 = vunpack.c.l.b16 %v3153
    %v3801 = vunpack.c.h.b16 %v3153
    %v3802 = vunpack.c.l.b16 %v3154
    %v3803 = vunpack.c.l.b16 %v3155
    %v3804 = vunpack.c.h.b16 %v3155
    %v3805 = vunpack.c.l.b16 %v3156
    %v3806 = vunpack.c.h.b16 %v3156
    %v3807 = vunpack.c.l.b16 %v3157
    %v3808 = vunpack.c.h.b16 %v3157
    %v3809 = vunpack.c.l.b16 %v3158
    %v3810 = vunpack.c.l.b16 %v3159
    %v3811 = vunpack.c.h.b16 %v3159
    %v3812 = vunpack.c.l.b16 %v3160
    %v3813 = vunpack.c.h.b16 %v3160
    %v3814 = vunpack.c.l.b16 %v3161
    %v3815 = vunpack.c.h.b16 %v3161
    %v3816 = vunpack.c.l.b16 %v3162
    %v3817 = vunpack.c.l.b16 %v3163
    %v3818 = vunpack.c.h.b16 %v3163
    %v3819 = vunpack.c.l.b16 %v3164
    %v3820 = vunpack.c.h.b16 %v3164
    %v3821 = vunpack.c.l.b16 %v3165
    %v3822 = vunpack.c.h.b16 %v3165
    %v3823 = vunpack.c.l.b16 %v3166
    %v3824 = vunpack.c.l.b16 %v3167
    %v3825 = vunpack.c.h.b16 %v3167
    %v3826 = vunpack.c.l.b16 %v3168
    %v3827 = vunpack.c.h.b16 %v3168
    %v3828 = vunpack.c.l.b16 %v3169
    %v3829 = vunpack.c.h.b16 %v3169
    %v3830 = vunpack.c.l.b16 %v3170
    %v3831 = vunpack.c.l.b16 %v3171
    %v3832 = vunpack.c.h.b16 %v3171
    %v3833 = vunpack.c.l.b16 %v3172
    %v3834 = vunpack.c.h.b16 %v3172
    %v3835 = vunpack.c.l.b16 %v3173
    %v3836 = vunpack.c.h.b16 %v3173
    %v3837 = vunpack.c.l.b16 %v3174
    %v3838 = vunpack.c.l.b16 %v3175
    %v3839 = vunpack.c.h.b16 %v3175
    %v3840 = vunpack.c.l.b16 %v3176
    %v3841 = vunpack.c.h.b16 %v3176
    %v3842 = vunpack.c.l.b16 %v3177
    %v3843 = vunpack.c.h.b16 %v3177
    %v3844 = vunpack.c.l.b16 %v3178
    %v3845 = vunpack.c.l.b16 %v3179
    %v3846 = vunpack.c.h.b16 %v3179
    %v3847 = vunpack.c.l.b16 %v3180
    %v3848 = vunpack.c.h.b16 %v3180
    %v3849 = vunpack.c.l.b16 %v3181
    %v3850 = vunpack.c.h.b16 %v3181
    %v3851 = vunpack.c.l.b16 %v3182
    %v3852 = vunpack.c.l.b16 %v3183
    %v3853 = vunpack.c.h.b16 %v3183
    %v3854 = vunpack.c.l.b16 %v3184
    %v3855 = vunpack.c.h.b16 %v3184
    %v3856 = vunpack.c.l.b16 %v3185
    %v3857 = vunpack.c.h.b16 %v3185
    %v3858 = vunpack.c.l.b16 %v3186
    %v3859 = vunpack.c.l.b16 %v3187
    %v3860 = vunpack.c.h.b16 %v3187
    %v3861 = vunpack.c.l.b16 %v3188
    %v3862 = vunpack.c.h.b16 %v3188
    %v3863 = vunpack.c.l.b16 %v3189
    %v3864 = vunpack.c.h.b16 %v3189
    %v3865 = vunpack.c.l.b16 %v3190
    %v3866 = vunpack.c.l.b16 %v3191
    %v3867 = vunpack.c.h.b16 %v3191
    %v3868 = vunpack.c.l.b16 %v3192
    %v3869 = vunpack.c.h.b16 %v3192
    %v3870 = vunpack.c.l.b16 %v3193
    %v3871 = vunpack.c.h.b16 %v3193
    %v3872 = vunpack.c.l.b16 %v3194
    %v3873 = vunpack.c.l.b16 %v3195
    %v3874 = vunpack.c.h.b16 %v3195
    %v3875 = vunpack.c.l.b16 %v3196
    %v3876 = vunpack.c.h.b16 %v3196
    %v3877 = vunpack.c.l.b16 %v3197
    %v3878 = vunpack.c.h.b16 %v3197
    %v3879 = vunpack.c.l.b16 %v3198
    %v3880 = vunpack.c.l.b16 %v3199
    %v3881 = vunpack.c.h.b16 %v3199
    %v3882 = vunpack.c.l.b16 %v3200
    %v3883 = vunpack.c.h.b16 %v3200
    %v3884 = vunpack.c.l.b16 %v3201
    %v3885 = vunpack.c.h.b16 %v3201
    %v3886 = vunpack.c.l.b16 %v3202
    %v3887 = vunpack.c.l.b16 %v3203
    %v3888 = vunpack.c.h.b16 %v3203
    %v3889 = vunpack.c.l.b16 %v3204
    %v3890 = vunpack.c.h.b16 %v3204
    %v3891 = vunpack.c.l.b16 %v3205
    %v3892 = vunpack.c.h.b16 %v3205
    %v3893 = vunpack.c.l.b16 %v3206
    %v3894 = vunpack.c.l.b16 %v3207
    %v3895 = vunpack.c.h.b16 %v3207
    %v3896 = vunpack.c.l.b16 %v3208
    %v3897 = vunpack.c.h.b16 %v3208
    %v3898 = vunpack.c.l.b16 %v3209
    %v3899 = vunpack.c.h.b16 %v3209
    %v3900 = vunpack.c.l.b16 %v3210
    %v3901 = vunpack.c.l.b16 %v3211
    %v3902 = vunpack.c.h.b16 %v3211
    %v3903 = vunpack.c.l.b16 %v3212
    %v3904 = vunpack.c.h.b16 %v3212
    %v3905 = vunpack.c.l.b16 %v3213
    %v3906 = vunpack.c.h.b16 %v3213
    %v3907 = vunpack.c.l.b16 %v3214
    %v3908 = vunpack.c.l.b16 %v3215
    %v3909 = vunpack.c.h.b16 %v3215
    %v3910 = vunpack.c.l.b16 %v3216
    %v3911 = vunpack.c.h.b16 %v3216
    %v3912 = vunpack.c.l.b16 %v3217
    %v3913 = vunpack.c.h.b16 %v3217
    %v3914 = vunpack.c.l.b16 %v3218
    %v3915 = vunpack.c.l.b16 %v3219
    %v3916 = vunpack.c.h.b16 %v3219
    %v3917 = vunpack.c.l.b16 %v3220
    %v3918 = vunpack.c.h.b16 %v3220
    %v3919 = vunpack.c.l.b16 %v3221
    %v3920 = vunpack.c.h.b16 %v3221
    %v3921 = vunpack.c.l.b16 %v3222
    %v3922 = vunpack.c.l.b16 %v3223
    %v3923 = vunpack.c.h.b16 %v3223
    %v3924 = vunpack.c.l.b16 %v3224
    %v3925 = vunpack.c.h.b16 %v3224
    %v3926 = vunpack.c.l.b16 %v3225
    %v3927 = vunpack.c.h.b16 %v3225
    %v3928 = vunpack.c.l.b16 %v3226
    %v3929 = vunpack.c.l.b16 %v3227
    %v3930 = vunpack.c.h.b16 %v3227
    %v3931 = vunpack.c.l.b16 %v3228
    %v3932 = vunpack.c.h.b16 %v3228
    %v3933 = vunpack.c.l.b16 %v3229
    %v3934 = vunpack.c.h.b16 %v3229
    %v3935 = vunpack.c.l.b16 %v3230
    %v3936 = vunpack.c.l.b16 %v3231
    %v3937 = vunpack.c.h.b16 %v3231
    %v3938 = vunpack.c.l.b16 %v3232
    %v3939 = vunpack.c.h.b16 %v3232
    %v3940 = vunpack.c.l.b16 %v3233
    %v3941 = vunpack.c.h.b16 %v3233
    %v3942 = vunpack.c.l.b16 %v3234
    %v3943 = vunpack.c.l.b16 %v3235
    %v3944 = vunpack.c.h.b16 %v3235
    %v3945 = vunpack.c.l.b16 %v3236
    %v3946 = vunpack.c.h.b16 %v3236
    %v3947 = vunpack.c.l.b16 %v3237
    %v3948 = vunpack.c.h.b16 %v3237
    %v3949 = vunpack.c.l.b16 %v3238
    %v3950 = vunpack.c.l.b16 %v3239
    %v3951 = vunpack.c.h.b16 %v3239
    %v3952 = vunpack.c.l.b16 %v3240
    %v3953 = vunpack.c.h.b16 %v3240
    %v3954 = vunpack.c.l.b16 %v3241
    %v3955 = vunpack.c.h.b16 %v3241
    %v3956 = vunpack.c.l.b16 %v3242
    %v3957 = vunpack.c.l.b16 %v3243
    %v3958 = vunpack.c.h.b16 %v3243
    %v3959 = vunpack.c.l.b16 %v3244
    %v3960 = vunpack.c.h.b16 %v3244
    %v3961 = vunpack.c.l.b16 %v3245
    %v3962 = vunpack.c.h.b16 %v3245
    %v3963 = vunpack.c.l.b16 %v3246
    %v3964 = vunpack.c.l.b16 %v3247
    %v3965 = vunpack.c.h.b16 %v3247
    %v3966 = vunpack.c.l.b16 %v3248
    %v3967 = vunpack.c.h.b16 %v3248
    %v3968 = vunpack.c.l.b16 %v3249
    %v3969 = vunpack.c.h.b16 %v3249
    %v3970 = vunpack.c.l.b16 %v3250
    %v3971 = vunpack.c.l.b16 %v3251
    %v3972 = vunpack.c.h.b16 %v3251
    %v3973 = vunpack.c.l.b16 %v3252
    %v3974 = vunpack.c.h.b16 %v3252
    %v3975 = vunpack.c.l.b16 %v3253
    %v3976 = vunpack.c.h.b16 %v3253
    %v3977 = vunpack.c.l.b16 %v3254
    %v3978 = vunpack.c.l.b16 %v3255
    %v3979 = vunpack.c.h.b16 %v3255
    %v3980 = vunpack.c.l.b16 %v3256
    %v3981 = vunpack.c.h.b16 %v3256
    %v3982 = vunpack.c.l.b16 %v3257
    %v3983 = vunpack.c.h.b16 %v3257
    %v3984 = vunpack.c.l.b16 %v3258
    %v3985 = vunpack.c.l.b16 %v3259
    %v3986 = vunpack.c.h.b16 %v3259
    %v3987 = vunpack.c.l.b16 %v3260
    %v3988 = vunpack.c.h.b16 %v3260
    %v3989 = vunpack.c.l.b16 %v3261
    %v3990 = vunpack.c.h.b16 %v3261
    %v3991 = vunpack.c.l.b16 %v3262
    %v3992 = vunpack.c.l.b16 %v3263
    %v3993 = vunpack.c.h.b16 %v3263
    %v3994 = vunpack.c.l.b16 %v3264
    %v3995 = vunpack.c.h.b16 %v3264
    %v3996 = vunpack.c.l.b16 %v3265
    %v3997 = vunpack.c.h.b16 %v3265
    %v3998 = vunpack.c.l.b16 %v3266
    %v3999 = vunpack.c.l.b16 %v3267
    %v4000 = vunpack.c.h.b16 %v3267
    %v4001 = vunpack.c.l.b16 %v3268
    %v4002 = vunpack.c.h.b16 %v3268
    %v4003 = vunpack.c.l.b16 %v3269
    %v4004 = vunpack.c.h.b16 %v3269
    %v4005 = vunpack.c.l.b16 %v3270
    %v4006 = vunpack.c.l.b16 %v3271
    %v4007 = vunpack.c.h.b16 %v3271
    %v4008 = vunpack.c.l.b16 %v3272
    %v4009 = vunpack.c.h.b16 %v3272
    %v4010 = vunpack.c.l.b16 %v3273
    %v4011 = vunpack.c.h.b16 %v3273
    %v4012 = vunpack.c.l.b16 %v3274
    %v4013 = vunpack.c.l.b16 %v3275
    %v4014 = vunpack.c.h.b16 %v3275
    %v4015 = vunpack.c.l.b16 %v3276
    %v4016 = vunpack.c.h.b16 %v3276
    %v4017 = vunpack.c.l.b16 %v3277
    %v4018 = vunpack.c.h.b16 %v3277
    %v4019 = vunpack.c.l.b16 %v3278
    %v4020 = vpack.c.b16 %v3579, %v3572
    %v4021 = vpack.c.b16 %v3580, %v3573
    %v4022 = vpack.c.b16 %v3581, %v3574
    %v4023 = vpack.c.b16 %v3582, %v3575
    %v4024 = vpack.c.b16 %v3583, %v3576
    %v4025 = vpack.c.b16 %v3584, %v3577
    %v4026 = vpack.c.b16 %v3585, %v3578
    %v4027 = vpack.c.b16 %v3593, %v3586
    %v4028 = vpack.c.b16 %v3594, %v3587
    %v4029 = vpack.c.b16 %v3595, %v3588
    %v4030 = vpack.c.b16 %v3596, %v3589
    %v4031 = vpack.c.b16 %v3597, %v3590
    %v4032 = vpack.c.b16 %v3598, %v3591
    %v4033 = vpack.c.b16 %v3599, %v3592
    %v4034 = vpack.c.b16 %v3607, %v3600
    %v4035 = vpack.c.b16 %v3608, %v3601
    %v4036 = vpack.c.b16 %v3609, %v3602
    %v4037 = vpack.c.b16 %v3610, %v3603
    %v4038 = vpack.c.b16 %v3611, %v3604
    %v4039 = vpack.c.b16 %v3612, %v3605
    %v4040 = vpack.c.b16 %v3613, %v3606
    %v4041 = vpack.c.b16 %v3621, %v3614
    %v4042 = vpack.c.b16 %v3622, %v3615
    %v4043 = vpack.c.b16 %v3623, %v3616
    %v4044 = vpack.c.b16 %v3624, %v3617
    %v4045 = vpack.c.b16 %v3625, %v3618
    %v4046 = vpack.c.b16 %v3626, %v3619
    %v4047 = vpack.c.b16 %v3627, %v3620
    %v4048 = vpack.c.b16 %v3635, %v3628
    %v4049 = vpack.c.b16 %v3636, %v3629
    %v4050 = vpack.c.b16 %v3637, %v3630
    %v4051 = vpack.c.b16 %v3638, %v3631
    %v4052 = vpack.c.b16 %v3639, %v3632
    %v4053 = vpack.c.b16 %v3640, %v3633
    %v4054 = vpack.c.b16 %v3641, %v3634
    %v4055 = vpack.c.b16 %v3649, %v3642
    %v4056 = vpack.c.b16 %v3650, %v3643
    %v4057 = vpack.c.b16 %v3651, %v3644
    %v4058 = vpack.c.b16 %v3652, %v3645
    %v4059 = vpack.c.b16 %v3653, %v3646
    %v4060 = vpack.c.b16 %v3654, %v3647
    %v4061 = vpack.c.b16 %v3655, %v3648
    %v4062 = vpack.c.b16 %v3663, %v3656
    %v4063 = vpack.c.b16 %v3664, %v3657
    %v4064 = vpack.c.b16 %v3665, %v3658
    %v4065 = vpack.c.b16 %v3666, %v3659
    %v4066 = vpack.c.b16 %v3667, %v3660
    %v4067 = vpack.c.b16 %v3668, %v3661
    %v4068 = vpack.c.b16 %v3669, %v3662
    %v4069 = vpack.c.b16 %v3677, %v3670
    %v4070 = vpack.c.b16 %v3678, %v3671
    %v4071 = vpack.c.b16 %v3679, %v3672
    %v4072 = vpack.c.b16 %v3680, %v3673
    %v4073 = vpack.c.b16 %v3681, %v3674
    %v4074 = vpack.c.b16 %v3682, %v3675
    %v4075 = vpack.c.b16 %v3683, %v3676
    %v4076 = vpack.c.b16 %v3691, %v3684
    %v4077 = vpack.c.b16 %v3692, %v3685
    %v4078 = vpack.c.b16 %v3693, %v3686
    %v4079 = vpack.c.b16 %v3694, %v3687
    %v4080 = vpack.c.b16 %v3695, %v3688
    %v4081 = vpack.c.b16 %v3696, %v3689
    %v4082 = vpack.c.b16 %v3697, %v3690
    %v4083 = vpack.c.b16 %v3705, %v3698
    %v4084 = vpack.c.b16 %v3706, %v3699
    %v4085 = vpack.c.b16 %v3707, %v3700
    %v4086 = vpack.c.b16 %v3708, %v3701
    %v4087 = vpack.c.b16 %v3709, %v3702
    %v4088 = vpack.c.b16 %v3710, %v3703
    %v4089 = vpack.c.b16 %v3711, %v3704
    %v4090 = vpack.c.b16 %v3719, %v3712
    %v4091 = vpack.c.b16 %v3720, %v3713
    %v4092 = vpack.c.b16 %v3721, %v3714
    %v4093 = vpack.c.b16 %v3722, %v3715
    %v4094 = vpack.c.b16 %v3723, %v3716
    %v4095 = vpack.c.b16 %v3724, %v3717
    %v4096 = vpack.c.b16 %v3725, %v3718
    %v4097 = vpack.c.b16 %v3733, %v3726
    %v4098 = vpack.c.b16 %v3734, %v3727
    %v4099 = vpack.c.b16 %v3735, %v3728
    %v4100 = vpack.c.b16 %v3736, %v3729
    %v4101 = vpack.c.b16 %v3737, %v3730
    %v4102 = vpack.c.b16 %v3738, %v3731
    %v4103 = vpack.c.b16 %v3739, %v3732
    %v4104 = vpack.c.b16 %v3747, %v3740
    %v4105 = vpack.c.b16 %v3748, %v3741
    %v4106 = vpack.c.b16 %v3749, %v3742
    %v4107 = vpack.c.b16 %v3750, %v3743
    %v4108 = vpack.c.b16 %v3751, %v3744
    %v4109 = vpack.c.b16 %v3752, %v3745
    %v4110 = vpack.c.b16 %v3753, %v3746
    %v4111 = vpack.c.b16 %v3761, %v3754
    %v4112 = vpack.c.b16 %v3762, %v3755
    %v4113 = vpack.c.b16 %v3763, %v3756
    %v4114 = vpack.c.b16 %v3764, %v3757
    %v4115 = vpack.c.b16 %v3765, %v3758
    %v4116 = vpack.c.b16 %v3766, %v3759
    %v4117 = vpack.c.b16 %v3767, %v3760
    %v4118 = vpack.c.b16 %v3775, %v3768
    %v4119 = vpack.c.b16 %v3776, %v3769
    %v4120 = vpack.c.b16 %v3777, %v3770
    %v4121 = vpack.c.b16 %v3778, %v3771
    %v4122 = vpack.c.b16 %v3779, %v3772
    %v4123 = vpack.c.b16 %v3780, %v3773
    %v4124 = vpack.c.b16 %v3781, %v3774
    %v4125 = vpack.c.b16 %v3789, %v3782
    %v4126 = vpack.c.b16 %v3790, %v3783
    %v4127 = vpack.c.b16 %v3791, %v3784
    %v4128 = vpack.c.b16 %v3792, %v3785
    %v4129 = vpack.c.b16 %v3793, %v3786
    %v4130 = vpack.c.b16 %v3794, %v3787
    %v4131 = vpack.c.b16 %v3795, %v3788
    %v4132 = vpack.c.b16 %v3803, %v3796
    %v4133 = vpack.c.b16 %v3804, %v3797
    %v4134 = vpack.c.b16 %v3805, %v3798
    %v4135 = vpack.c.b16 %v3806, %v3799
    %v4136 = vpack.c.b16 %v3807, %v3800
    %v4137 = vpack.c.b16 %v3808, %v3801
    %v4138 = vpack.c.b16 %v3809, %v3802
    %v4139 = vpack.c.b16 %v3817, %v3810
    %v4140 = vpack.c.b16 %v3818, %v3811
    %v4141 = vpack.c.b16 %v3819, %v3812
    %v4142 = vpack.c.b16 %v3820, %v3813
    %v4143 = vpack.c.b16 %v3821, %v3814
    %v4144 = vpack.c.b16 %v3822, %v3815
    %v4145 = vpack.c.b16 %v3823, %v3816
    %v4146 = vpack.c.b16 %v3831, %v3824
    %v4147 = vpack.c.b16 %v3832, %v3825
    %v4148 = vpack.c.b16 %v3833, %v3826
    %v4149 = vpack.c.b16 %v3834, %v3827
    %v4150 = vpack.c.b16 %v3835, %v3828
    %v4151 = vpack.c.b16 %v3836, %v3829
    %v4152 = vpack.c.b16 %v3837, %v3830
    %v4153 = vpack.c.b16 %v3845, %v3838
    %v4154 = vpack.c.b16 %v3846, %v3839
    %v4155 = vpack.c.b16 %v3847, %v3840
    %v4156 = vpack.c.b16 %v3848, %v3841
    %v4157 = vpack.c.b16 %v3849, %v3842
    %v4158 = vpack.c.b16 %v3850, %v3843
    %v4159 = vpack.c.b16 %v3851, %v3844
    %v4160 = vpack.c.b16 %v3859, %v3852
    %v4161 = vpack.c.b16 %v3860, %v3853
    %v4162 = vpack.c.b16 %v3861, %v3854
    %v4163 = vpack.c.b16 %v3862, %v3855
    %v4164 = vpack.c.b16 %v3863, %v3856
    %v4165 = vpack.c.b16 %v3864, %v3857
    %v4166 = vpack.c.b16 %v3865, %v3858
    %v4167 = vpack.c.b16 %v3873, %v3866
    %v4168 = vpack.c.b16 %v3874, %v3867
    %v4169 = vpack.c.b16 %v3875, %v3868
    %v4170 = vpack.c.b16 %v3876, %v3869
    %v4171 = vpack.c.b16 %v3877, %v3870
    %v4172 = vpack.c.b16 %v3878, %v3871
    %v4173 = vpack.c.b16 %v3879, %v3872
    %v4174 = vpack.c.b16 %v3887, %v3880
    %v4175 = vpack.c.b16 %v3888, %v3881
    %v4176 = vpack.c.b16 %v3889, %v3882
    %v4177 = vpack.c.b16 %v3890, %v3883
    %v4178 = vpack.c.b16 %v3891, %v3884
    %v4179 = vpack.c.b16 %v3892, %v3885
    %v4180 = vpack.c.b16 %v3893, %v3886
    %v4181 = vpack.c.b16 %v3901, %v3894
    %v4182 = vpack.c.b16 %v3902, %v3895
    %v4183 = vpack.c.b16 %v3903, %v3896
    %v4184 = vpack.c.b16 %v3904, %v3897
    %v4185 = vpack.c.b16 %v3905, %v3898
    %v4186 = vpack.c.b16 %v3906, %v3899
    %v4187 = vpack.c.b16 %v3907, %v3900
    %v4188 = vpack.c.b16 %v3915, %v3908
    %v4189 = vpack.c.b16 %v3916, %v3909
    %v4190 = vpack.c.b16 %v3917, %v3910
    %v4191 = vpack.c.b16 %v3918, %v3911
    %v4192 = vpack.c.b16 %v3919, %v3912
    %v4193 = vpack.c.b16 %v3920, %v3913
    %v4194 = vpack.c.b16 %v3921, %v3914
    %v4195 = vpack.c.b16 %v3929, %v3922
    %v4196 = vpack.c.b16 %v3930, %v3923
    %v4197 = vpack.c.b16 %v3931, %v3924
    %v4198 = vpack.c.b16 %v3932, %v3925
    %v4199 = vpack.c.b16 %v3933, %v3926
    %v4200 = vpack.c.b16 %v3934, %v3927
    %v4201 = vpack.c.b16 %v3935, %v3928
    %v4202 = vpack.c.b16 %v3943, %v3936
    %v4203 = vpack.c.b16 %v3944, %v3937
    %v4204 = vpack.c.b16 %v3945, %v3938
    %v4205 = vpack.c.b16 %v3946, %v3939
    %v4206 = vpack.c.b16 %v3947, %v3940
    %v4207 = vpack.c.b16 %v3948, %v3941
    %v4208 = vpack.c.b16 %v3949, %v3942
    %v4209 = vpack.c.b16 %v3957, %v3950
    %v4210 = vpack.c.b16 %v3958, %v3951
    %v4211 = vpack.c.b16 %v3959, %v3952
    %v4212 = vpack.c.b16 %v3960, %v3953
    %v4213 = vpack.c.b16 %v3961, %v3954
    %v4214 = vpack.c.b16 %v3962, %v3955
    %v4215 = vpack.c.b16 %v3963, %v3956
    %v4216 = vpack.c.b16 %v3971, %v3964
    %v4217 = vpack.c.b16 %v3972, %v3965
    %v4218 = vpack.c.b16 %v3973, %v3966
    %v4219 = vpack.c.b16 %v3974, %v3967
    %v4220 = vpack.c.b16 %v3975, %v3968
    %v4221 = vpack.c.b16 %v3976, %v3969
    %v4222 = vpack.c.b16 %v3977, %v3970
    %v4223 = vpack.c.b16 %v3985, %v3978
    %v4224 = vpack.c.b16 %v3986, %v3979
    %v4225 = vpack.c.b16 %v3987, %v3980
    %v4226 = vpack.c.b16 %v3988, %v3981
    %v4227 = vpack.c.b16 %v3989, %v3982
    %v4228 = vpack.c.b16 %v3990, %v3983
    %v4229 = vpack.c.b16 %v3991, %v3984
    %v4230 = vpack.c.b16 %v3999, %v3992
    %v4231 = vpack.c.b16 %v4000, %v3993
    %v4232 = vpack.c.b16 %v4001, %v3994
    %v4233 = vpack.c.b16 %v4002, %v3995
    %v4234 = vpack.c.b16 %v4003, %v3996
    %v4235 = vpack.c.b16 %v4004, %v3997
    %v4236 = vpack.c.b16 %v4005, %v3998
    %v4237 = vpack.c.b16 %v4013, %v4006
    %v4238 = vpack.c.b16 %v4014, %v4007
    %v4239 = vpack.c.b16 %v4015, %v4008
    %v4240 = vpack.c.b16 %v4016, %v4009
    %v4241 = vpack.c.b16 %v4017, %v4010
    %v4242 = vpack.c.b16 %v4018, %v4011
    %v4243 = vpack.c.b16 %v4019, %v4012
    %4468 = vmatprep.subr.bf16.mxu0 %v4021
    %4469 = vmatpush1.bf16.msra.mxu0 %v4020
    %4470 = vmatprep.subr.bf16.mxu0 %v4028
    %4471 = vmatpush1.bf16.msra.mxu0 %v4027
    %4472 = vmatprep.subr.bf16.mxu0 %v4035
    %4473 = vmatpush1.bf16.msra.mxu0 %v4034
    %4474 = vmatprep.subr.bf16.mxu0 %v4042
    %4475 = vmatpush1.bf16.msra.mxu0 %v4041
    %4476 = vmatprep.subr.bf16.mxu0 %v4049
    %4477 = vmatpush1.bf16.msra.mxu0 %v4048
    %4478 = vmatprep.subr.bf16.mxu0 %v4056
    %4479 = vmatpush1.bf16.msra.mxu0 %v4055
    %4480 = vmatprep.subr.bf16.mxu0 %v4063
    %4481 = vmatpush1.bf16.msra.mxu0 %v4062
    %4482 = vmatprep.subr.bf16.mxu0 %v4070
    %4483 = vmatpush1.bf16.msra.mxu0 %v4069
    %4484 = vmatprep.subr.bf16.mxu0 %v4077
    %4485 = vmatpush1.bf16.msra.mxu0 %v4076
    %4486 = vmatprep.subr.bf16.mxu0 %v4084
    %4487 = vmatpush1.bf16.msra.mxu0 %v4083
    %4488 = vmatprep.subr.bf16.mxu0 %v4091
    %4489 = vmatpush1.bf16.msra.mxu0 %v4090
    %4490 = vmatprep.subr.bf16.mxu0 %v4098
    %4491 = vmatpush1.bf16.msra.mxu0 %v4097
    %4492 = vmatprep.subr.bf16.mxu0 %v4105
    %4493 = vmatpush1.bf16.msra.mxu0 %v4104
    %4494 = vmatprep.subr.bf16.mxu0 %v4112
    %4495 = vmatpush1.bf16.msra.mxu0 %v4111
    %4496 = vmatprep.subr.bf16.mxu0 %v4119
    %4497 = vmatpush1.bf16.msra.mxu0 %v4118
    %4498 = vmatprep.subr.bf16.mxu0 %v4126
    %4499 = vmatpush1.bf16.msra.mxu0 %v4125
    %4500 = vmatprep.mubr.bf16.mxu0 %v3020
    %4501 = vmatmul.mubr.bf16.gmra.mrb[0].mxu0 %v3019
    %v4502 = vpop.f32.mrb[0].mxu0
    %v4503 = vadd.f32 %v3284, %v4502
    %v4504 = vpop.f32.mrb[0].mxu0
    %v4505 = vadd.f32 %v3288, %v4504
    %v4506 = vpop.f32.mrb[0].mxu0
    %v4507 = vpop.f32.mrb[0].mxu0
    %4508 = vdwg.mxu0
    %4509 = vmatprep.subr.bf16.mxu0 %v4133
    %4510 = vmatpush1.bf16.msra.mxu0 %v4132
    %4511 = vmatprep.subr.bf16.mxu0 %v4140
    %4512 = vmatpush1.bf16.msra.mxu0 %v4139
    %4513 = vmatprep.subr.bf16.mxu0 %v4147
    %4514 = vmatpush1.bf16.msra.mxu0 %v4146
    %4515 = vmatprep.subr.bf16.mxu0 %v4154
    %4516 = vmatpush1.bf16.msra.mxu0 %v4153
    %4517 = vmatprep.subr.bf16.mxu0 %v4161
    %4518 = vmatpush1.bf16.msra.mxu0 %v4160
    %4519 = vmatprep.subr.bf16.mxu0 %v4168
    %4520 = vmatpush1.bf16.msra.mxu0 %v4167
    %4521 = vmatprep.subr.bf16.mxu0 %v4175
    %4522 = vmatpush1.bf16.msra.mxu0 %v4174
    %4523 = vmatprep.subr.bf16.mxu0 %v4182
    %4524 = vmatpush1.bf16.msra.mxu0 %v4181
    %4525 = vmatprep.subr.bf16.mxu0 %v4189
    %4526 = vmatpush1.bf16.msra.mxu0 %v4188
    %4527 = vmatprep.subr.bf16.mxu0 %v4196
    %4528 = vmatpush1.bf16.msra.mxu0 %v4195
    %4529 = vmatprep.subr.bf16.mxu0 %v4203
    %4530 = vmatpush1.bf16.msra.mxu0 %v4202
    %4531 = vmatprep.subr.bf16.mxu0 %v4210
    %4532 = vmatpush1.bf16.msra.mxu0 %v4209
    %4533 = vmatprep.subr.bf16.mxu0 %v4217
    %4534 = vmatpush1.bf16.msra.mxu0 %v4216
    %4535 = vmatprep.subr.bf16.mxu0 %v4224
    %4536 = vmatpush1.bf16.msra.mxu0 %v4223
    %4537 = vmatprep.subr.bf16.mxu0 %v4231
    %4538 = vmatpush1.bf16.msra.mxu0 %v4230
    %4539 = vmatprep.subr.bf16.mxu0 %v4238
    %4540 = vmatpush1.bf16.msra.mxu0 %v4237
    %4541 = vmatprep.mubr.bf16.mxu0 %v3022
    %4542 = vmatmul.mubr.bf16.gmra.mrb[0].mxu0 %v3021
    %v4543 = vpop.f32.mrb[0].mxu0
    %v4544 = vadd.f32 %v4503, %v4543
    %v4545 = vpop.f32.mrb[0].mxu0
    %v4546 = vadd.f32 %v4505, %v4545
    %v4547 = vpop.f32.mrb[0].mxu0
    %v4548 = vpop.f32.mrb[0].mxu0
    %4549 = vdwg.mxu0
    %4550 = vmatprep.subr.bf16.mxu0 %v4023
    %4551 = vmatpush1.bf16.msra.mxu0 %v4022
    %4552 = vmatprep.subr.bf16.mxu0 %v4030
    %4553 = vmatpush1.bf16.msra.mxu0 %v4029
    %4554 = vmatprep.subr.bf16.mxu0 %v4037
    %4555 = vmatpush1.bf16.msra.mxu0 %v4036
    %4556 = vmatprep.subr.bf16.mxu0 %v4044
    %4557 = vmatpush1.bf16.msra.mxu0 %v4043
    %4558 = vmatprep.subr.bf16.mxu0 %v4051
    %4559 = vmatpush1.bf16.msra.mxu0 %v4050
    %4560 = vmatprep.subr.bf16.mxu0 %v4058
    %4561 = vmatpush1.bf16.msra.mxu0 %v4057
    %4562 = vmatprep.subr.bf16.mxu0 %v4065
    %4563 = vmatpush1.bf16.msra.mxu0 %v4064
    %4564 = vmatprep.subr.bf16.mxu0 %v4072
    %4565 = vmatpush1.bf16.msra.mxu0 %v4071
    %4566 = vmatprep.subr.bf16.mxu0 %v4079
    %4567 = vmatpush1.bf16.msra.mxu0 %v4078
    %4568 = vmatprep.subr.bf16.mxu0 %v4086
    %4569 = vmatpush1.bf16.msra.mxu0 %v4085
    %4570 = vmatprep.subr.bf16.mxu0 %v4093
    %4571 = vmatpush1.bf16.msra.mxu0 %v4092
    %4572 = vmatprep.subr.bf16.mxu0 %v4100
    %4573 = vmatpush1.bf16.msra.mxu0 %v4099
    %4574 = vmatprep.subr.bf16.mxu0 %v4107
    %4575 = vmatpush1.bf16.msra.mxu0 %v4106
    %4576 = vmatprep.subr.bf16.mxu0 %v4114
    %4577 = vmatpush1.bf16.msra.mxu0 %v4113
    %4578 = vmatprep.subr.bf16.mxu0 %v4121
    %4579 = vmatpush1.bf16.msra.mxu0 %v4120
    %4580 = vmatprep.subr.bf16.mxu0 %v4128
    %4581 = vmatpush1.bf16.msra.mxu0 %v4127
    %4582 = vmatprep.mubr.bf16.mxu0 %v3020
    %4583 = vmatmul.mubr.bf16.gmra.mrb[0].mxu0 %v3019
    %v4584 = vpop.f32.mrb[0].mxu0
    %v4585 = vadd.f32 %v3292, %v4584
    %v4586 = vpop.f32.mrb[0].mxu0
    %v4587 = vadd.f32 %v3296, %v4586
    %v4588 = vpop.f32.mrb[0].mxu0
    %v4589 = vpop.f32.mrb[0].mxu0
    %4590 = vdwg.mxu0
    %4591 = vmatprep.subr.bf16.mxu0 %v4135
    %4592 = vmatpush1.bf16.msra.mxu0 %v4134
    %4593 = vmatprep.subr.bf16.mxu0 %v4142
    %4594 = vmatpush1.bf16.msra.mxu0 %v4141
    %4595 = vmatprep.subr.bf16.mxu0 %v4149
    %4596 = vmatpush1.bf16.msra.mxu0 %v4148
    %4597 = vmatprep.subr.bf16.mxu0 %v4156
    %4598 = vmatpush1.bf16.msra.mxu0 %v4155
    %4599 = vmatprep.subr.bf16.mxu0 %v4163
    %4600 = vmatpush1.bf16.msra.mxu0 %v4162
    %4601 = vmatprep.subr.bf16.mxu0 %v4170
    %4602 = vmatpush1.bf16.msra.mxu0 %v4169
    %4603 = vmatprep.subr.bf16.mxu0 %v4177
    %4604 = vmatpush1.bf16.msra.mxu0 %v4176
    %4605 = vmatprep.subr.bf16.mxu0 %v4184
    %4606 = vmatpush1.bf16.msra.mxu0 %v4183
    %4607 = vmatprep.subr.bf16.mxu0 %v4191
    %4608 = vmatpush1.bf16.msra.mxu0 %v4190
    %4609 = vmatprep.subr.bf16.mxu0 %v4198
    %4610 = vmatpush1.bf16.msra.mxu0 %v4197
    %4611 = vmatprep.subr.bf16.mxu0 %v4205
    %4612 = vmatpush1.bf16.msra.mxu0 %v4204
    %4613 = vmatprep.subr.bf16.mxu0 %v4212
    %4614 = vmatpush1.bf16.msra.mxu0 %v4211
    %4615 = vmatprep.subr.bf16.mxu0 %v4219
    %4616 = vmatpush1.bf16.msra.mxu0 %v4218
    %4617 = vmatprep.subr.bf16.mxu0 %v4226
    %4618 = vmatpush1.bf16.msra.mxu0 %v4225
    %4619 = vmatprep.subr.bf16.mxu0 %v4233
    %4620 = vmatpush1.bf16.msra.mxu0 %v4232
    %4621 = vmatprep.subr.bf16.mxu0 %v4240
    %4622 = vmatpush1.bf16.msra.mxu0 %v4239
    %4623 = vmatprep.mubr.bf16.mxu0 %v3022
    %4624 = vmatmul.mubr.bf16.gmra.mrb[0].mxu0 %v3021
    %v4625 = vpop.f32.mrb[0].mxu0
    %v4626 = vadd.f32 %v4585, %v4625
    %v4627 = vpop.f32.mrb[0].mxu0
    %v4628 = vadd.f32 %v4587, %v4627
    %v4629 = vpop.f32.mrb[0].mxu0
    %v4630 = vpop.f32.mrb[0].mxu0
    %4631 = vdwg.mxu0
    %4632 = vmatprep.subr.bf16.mxu0 %v4025
    %4633 = vmatpush1.bf16.msra.mxu0 %v4024
    %4634 = vmatprep.subr.bf16.mxu0 %v4032
    %4635 = vmatpush1.bf16.msra.mxu0 %v4031
    %4636 = vmatprep.subr.bf16.mxu0 %v4039
    %4637 = vmatpush1.bf16.msra.mxu0 %v4038
    %4638 = vmatprep.subr.bf16.mxu0 %v4046
    %4639 = vmatpush1.bf16.msra.mxu0 %v4045
    %4640 = vmatprep.subr.bf16.mxu0 %v4053
    %4641 = vmatpush1.bf16.msra.mxu0 %v4052
    %4642 = vmatprep.subr.bf16.mxu0 %v4060
    %4643 = vmatpush1.bf16.msra.mxu0 %v4059
    %4644 = vmatprep.subr.bf16.mxu0 %v4067
    %4645 = vmatpush1.bf16.msra.mxu0 %v4066
    %4646 = vmatprep.subr.bf16.mxu0 %v4074
    %4647 = vmatpush1.bf16.msra.mxu0 %v4073
    %4648 = vmatprep.subr.bf16.mxu0 %v4081
    %4649 = vmatpush1.bf16.msra.mxu0 %v4080
    %4650 = vmatprep.subr.bf16.mxu0 %v4088
    %4651 = vmatpush1.bf16.msra.mxu0 %v4087
    %4652 = vmatprep.subr.bf16.mxu0 %v4095
    %4653 = vmatpush1.bf16.msra.mxu0 %v4094
    %4654 = vmatprep.subr.bf16.mxu0 %v4102
    %4655 = vmatpush1.bf16.msra.mxu0 %v4101
    %4656 = vmatprep.subr.bf16.mxu0 %v4109
    %4657 = vmatpush1.bf16.msra.mxu0 %v4108
    %4658 = vmatprep.subr.bf16.mxu0 %v4116
    %4659 = vmatpush1.bf16.msra.mxu0 %v4115
    %4660 = vmatprep.subr.bf16.mxu0 %v4123
    %4661 = vmatpush1.bf16.msra.mxu0 %v4122
    %4662 = vmatprep.subr.bf16.mxu0 %v4130
    %4663 = vmatpush1.bf16.msra.mxu0 %v4129
    %4664 = vmatprep.mubr.bf16.mxu0 %v3020
    %4665 = vmatmul.mubr.bf16.gmra.mrb[0].mxu0 %v3019
    %v4666 = vpop.f32.mrb[0].mxu0
    %v4667 = vadd.f32 %v3300, %v4666
    %v4668 = vpop.f32.mrb[0].mxu0
    %v4669 = vadd.f32 %v3304, %v4668
    %v4670 = vpop.f32.mrb[0].mxu0
    %v4671 = vpop.f32.mrb[0].mxu0
    %4672 = vdwg.mxu0
    %4673 = vmatprep.subr.bf16.mxu0 %v4137
    %4674 = vmatpush1.bf16.msra.mxu0 %v4136
    %4675 = vmatprep.subr.bf16.mxu0 %v4144
    %4676 = vmatpush1.bf16.msra.mxu0 %v4143
    %4677 = vmatprep.subr.bf16.mxu0 %v4151
    %4678 = vmatpush1.bf16.msra.mxu0 %v4150
    %4679 = vmatprep.subr.bf16.mxu0 %v4158
    %4680 = vmatpush1.bf16.msra.mxu0 %v4157
    %4681 = vmatprep.subr.bf16.mxu0 %v4165
    %4682 = vmatpush1.bf16.msra.mxu0 %v4164
    %4683 = vmatprep.subr.bf16.mxu0 %v4172
    %4684 = vmatpush1.bf16.msra.mxu0 %v4171
    %4685 = vmatprep.subr.bf16.mxu0 %v4179
    %4686 = vmatpush1.bf16.msra.mxu0 %v4178
    %4687 = vmatprep.subr.bf16.mxu0 %v4186
    %4688 = vmatpush1.bf16.msra.mxu0 %v4185
    %4689 = vmatprep.subr.bf16.mxu0 %v4193
    %4690 = vmatpush1.bf16.msra.mxu0 %v4192
    %4691 = vmatprep.subr.bf16.mxu0 %v4200
    %4692 = vmatpush1.bf16.msra.mxu0 %v4199
    %4693 = vmatprep.subr.bf16.mxu0 %v4207
    %4694 = vmatpush1.bf16.msra.mxu0 %v4206
    %4695 = vmatprep.subr.bf16.mxu0 %v4214
    %4696 = vmatpush1.bf16.msra.mxu0 %v4213
    %4697 = vmatprep.subr.bf16.mxu0 %v4221
    %4698 = vmatpush1.bf16.msra.mxu0 %v4220
    %4699 = vmatprep.subr.bf16.mxu0 %v4228
    %4700 = vmatpush1.bf16.msra.mxu0 %v4227
    %4701 = vmatprep.subr.bf16.mxu0 %v4235
    %4702 = vmatpush1.bf16.msra.mxu0 %v4234
    %4703 = vmatprep.subr.bf16.mxu0 %v4242
    %4704 = vmatpush1.bf16.msra.mxu0 %v4241
    %4705 = vmatprep.mubr.bf16.mxu0 %v3022
    %4706 = vmatmul.mubr.bf16.gmra.mrb[0].mxu0 %v3021
    %v4707 = vpop.f32.mrb[0].mxu0
    %v4708 = vadd.f32 %v4667, %v4707
    %v4709 = vpop.f32.mrb[0].mxu0
    %v4710 = vadd.f32 %v4669, %v4709
    %v4711 = vpop.f32.mrb[0].mxu0
    %v4712 = vpop.f32.mrb[0].mxu0
    %4713 = vdwg.mxu0
    %4714 = vmatprep.subr.bf16.mxu0 0
    %4715 = vmatpush1.bf16.msra.mxu0 %v4026
    %4716 = vmatprep.subr.bf16.mxu0 0
    %4717 = vmatpush1.bf16.msra.mxu0 %v4033
    %4718 = vmatprep.subr.bf16.mxu0 0
    %4719 = vmatpush1.bf16.msra.mxu0 %v4040
    %4720 = vmatprep.subr.bf16.mxu0 0
    %4721 = vmatpush1.bf16.msra.mxu0 %v4047
    %4722 = vmatprep.subr.bf16.mxu0 0
    %4723 = vmatpush1.bf16.msra.mxu0 %v4054
    %4724 = vmatprep.subr.bf16.mxu0 0
    %4725 = vmatpush1.bf16.msra.mxu0 %v4061
    %4726 = vmatprep.subr.bf16.mxu0 0
    %4727 = vmatpush1.bf16.msra.mxu0 %v4068
    %4728 = vmatprep.subr.bf16.mxu0 0
    %4729 = vmatpush1.bf16.msra.mxu0 %v4075
    %4730 = vmatprep.subr.bf16.mxu0 0
    %4731 = vmatpush1.bf16.msra.mxu0 %v4082
    %4732 = vmatprep.subr.bf16.mxu0 0
    %4733 = vmatpush1.bf16.msra.mxu0 %v4089
    %4734 = vmatprep.subr.bf16.mxu0 0
    %4735 = vmatpush1.bf16.msra.mxu0 %v4096
    %4736 = vmatprep.subr.bf16.mxu0 0
    %4737 = vmatpush1.bf16.msra.mxu0 %v4103
    %4738 = vmatprep.subr.bf16.mxu0 0
    %4739 = vmatpush1.bf16.msra.mxu0 %v4110
    %4740 = vmatprep.subr.bf16.mxu0 0
    %4741 = vmatpush1.bf16.msra.mxu0 %v4117
    %4742 = vmatprep.subr.bf16.mxu0 0
    %4743 = vmatpush1.bf16.msra.mxu0 %v4124
    %4744 = vmatprep.subr.bf16.mxu0 0
    %4745 = vmatpush1.bf16.msra.mxu0 %v4131
    %4746 = vmatprep.mubr.bf16.mxu0 %v3020
    %4747 = vmatmul.mubr.bf16.gmra.mrb[0].mxu0 %v3019
    %v4748 = vpop.f32.mrb[0].mxu0
    %v4749 = vadd.f32 %v3308, %v4748
    %v4750 = vpop.f32.mrb[0].mxu0
    %v4751 = vpop.f32.mrb[0].mxu0
    %v4752 = vpop.f32.mrb[0].mxu0
    %4753 = vdwg.mxu0
    %4754 = vmatprep.subr.bf16.mxu0 0
    %4755 = vmatpush1.bf16.msra.mxu0 %v4138
    %4756 = vmatprep.subr.bf16.mxu0 0
    %4757 = vmatpush1.bf16.msra.mxu0 %v4145
    %4758 = vmatprep.subr.bf16.mxu0 0
    %4759 = vmatpush1.bf16.msra.mxu0 %v4152
    %4760 = vmatprep.subr.bf16.mxu0 0
    %4761 = vmatpush1.bf16.msra.mxu0 %v4159
    %4762 = vmatprep.subr.bf16.mxu0 0
    %4763 = vmatpush1.bf16.msra.mxu0 %v4166
    %4764 = vmatprep.subr.bf16.mxu0 0
    %4765 = vmatpush1.bf16.msra.mxu0 %v4173
    %4766 = vmatprep.subr.bf16.mxu0 0
    %4767 = vmatpush1.bf16.msra.mxu0 %v4180
    %4768 = vmatprep.subr.bf16.mxu0 0
    %4769 = vmatpush1.bf16.msra.mxu0 %v4187
    %4770 = vmatprep.subr.bf16.mxu0 0
    %4771 = vmatpush1.bf16.msra.mxu0 %v4194
    %4772 = vmatprep.subr.bf16.mxu0 0
    %4773 = vmatpush1.bf16.msra.mxu0 %v4201
    %4774 = vmatprep.subr.bf16.mxu0 0
    %4775 = vmatpush1.bf16.msra.mxu0 %v4208
    %4776 = vmatprep.subr.bf16.mxu0 0
    %4777 = vmatpush1.bf16.msra.mxu0 %v4215
    %4778 = vmatprep.subr.bf16.mxu0 0
    %4779 = vmatpush1.bf16.msra.mxu0 %v4222
    %4780 = vmatprep.subr.bf16.mxu0 0
    %4781 = vmatpush1.bf16.msra.mxu0 %v4229
    %4782 = vmatprep.subr.bf16.mxu0 0
    %4783 = vmatpush1.bf16.msra.mxu0 %v4236
    %4784 = vmatprep.subr.bf16.mxu0 0
    %4785 = vmatpush1.bf16.msra.mxu0 %v4243
    %4786 = vmatprep.mubr.bf16.mxu0 %v3022
    %4787 = vmatmul.mubr.bf16.gmra.mrb[0].mxu0 %v3021
    %v4788 = vpop.f32.mrb[0].mxu0
    %v4789 = vadd.f32 %v4749, %v4788
    %v4790 = vpop.f32.mrb[0].mxu0
    %v4791 = vpop.f32.mrb[0].mxu0
    %v4792 = vpop.f32.mrb[0].mxu0
    %4793 = vdwg.mxu0
    %v4794 = vxor.u32 %v4544, 2147483648
    %v4795 = vxor.u32 %v4546, 2147483648
    %v4796 = vxor.u32 %v4626, 2147483648
    %v4797 = vxor.u32 %v4628, 2147483648
    %v4798 = vxor.u32 %v4708, 2147483648
    %v4799 = vxor.u32 %v4710, 2147483648
    %v4800 = vxor.u32 %v4789, 2147483648
    %v4801 = vmul.f32 %v4794, 1.442695
    %v4802 = vpow.pop %v4801
    %v4803 = vmul.f32 %v4795, 1.442695
    %v4804 = vpow.pop %v4803
    %v4805 = vmul.f32 %v4796, 1.442695
    %v4806 = vpow.pop %v4805
    %v4807 = vmul.f32 %v4797, 1.442695
    %v4808 = vpow.pop %v4807
    %v4809 = vmul.f32 %v4798, 1.442695
    %v4810 = vpow.pop %v4809
    %v4811 = vmul.f32 %v4799, 1.442695
    %v4812 = vpow.pop %v4811
    %v4813 = vmul.f32 %v4800, 1.442695
    %v4814 = vpow.pop %v4813
    %v4815 = vadd.f32 %v4802, 1.0
    %v4816 = vadd.f32 %v4804, 1.0
    %v4817 = vadd.f32 %v4806, 1.0
    %v4818 = vadd.f32 %v4808, 1.0
    %v4819 = vadd.f32 %v4810, 1.0
    %v4820 = vadd.f32 %v4812, 1.0
    %v4821 = vadd.f32 %v4814, 1.0
    %v4822 = vrcp.pop %v4815
    %v4823 = vmul.f32 1.0, %v4822
    %v4824 = vrcp.pop %v4816
    %v4825 = vmul.f32 1.0, %v4824
    %v4826 = vrcp.pop %v4817
    %v4827 = vmul.f32 1.0, %v4826
    %v4828 = vrcp.pop %v4818
    %v4829 = vmul.f32 1.0, %v4828
    %v4830 = vrcp.pop %v4819
    %v4831 = vmul.f32 1.0, %v4830
    %v4832 = vrcp.pop %v4820
    %v4833 = vmul.f32 1.0, %v4832
    %v4834 = vrcp.pop %v4821
    %v4835 = vmul.f32 1.0, %v4834
    %v4836 = vpack.c.bf16 %v4823, %v4823
    %v4837 = vpack.c.bf16 %v4825, %v4825
    %v4838 = vpack.c.bf16 %v4827, %v4827
    %v4839 = vpack.c.bf16 %v4829, %v4829
    %v4840 = vpack.c.bf16 %v4831, %v4831
    %v4841 = vpack.c.bf16 %v4833, %v4833
    %v4842 = vpack.c.bf16 %v4835, %v4835
    %v4850 = vunpack.c.l.b16 %v4836
    %v4851 = vunpack.c.l.b16 %v4837
    %v4852 = vunpack.c.l.b16 %v4838
    %v4853 = vunpack.c.l.b16 %v4839
    %v4854 = vunpack.c.l.b16 %v4840
    %v4855 = vunpack.c.l.b16 %v4841
    %v4856 = vunpack.c.l.b16 %v4842
    %v4857 = vpack.c.b16 %v4851, %v4850
    %v4858 = vpack.c.b16 %v4853, %v4852
    %v4859 = vpack.c.b16 %v4855, %v4854
    %v4860 = vpack.c.b16 %v4856, %v4856
    %4865 = vst [vmem:[%s18] sm:$0xff] %v4857
    %4866 = vst [vmem:[%s18 + $0x8] sm:$0xff] %v4858
    %4867 = vst [vmem:[%s18 + $0x10] sm:$0xff] %v4859
    %vm4868 = vcmask 125952
    %4869 = vst.msk [vmem:[%s18 + $0x18] sm:$0xf] %vm4868, %v4860
    %v4870 = vld [vmem:[%s16] sm:$0xf]
    %v4871 = vld [vmem:[%s16 + $0x4] sm:$0xf]
    %v4872 = vld [vmem:[%s16 + $0x8] sm:$0xf]
    %v4873 = vld [vmem:[%s16 + $0xc] sm:$0xf]
    %v4874 = vld [vmem:[%s16 + $0x10] sm:$0xf]
    %v4875 = vld [vmem:[%s16 + $0x14] sm:$0xf]
    %v4876 = vld [vmem:[%s16 + $0x18] sm:$0xf]
    %v4877 = vld [vmem:[%s16 + $0x1c] sm:$0xf]
    %v4878 = vld [vmem:[%s16 + $0x20] sm:$0xf]
    %v4879 = vld [vmem:[%s16 + $0x24] sm:$0xf]
    %v4880 = vld [vmem:[%s16 + $0x28] sm:$0xf]
    %v4881 = vld [vmem:[%s16 + $0x2c] sm:$0xf]
    %v4882 = vld [vmem:[%s16 + $0x30] sm:$0xf]
    %v4883 = vld [vmem:[%s16 + $0x34] sm:$0xf]
    %v4884 = vld [vmem:[%s16 + $0x38] sm:$0xf]
    %v4885 = vld [vmem:[%s16 + $0x3c] sm:$0xf]
    %v4886 = vld [vmem:[%s16 + $0x40] sm:$0xf]
    %v4887 = vld [vmem:[%s16 + $0x44] sm:$0xf]
    %v4888 = vld [vmem:[%s16 + $0x48] sm:$0xf]
    %v4889 = vld [vmem:[%s16 + $0x4c] sm:$0xf]
    %v4890 = vld [vmem:[%s16 + $0x50] sm:$0xf]
    %v4891 = vld [vmem:[%s16 + $0x54] sm:$0xf]
    %v4892 = vld [vmem:[%s16 + $0x58] sm:$0xf]
    %v4893 = vld [vmem:[%s16 + $0x5c] sm:$0xf]
    %v4894 = vld [vmem:[%s16 + $0x60] sm:$0xf]
    %v4895 = vld [vmem:[%s16 + $0x64] sm:$0xf]
    %v4896 = vld [vmem:[%s16 + $0x68] sm:$0xf]
    %v4897 = vld [vmem:[%s16 + $0x6c] sm:$0xf]
    %v4898 = vld [vmem:[%s16 + $0x70] sm:$0xf]
    %v4899 = vld [vmem:[%s16 + $0x74] sm:$0xf]
    %v4900 = vld [vmem:[%s16 + $0x78] sm:$0xf]
    %v4901 = vld [vmem:[%s16 + $0x7c] sm:$0xf]
    %v4902 = vld [vmem:[%s16 + $0x80] sm:$0xf]
    %v4903 = vld [vmem:[%s16 + $0x84] sm:$0xf]
    %v4904 = vld [vmem:[%s16 + $0x88] sm:$0xf]
    %v4905 = vld [vmem:[%s16 + $0x8c] sm:$0xf]
    %v4906 = vld [vmem:[%s16 + $0x90] sm:$0xf]
    %v4907 = vld [vmem:[%s16 + $0x94] sm:$0xf]
    %v4908 = vld [vmem:[%s16 + $0x98] sm:$0xf]
    %v4909 = vld [vmem:[%s16 + $0x9c] sm:$0xf]
    %v4910 = vld [vmem:[%s16 + $0xa0] sm:$0xf]
    %v4911 = vld [vmem:[%s16 + $0xa4] sm:$0xf]
    %v4912 = vld [vmem:[%s16 + $0xa8] sm:$0xf]
    %v4913 = vld [vmem:[%s16 + $0xac] sm:$0xf]
    %v4914 = vld [vmem:[%s16 + $0xb0] sm:$0xf]
    %v4915 = vld [vmem:[%s16 + $0xb4] sm:$0xf]
    %v4916 = vld [vmem:[%s16 + $0xb8] sm:$0xf]
    %v4917 = vld [vmem:[%s16 + $0xbc] sm:$0xf]
    %v4918 = vld [vmem:[%s16 + $0xc0] sm:$0xf]
    %v4919 = vld [vmem:[%s16 + $0xc4] sm:$0xf]
    %v4920 = vld [vmem:[%s16 + $0xc8] sm:$0xf]
    %v4921 = vld [vmem:[%s16 + $0xcc] sm:$0xf]
    %v4922 = vld [vmem:[%s16 + $0xd0] sm:$0xf]
    %v4923 = vld [vmem:[%s16 + $0xd4] sm:$0xf]
    %v4924 = vld [vmem:[%s16 + $0xd8] sm:$0xf]
    %v4925 = vld [vmem:[%s16 + $0xdc] sm:$0xf]
    %v4926 = vld [vmem:[%s16 + $0xe0] sm:$0xf]
    %v4927 = vld [vmem:[%s16 + $0xe4] sm:$0xf]
    %v4928 = vld [vmem:[%s16 + $0xe8] sm:$0xf]
    %v4929 = vld [vmem:[%s16 + $0xec] sm:$0xf]
    %v4930 = vld [vmem:[%s16 + $0xf0] sm:$0xf]
    %v4931 = vld [vmem:[%s16 + $0xf4] sm:$0xf]
    %v4932 = vld [vmem:[%s16 + $0xf8] sm:$0xf]
    %v4933 = vld [vmem:[%s16 + $0xfc] sm:$0xf]
    %v4934 = vld [vmem:[%s17] sm:$0x1]
    %v4936 = vlaneseq
    %v4937 = vshrl.u32 %v4936, 7
    %v4938 = vsub.s32 0, %v4937
    %v4939 = vrot.slane %v4934, %v4938
    %v5005 = vunpack.c.l.b16 %v4870
    %v5006 = vunpack.c.l.b16 %v4871
    %v5007 = vunpack.c.l.b16 %v4872
    %v5008 = vunpack.c.l.b16 %v4873
    %v5009 = vunpack.c.l.b16 %v4874
    %v5010 = vunpack.c.l.b16 %v4875
    %v5011 = vunpack.c.l.b16 %v4876
    %v5012 = vunpack.c.l.b16 %v4877
    %v5013 = vunpack.c.l.b16 %v4878
    %v5014 = vunpack.c.l.b16 %v4879
    %v5015 = vunpack.c.l.b16 %v4880
    %v5016 = vunpack.c.l.b16 %v4881
    %v5017 = vunpack.c.l.b16 %v4882
    %v5018 = vunpack.c.l.b16 %v4883
    %v5019 = vunpack.c.l.b16 %v4884
    %v5020 = vunpack.c.l.b16 %v4885
    %v5021 = vunpack.c.l.b16 %v4886
    %v5022 = vunpack.c.l.b16 %v4887
    %v5023 = vunpack.c.l.b16 %v4888
    %v5024 = vunpack.c.l.b16 %v4889
    %v5025 = vunpack.c.l.b16 %v4890
    %v5026 = vunpack.c.l.b16 %v4891
    %v5027 = vunpack.c.l.b16 %v4892
    %v5028 = vunpack.c.l.b16 %v4893
    %v5029 = vunpack.c.l.b16 %v4894
    %v5030 = vunpack.c.l.b16 %v4895
    %v5031 = vunpack.c.l.b16 %v4896
    %v5032 = vunpack.c.l.b16 %v4897
    %v5033 = vunpack.c.l.b16 %v4898
    %v5034 = vunpack.c.l.b16 %v4899
    %v5035 = vunpack.c.l.b16 %v4900
    %v5036 = vunpack.c.l.b16 %v4901
    %v5037 = vunpack.c.l.b16 %v4902
    %v5038 = vunpack.c.l.b16 %v4903
    %v5039 = vunpack.c.l.b16 %v4904
    %v5040 = vunpack.c.l.b16 %v4905
    %v5041 = vunpack.c.l.b16 %v4906
    %v5042 = vunpack.c.l.b16 %v4907
    %v5043 = vunpack.c.l.b16 %v4908
    %v5044 = vunpack.c.l.b16 %v4909
    %v5045 = vunpack.c.l.b16 %v4910
    %v5046 = vunpack.c.l.b16 %v4911
    %v5047 = vunpack.c.l.b16 %v4912
    %v5048 = vunpack.c.l.b16 %v4913
    %v5049 = vunpack.c.l.b16 %v4914
    %v5050 = vunpack.c.l.b16 %v4915
    %v5051 = vunpack.c.l.b16 %v4916
    %v5052 = vunpack.c.l.b16 %v4917
    %v5053 = vunpack.c.l.b16 %v4918
    %v5054 = vunpack.c.l.b16 %v4919
    %v5055 = vunpack.c.l.b16 %v4920
    %v5056 = vunpack.c.l.b16 %v4921
    %v5057 = vunpack.c.l.b16 %v4922
    %v5058 = vunpack.c.l.b16 %v4923
    %v5059 = vunpack.c.l.b16 %v4924
    %v5060 = vunpack.c.l.b16 %v4925
    %v5061 = vunpack.c.l.b16 %v4926
    %v5062 = vunpack.c.l.b16 %v4927
    %v5063 = vunpack.c.l.b16 %v4928
    %v5064 = vunpack.c.l.b16 %v4929
    %v5065 = vunpack.c.l.b16 %v4930
    %v5066 = vunpack.c.l.b16 %v4931
    %v5067 = vunpack.c.l.b16 %v4932
    %v5068 = vunpack.c.l.b16 %v4933
    %v5069 = vpack.c.b16 %v5006, %v5005
    %v5070 = vpack.c.b16 %v5008, %v5007
    %v5071 = vpack.c.b16 %v5010, %v5009
    %v5072 = vpack.c.b16 %v5012, %v5011
    %v5073 = vpack.c.b16 %v5014, %v5013
    %v5074 = vpack.c.b16 %v5016, %v5015
    %v5075 = vpack.c.b16 %v5018, %v5017
    %v5076 = vpack.c.b16 %v5020, %v5019
    %v5077 = vpack.c.b16 %v5022, %v5021
    %v5078 = vpack.c.b16 %v5024, %v5023
    %v5079 = vpack.c.b16 %v5026, %v5025
    %v5080 = vpack.c.b16 %v5028, %v5027
    %v5081 = vpack.c.b16 %v5030, %v5029
    %v5082 = vpack.c.b16 %v5032, %v5031
    %v5083 = vpack.c.b16 %v5034, %v5033
    %v5084 = vpack.c.b16 %v5036, %v5035
    %v5085 = vpack.c.b16 %v5038, %v5037
    %v5086 = vpack.c.b16 %v5040, %v5039
    %v5087 = vpack.c.b16 %v5042, %v5041
    %v5088 = vpack.c.b16 %v5044, %v5043
    %v5089 = vpack.c.b16 %v5046, %v5045
    %v5090 = vpack.c.b16 %v5048, %v5047
    %v5091 = vpack.c.b16 %v5050, %v5049
    %v5092 = vpack.c.b16 %v5052, %v5051
    %v5093 = vpack.c.b16 %v5054, %v5053
    %v5094 = vpack.c.b16 %v5056, %v5055
    %v5095 = vpack.c.b16 %v5058, %v5057
    %v5096 = vpack.c.b16 %v5060, %v5059
    %v5097 = vpack.c.b16 %v5062, %v5061
    %v5098 = vpack.c.b16 %v5064, %v5063
    %v5099 = vpack.c.b16 %v5066, %v5065
    %v5100 = vpack.c.b16 %v5068, %v5067
    %5133 = vmatprep.subr.bf16.mxu0 0
    %5134 = vmatpush1.bf16.msra.mxu0 %v5069
    %5135 = vmatprep.subr.bf16.mxu0 0
    %5136 = vmatpush1.bf16.msra.mxu0 %v5070
    %5137 = vmatprep.subr.bf16.mxu0 0
    %5138 = vmatpush1.bf16.msra.mxu0 %v5071
    %5139 = vmatprep.subr.bf16.mxu0 0
    %5140 = vmatpush1.bf16.msra.mxu0 %v5072
    %5141 = vmatprep.subr.bf16.mxu0 0
    %5142 = vmatpush1.bf16.msra.mxu0 %v5073
    %5143 = vmatprep.subr.bf16.mxu0 0
    %5144 = vmatpush1.bf16.msra.mxu0 %v5074
    %5145 = vmatprep.subr.bf16.mxu0 0
    %5146 = vmatpush1.bf16.msra.mxu0 %v5075
    %5147 = vmatprep.subr.bf16.mxu0 0
    %5148 = vmatpush1.bf16.msra.mxu0 %v5076
    %5149 = vmatprep.subr.bf16.mxu0 0
    %5150 = vmatpush1.bf16.msra.mxu0 %v5077
    %5151 = vmatprep.subr.bf16.mxu0 0
    %5152 = vmatpush1.bf16.msra.mxu0 %v5078
    %5153 = vmatprep.subr.bf16.mxu0 0
    %5154 = vmatpush1.bf16.msra.mxu0 %v5079
    %5155 = vmatprep.subr.bf16.mxu0 0
    %5156 = vmatpush1.bf16.msra.mxu0 %v5080
    %5157 = vmatprep.subr.bf16.mxu0 0
    %5158 = vmatpush1.bf16.msra.mxu0 %v5081
    %5159 = vmatprep.subr.bf16.mxu0 0
    %5160 = vmatpush1.bf16.msra.mxu0 %v5082
    %5161 = vmatprep.subr.bf16.mxu0 0
    %5162 = vmatpush1.bf16.msra.mxu0 %v5083
    %5163 = vmatprep.subr.bf16.mxu0 0
    %5164 = vmatpush1.bf16.msra.mxu0 %v5084
    %5165 = vmatprep.mubr.bf16.mxu0 %v3020
    %5166 = vmatmul.mubr.bf16.gmra.mrb[0].mxu0 %v3019
    %v5167 = vpop.f32.mrb[0].mxu0
    %v5168 = vadd.f32 %v4939, %v5167
    %v5169 = vpop.f32.mrb[0].mxu0
    %v5170 = vpop.f32.mrb[0].mxu0
    %v5171 = vpop.f32.mrb[0].mxu0
    %5172 = vdwg.mxu0
    %5173 = vmatprep.subr.bf16.mxu0 0
    %5174 = vmatpush1.bf16.msra.mxu0 %v5085
    %5175 = vmatprep.subr.bf16.mxu0 0
    %5176 = vmatpush1.bf16.msra.mxu0 %v5086
    %5177 = vmatprep.subr.bf16.mxu0 0
    %5178 = vmatpush1.bf16.msra.mxu0 %v5087
    %5179 = vmatprep.subr.bf16.mxu0 0
    %5180 = vmatpush1.bf16.msra.mxu0 %v5088
    %5181 = vmatprep.subr.bf16.mxu0 0
    %5182 = vmatpush1.bf16.msra.mxu0 %v5089
    %5183 = vmatprep.subr.bf16.mxu0 0
    %5184 = vmatpush1.bf16.msra.mxu0 %v5090
    %5185 = vmatprep.subr.bf16.mxu0 0
    %5186 = vmatpush1.bf16.msra.mxu0 %v5091
    %5187 = vmatprep.subr.bf16.mxu0 0
    %5188 = vmatpush1.bf16.msra.mxu0 %v5092
    %5189 = vmatprep.subr.bf16.mxu0 0
    %5190 = vmatpush1.bf16.msra.mxu0 %v5093
    %5191 = vmatprep.subr.bf16.mxu0 0
    %5192 = vmatpush1.bf16.msra.mxu0 %v5094
    %5193 = vmatprep.subr.bf16.mxu0 0
    %5194 = vmatpush1.bf16.msra.mxu0 %v5095
    %5195 = vmatprep.subr.bf16.mxu0 0
    %5196 = vmatpush1.bf16.msra.mxu0 %v5096
    %5197 = vmatprep.subr.bf16.mxu0 0
    %5198 = vmatpush1.bf16.msra.mxu0 %v5097
    %5199 = vmatprep.subr.bf16.mxu0 0
    %5200 = vmatpush1.bf16.msra.mxu0 %v5098
    %5201 = vmatprep.subr.bf16.mxu0 0
    %5202 = vmatpush1.bf16.msra.mxu0 %v5099
    %5203 = vmatprep.subr.bf16.mxu0 0
    %5204 = vmatpush1.bf16.msra.mxu0 %v5100
    %5205 = vmatprep.mubr.bf16.mxu0 %v3022
    %5206 = vmatmul.mubr.bf16.gmra.mrb[0].mxu0 %v3021
    %v5207 = vpop.f32.mrb[0].mxu0
    %v5208 = vadd.f32 %v5168, %v5207
    %v5209 = vpop.f32.mrb[0].mxu0
    %v5210 = vpop.f32.mrb[0].mxu0
    %v5211 = vpop.f32.mrb[0].mxu0
    %5212 = vdwg.mxu0
    %v5213 = vxor.u32 %v5208, 2147483648
    %v5214 = vmul.f32 %v5213, 1.442695
    %v5215 = vpow.pop %v5214
    %v5216 = vadd.f32 %v5215, 1.0
    %v5217 = vrcp.pop %v5216
    %v5218 = vmul.f32 1.0, %v5217
    %vm5219 = vcmask 80896
    %5220 = vst.msk [vmem:[#allocation2] sm:$0xff] %vm5219, %v5218
    // Predicated region
    $region74: #{vae_autoencoder_classifier_forward.1} parent=1 // pred_check
      _
    $region75: #{vae_autoencoder_classifier_forward.1} parent=1 // pred_check_branch
      %5222 = sbr.rel (0) target = $region77
    $region76: #{vae_autoencoder_classifier_forward.1} parent=1 // pred_region
      _
    $region77: #{vae_autoencoder_classifier_forward.1} parent=1 // pred_fallthru
      _
    // Predicated region
    $region78: #{vae_autoencoder_classifier_forward.1} parent=1 // pred_check
      _
    $region79: #{vae_autoencoder_classifier_forward.1} parent=1 // pred_check_branch
      %5224 = sbr.rel (0) target = $region81
    $region80: #{vae_autoencoder_classifier_forward.1} parent=1 // pred_region
      %s5226 = ssub.s32 128, 128
      %5227 = vsyncadd [#allocation3], %s5226
      %s5229 = sshll.u32 [#allocation2], 4
      %s5230 = int_to_ptr.vmem [resolvable:$true] %s5229
      %5232 = dma.vmem_to_hbm [thread:$0]  %s5230, 128, %s19, [#allocation3]
    $region81: #{vae_autoencoder_classifier_forward.1} parent=1 // pred_fallthru
      _
    // Predicated region
    $region82: #{vae_autoencoder_classifier_forward.1} parent=1 // pred_check
      _
    $region83: #{vae_autoencoder_classifier_forward.1} parent=1 // pred_check_branch
      %5234 = sbr.rel (0) target = $region85
    $region84: #{vae_autoencoder_classifier_forward.1} parent=1 // pred_region
      _
    $region85: #{vae_autoencoder_classifier_forward.1} parent=1 // pred_fallthru
      _
    // Predicated region
    $region86: #{vae_autoencoder_classifier_forward.1} parent=1 // pred_check
      _
    $region87: #{vae_autoencoder_classifier_forward.1} parent=1 // pred_check_branch
      %5236 = sbr.rel (0) target = $region89
    $region88: #{vae_autoencoder_classifier_forward.1} parent=1 // pred_region
      %5237 = dma.done [#allocation3], 128
    $region89: #{vae_autoencoder_classifier_forward.1} parent=1 // pred_fallthru
      _
    %5238 = vsyncpa [#allocation3], 1

</llo_original>
